<compile_context>
chip_gen: v7x
topology: tpu7x:2x2x1
jax: 0.10.0
libtpu: 0.0.40
codegen_flags: <defaults>
</compile_context>

<pallas_src>
import numpy as np
import jax
import jax.numpy as jnp
from jax.experimental import pallas as pl
from jax.experimental.pallas import tpu as pltpu

V_THRESHOLD = 1.0      # spikingjelly default neuron threshold
_NEVER_FIRE = 1e30     # threshold assigned to padded channels (can never spike)


def _round_up(v, m):
    return (v + m - 1) // m * m


# ----------------------- conv -> dense linearization ----------------------- #
def _dense_conv_matrix(w, H, W, stride, padding):
    """Exact per-image linearization of Conv2d (no bias), NHWC flattening.

    w: (kh, kw, Cin, Cout) float32 numpy.
    Returns (D, Ho, Wo) with D of shape (H*W*Cin, Ho*Wo*Cout) such that
    conv(x).reshape(N, -1) == x.reshape(N, -1) @ D for x in NHWC layout.
    """
    kh, kw, cin, cout = w.shape
    Ho = (H + 2 * padding - kh) // stride + 1
    Wo = (W + 2 * padding - kw) // stride + 1
    D = np.zeros((H * W * cin, Ho * Wo * cout), np.float32)
    for ho in range(Ho):
        for wo in range(Wo):
            c0 = (ho * Wo + wo) * cout
            for dh in range(kh):
                hi = ho * stride - padding + dh
                if hi < 0 or hi >= H:
                    continue
                for dw in range(kw):
                    wi = wo * stride - padding + dw
                    if wi < 0 or wi >= W:
                        continue
                    r0 = (hi * W + wi) * cin
                    D[r0:r0 + cin, c0:c0 + cout] = w[dh, dw]
    return D, Ho, Wo


def fuse_backbone(params, arch, *, in_channels, in_hw):
    """One-time host-side preprocessing (analogue of BN-folding at export time).

    Every Conv2d(no bias) + BatchNorm + spike stage becomes:
      * a lane-padded bf16 dense matrix (f_in_pad, f_out_pad) with BN scale
        folded into its columns, and
      * a per-column f32 firing threshold  thr = V_THRESHOLD - bn_bias
        (padded columns get a huge threshold so they never spike).

    NOTE (BN folding contract): callers with a real BatchNorm must bake the
    running stats and eps in first:
      scale = gamma / sqrt(running_var + eps);  bias = beta - running_mean*scale.
    """
    H, W = in_hw
    f_in_real = H * W * in_channels
    f_in_pad = _round_up(f_in_real, 128)

    ws, ts, layers = [], [], []
    for p, a in zip(params, arch):
        w = np.asarray(p["w"], np.float32)          # (kh, kw, Cin, Cout)
        scale = np.asarray(p["scale"], np.float32)
        bias = np.asarray(p["bias"], np.float32)
        cout = w.shape[-1]

        D, Ho, Wo = _dense_conv_matrix(w, H, W, a["stride"], a["padding"])
        f_out_real = Ho * Wo * cout
        f_out_pad = _round_up(f_out_real, 128)

        # fold BN scale into the weight columns (tiled over spatial positions)
        D = D * np.tile(scale, Ho * Wo)[None, :]

        Dp = np.zeros((f_in_pad, f_out_pad), np.float32)
        Dp[:f_in_real, :f_out_real] = D

        thr = np.full((1, f_out_pad), _NEVER_FIRE, np.float32)
        thr[0, :f_out_real] = np.tile(V_THRESHOLD - bias, Ho * Wo)

        ws.append(jnp.asarray(Dp, jnp.bfloat16))    # bf16 MXU operand, DMA'd once
        ts.append(jnp.asarray(thr, jnp.float32))    # f32 epilogue compare operand
        layers.append(dict(f_in_pad=f_in_pad, f_out_pad=f_out_pad,
                           f_out_real=f_out_real, Ho=Ho, Wo=Wo, cout=cout,
                           feed=a["feed"]))
        H, W = Ho, Wo
        f_in_real, f_in_pad = f_out_real, f_out_pad

    return (tuple(ws), tuple(ts)), tuple(layers)


# ------------------------------ fused kernel ------------------------------- #
def _make_fused_kernel(layers):
    n_layers = len(layers)

    def kernel(*refs):
        # refs: [x, w_0..w_{L-1}, thr_0..thr_{L-1}, feed_out_0..]
        x_ref = refs[0]
        w_refs = refs[1:1 + n_layers]
        t_refs = refs[1 + n_layers:1 + 2 * n_layers]
        out_refs = refs[1 + 2 * n_layers:]

        x = x_ref[...]                                   # (mb, F0p) bf16
        k = 0
        for li in range(n_layers):
            # bf16 MXU matmul with f32 accumulation; BN scale is already folded
            # into the weight columns, so the whole epilogue is one compare.
            acc = jnp.dot(x, w_refs[li][...],
                          preferred_element_type=jnp.float32)
            # Single-step IF fire: membrane >= (V_THRESHOLD - bias) per column.
            spk = (acc >= t_refs[li][...]).astype(jnp.bfloat16)
            if layers[li]["feed"]:
                out_refs[k][...] = spk                   # lane-dense bf16 store
                k += 1
            x = spk                                      # VMEM/vreg-resident

    return kernel


def make_forward(layers):
    """Builds a jitted forward mirroring DetectionBackbone.forward.

    The whole backbone + extras chain is ONE pallas_call: weights and every
    intermediate activation stay VMEM-resident; only the input image and the
    detection feature maps touch HBM.
    """
    n_layers = len(layers)
    feed_layers = tuple(l for l in layers if l["feed"])
    kernel = _make_fused_kernel(layers)
    f0_pad = layers[0]["f_in_pad"]
    vmem = pl.BlockSpec(memory_space=pltpu.MemorySpace.VMEM)

    def forward(fused, x_nchw):
        ws, ts = fused
        n = x_nchw.shape[0]
        mb = _round_up(max(n, 1), 8)                 # sublane-aligned batch rows

        # layout glue only at the boundary: NCHW -> NHWC -> one row per image
        x = jnp.transpose(x_nchw, (0, 2, 3, 1)).reshape(n, -1)
        x = jnp.pad(x, ((0, mb - n), (0, f0_pad - x.shape[1])))
        x = x.astype(jnp.bfloat16)

        out_shape = tuple(
            jax.ShapeDtypeStruct((mb, l["f_out_pad"]), jnp.bfloat16)
            for l in feed_layers)

        flops = 2 * mb * sum(l["f_in_pad"] * l["f_out_pad"] for l in layers)
        bytes_accessed = (x.size * 2
                          + sum(int(w.size) * 2 for w in ws)
                          + sum(int(t.size) * 4 for t in ts)
                          + sum(mb * l["f_out_pad"] * 2 for l in feed_layers))

        outs = pl.pallas_call(
            kernel,
            out_shape=out_shape,
            in_specs=[vmem] * (1 + 2 * n_layers),
            out_specs=tuple([vmem] * len(feed_layers)),
            compiler_params=pltpu.CompilerParams(
                # whole fused net needs ~4 MiB of VMEM; 32 MiB leaves slack and
                # stays comfortably under v7x's 64 MiB physical VMEM.
                vmem_limit_bytes=32 * 1024 * 1024),
            cost_estimate=pl.CostEstimate(flops=flops, transcendentals=0,
                                          bytes_accessed=bytes_accessed),
        )(x, *ws, *ts)

        # Phantom batch rows [n:mb] and padded channels are sliced off here --
        # do not remove these slices. Convert to PyTorch-style NCHW f32 once.
        feats = []
        for o, l in zip(outs, feed_layers):
            f = o[:n, :l["f_out_real"]].reshape(n, l["Ho"], l["Wo"], l["cout"])
            feats.append(jnp.transpose(f, (0, 3, 1, 2)).astype(jnp.float32))
        return feats

    return jax.jit(forward)


# --------------------------- parameter building ---------------------------- #
def build_model(key, in_channels=4, extras_fm=(32, 32, 32)):
    """Synthetic stand-in for get_model(): returns (params, arch).

    params: list of {'w','scale','bias'} jnp arrays (HWIO conv weight + folded
            BN affine). arch: static per-layer config (stride, padding, feed).
    """
    specs = [
        (in_channels, 16, 3, 2, 1, True),     # backbone stage 1 (classify=False feed)
        (16, 32, 3, 2, 1, True),              # backbone stage 2
    ]
    cin = 32
    # extras with one_one_extras=True: [1x1 reduce, 3x3 s2] per stage
    for fm in extras_fm:
        mid = cin // 2
        specs.append((cin, mid, 1, 1, 0, False))
        specs.append((mid, fm, 3, 2, 1, True))
        cin = fm

    keys = jax.random.split(key, len(specs))
    params, arch = [], []
    for kk, (ci, co, k, s, p, feed) in zip(keys, specs):
        kw_, kb, ks = jax.random.split(kk, 3)
        w = jax.random.normal(kw_, (k, k, ci, co), jnp.float32) / jnp.sqrt(
            float(k * k * ci))
        scale = 1.0 + 0.5 * jax.random.uniform(ks, (co,), jnp.float32)
        bias = 0.8 + 0.5 * jax.random.normal(kb, (co,), jnp.float32)
        params.append(dict(w=w, scale=scale, bias=bias))
        arch.append(dict(stride=s, padding=p, feed=feed))
    return params, tuple(arch)


# --------------------------------- main ------------------------------------ #
if __name__ == "__main__":
    key = jax.random.PRNGKey(0)
    key_x, key_p = jax.random.split(key)

    x = jax.random.normal(key_x, (2, 4, 16, 16), jnp.float32)   # NCHW input
    params, arch = build_model(key_p, in_channels=4, extras_fm=(32, 32, 32))

    # one-time export-style prep (conv -> dense, BN fold), then fused forward
    fused, layers = fuse_backbone(params, arch, in_channels=4, in_hw=(16, 16))
    forward = make_forward(layers)
    feats = forward(fused, x)
    for f in feats:
        jax.block_until_ready(f)

    # --- self-test: dense linearization exactly matches a real conv (layer 0) -
    w0 = np.asarray(params[0]["w"], np.float32)
    d0, _, _ = _dense_conv_matrix(w0, 16, 16, stride=2, padding=1)
    x_nhwc = jnp.transpose(x, (0, 2, 3, 1))
    y_dense = np.asarray(x_nhwc, np.float32).reshape(2, -1) @ d0
    y_conv = jax.lax.conv_general_dilated(
        x_nhwc, params[0]["w"], window_strides=(2, 2),
        padding=((1, 1), (1, 1)),
        dimension_numbers=("NHWC", "HWIO", "NHWC"),
        precision=jax.lax.Precision.HIGHEST)
    assert np.allclose(y_dense, np.asarray(y_conv, np.float32).reshape(2, -1),
                       rtol=1e-3, atol=1e-3)

    # --- self-test: feature-map shapes + binary spikes -------------------------
    expected_shapes = [
        (2, 16, 8, 8),   # backbone stage 1
        (2, 32, 4, 4),   # backbone stage 2
        (2, 32, 2, 2),   # extras[0]
        (2, 32, 1, 1),   # extras[1]
        (2, 32, 1, 1),   # extras[2]
    ]
    assert len(feats) == len(expected_shapes)
    for f, s in zip(feats, expected_shapes):
        assert tuple(f.shape) == s, (f.shape, s)
        assert bool(jnp.all((f == 0.0) | (f == 1.0)))   # spikes must be binary

    print("KERNEL_OK")
</pallas_src>

<mosaic_0001>
module attributes {stable_mosaic.version = 11 : i64} {
  func.func @kernel(%arg0: memref<8x1024xbf16, #tpu.memory_space<vmem>>, %arg1: memref<1024x1024xbf16, #tpu.memory_space<vmem>>, %arg2: memref<1024x512xbf16, #tpu.memory_space<vmem>>, %arg3: memref<512x256xbf16, #tpu.memory_space<vmem>>, %arg4: memref<256x128xbf16, #tpu.memory_space<vmem>>, %arg5: memref<128x128xbf16, #tpu.memory_space<vmem>>, %arg6: memref<128x128xbf16, #tpu.memory_space<vmem>>, %arg7: memref<128x128xbf16, #tpu.memory_space<vmem>>, %arg8: memref<128x128xbf16, #tpu.memory_space<vmem>>, %arg9: memref<1x1024xf32, #tpu.memory_space<vmem>>, %arg10: memref<1x512xf32, #tpu.memory_space<vmem>>, %arg11: memref<1x256xf32, #tpu.memory_space<vmem>>, %arg12: memref<1x128xf32, #tpu.memory_space<vmem>>, %arg13: memref<1x128xf32, #tpu.memory_space<vmem>>, %arg14: memref<1x128xf32, #tpu.memory_space<vmem>>, %arg15: memref<1x128xf32, #tpu.memory_space<vmem>>, %arg16: memref<1x128xf32, #tpu.memory_space<vmem>>, %arg17: memref<8x1024xbf16, #tpu.memory_space<vmem>>, %arg18: memref<8x512xbf16, #tpu.memory_space<vmem>>, %arg19: memref<8x128xbf16, #tpu.memory_space<vmem>>, %arg20: memref<8x128xbf16, #tpu.memory_space<vmem>>, %arg21: memref<8x128xbf16, #tpu.memory_space<vmem>>) attributes {dimension_semantics = [], scalar_prefetch = 0 : i64, scratch_operands = 0 : i64, tpu.core_type = #tpu.core_type<tc>} {
    %c0 = arith.constant 0 : index
    %c0_0 = arith.constant 0 : index
    %0 = vector.load %arg0[%c0, %c0_0] : memref<8x1024xbf16, #tpu.memory_space<vmem>>, vector<8x1024xbf16>
    %c0_1 = arith.constant 0 : index
    %c0_2 = arith.constant 0 : index
    %1 = vector.load %arg1[%c0_1, %c0_2] : memref<1024x1024xbf16, #tpu.memory_space<vmem>>, vector<1024x1024xbf16>
    %cst = arith.constant dense<0.000000e+00> : vector<8x1024xf32>
    %2 = tpu.matmul %0, %1, %cst {dimension_numbers = #tpu.dot_dimension_numbers<[1], [0], [0], [1], [0, 0, 1, 1], [], []>} : vector<8x1024xbf16>, vector<1024x1024xbf16>, vector<8x1024xf32> -> vector<8x1024xf32>
    %c0_3 = arith.constant 0 : index
    %c0_4 = arith.constant 0 : index
    %3 = vector.load %arg9[%c0_3, %c0_4] : memref<1x1024xf32, #tpu.memory_space<vmem>>, vector<1x1024xf32>
    %4 = vector.broadcast %3 : vector<1x1024xf32> to vector<8x1024xf32>
    %5 = arith.cmpf oge, %2, %4 : vector<8x1024xf32>
    %6 = arith.extui %5 : vector<8x1024xi1> to vector<8x1024xi32>
    %7 = arith.sitofp %6 : vector<8x1024xi32> to vector<8x1024xf32>
    %8 = arith.truncf %7 : vector<8x1024xf32> to vector<8x1024xbf16>
    %c0_5 = arith.constant 0 : index
    %c0_6 = arith.constant 0 : index
    %9 = vector.load %arg17[%c0_5, %c0_6] : memref<8x1024xbf16, #tpu.memory_space<vmem>>, vector<8x1024xbf16>
    tpu.vector_store %arg17[%c0_5, %c0_6], %8 {strides = array<i32>} : memref<8x1024xbf16, #tpu.memory_space<vmem>>, vector<8x1024xbf16>,
    %c0_7 = arith.constant 0 : index
    %c0_8 = arith.constant 0 : index
    %10 = vector.load %arg2[%c0_7, %c0_8] : memref<1024x512xbf16, #tpu.memory_space<vmem>>, vector<1024x512xbf16>
    %cst_9 = arith.constant dense<0.000000e+00> : vector<8x512xf32>
    %11 = tpu.matmul %8, %10, %cst_9 {dimension_numbers = #tpu.dot_dimension_numbers<[1], [0], [0], [1], [0, 0, 1, 1], [], []>} : vector<8x1024xbf16>, vector<1024x512xbf16>, vector<8x512xf32> -> vector<8x512xf32>
    %c0_10 = arith.constant 0 : index
    %c0_11 = arith.constant 0 : index
    %12 = vector.load %arg10[%c0_10, %c0_11] : memref<1x512xf32, #tpu.memory_space<vmem>>, vector<1x512xf32>
    %13 = vector.broadcast %12 : vector<1x512xf32> to vector<8x512xf32>
    %14 = arith.cmpf oge, %11, %13 : vector<8x512xf32>
    %15 = arith.extui %14 : vector<8x512xi1> to vector<8x512xi32>
    %16 = arith.sitofp %15 : vector<8x512xi32> to vector<8x512xf32>
    %17 = arith.truncf %16 : vector<8x512xf32> to vector<8x512xbf16>
    %c0_12 = arith.constant 0 : index
    %c0_13 = arith.constant 0 : index
    %18 = vector.load %arg18[%c0_12, %c0_13] : memref<8x512xbf16, #tpu.memory_space<vmem>>, vector<8x512xbf16>
    tpu.vector_store %arg18[%c0_12, %c0_13], %17 {strides = array<i32>} : memref<8x512xbf16, #tpu.memory_space<vmem>>, vector<8x512xbf16>,
    %c0_14 = arith.constant 0 : index
    %c0_15 = arith.constant 0 : index
    %19 = vector.load %arg3[%c0_14, %c0_15] : memref<512x256xbf16, #tpu.memory_space<vmem>>, vector<512x256xbf16>
    %cst_16 = arith.constant dense<0.000000e+00> : vector<8x256xf32>
    %20 = tpu.matmul %17, %19, %cst_16 {dimension_numbers = #tpu.dot_dimension_numbers<[1], [0], [0], [1], [0, 0, 1, 1], [], []>} : vector<8x512xbf16>, vector<512x256xbf16>, vector<8x256xf32> -> vector<8x256xf32>
    %c0_17 = arith.constant 0 : index
    %c0_18 = arith.constant 0 : index
    %21 = vector.load %arg11[%c0_17, %c0_18] : memref<1x256xf32, #tpu.memory_space<vmem>>, vector<1x256xf32>
    %22 = vector.broadcast %21 : vector<1x256xf32> to vector<8x256xf32>
    %23 = arith.cmpf oge, %20, %22 : vector<8x256xf32>
    %24 = arith.extui %23 : vector<8x256xi1> to vector<8x256xi32>
    %25 = arith.sitofp %24 : vector<8x256xi32> to vector<8x256xf32>
    %26 = arith.truncf %25 : vector<8x256xf32> to vector<8x256xbf16>
    %c0_19 = arith.constant 0 : index
    %c0_20 = arith.constant 0 : index
    %27 = vector.load %arg4[%c0_19, %c0_20] : memref<256x128xbf16, #tpu.memory_space<vmem>>, vector<256x128xbf16>
    %cst_21 = arith.constant dense<0.000000e+00> : vector<8x128xf32>
    %28 = tpu.matmul %26, %27, %cst_21 {dimension_numbers = #tpu.dot_dimension_numbers<[1], [0], [0], [1], [0, 0, 1, 1], [], []>} : vector<8x256xbf16>, vector<256x128xbf16>, vector<8x128xf32> -> vector<8x128xf32>
    %c0_22 = arith.constant 0 : index
    %c0_23 = arith.constant 0 : index
    %29 = vector.load %arg12[%c0_22, %c0_23] : memref<1x128xf32, #tpu.memory_space<vmem>>, vector<1x128xf32>
    %30 = vector.broadcast %29 : vector<1x128xf32> to vector<8x128xf32>
    %31 = arith.cmpf oge, %28, %30 : vector<8x128xf32>
    %32 = arith.extui %31 : vector<8x128xi1> to vector<8x128xi32>
    %33 = arith.sitofp %32 : vector<8x128xi32> to vector<8x128xf32>
    %34 = arith.truncf %33 : vector<8x128xf32> to vector<8x128xbf16>
    %c0_24 = arith.constant 0 : index
    %c0_25 = arith.constant 0 : index
    %35 = vector.load %arg19[%c0_24, %c0_25] : memref<8x128xbf16, #tpu.memory_space<vmem>>, vector<8x128xbf16>
    tpu.vector_store %arg19[%c0_24, %c0_25], %34 {strides = array<i32>} : memref<8x128xbf16, #tpu.memory_space<vmem>>, vector<8x128xbf16>,
    %c0_26 = arith.constant 0 : index
    %c0_27 = arith.constant 0 : index
    %36 = vector.load %arg5[%c0_26, %c0_27] : memref<128x128xbf16, #tpu.memory_space<vmem>>, vector<128x128xbf16>
    %cst_28 = arith.constant dense<0.000000e+00> : vector<8x128xf32>
    %37 = tpu.matmul %34, %36, %cst_28 {dimension_numbers = #tpu.dot_dimension_numbers<[1], [0], [0], [1], [0, 0, 1, 1], [], []>} : vector<8x128xbf16>, vector<128x128xbf16>, vector<8x128xf32> -> vector<8x128xf32>
    %c0_29 = arith.constant 0 : index
    %c0_30 = arith.constant 0 : index
    %38 = vector.load %arg13[%c0_29, %c0_30] : memref<1x128xf32, #tpu.memory_space<vmem>>, vector<1x128xf32>
    %39 = vector.broadcast %38 : vector<1x128xf32> to vector<8x128xf32>
    %40 = arith.cmpf oge, %37, %39 : vector<8x128xf32>
    %41 = arith.extui %40 : vector<8x128xi1> to vector<8x128xi32>
    %42 = arith.sitofp %41 : vector<8x128xi32> to vector<8x128xf32>
    %43 = arith.truncf %42 : vector<8x128xf32> to vector<8x128xbf16>
    %c0_31 = arith.constant 0 : index
    %c0_32 = arith.constant 0 : index
    %44 = vector.load %arg6[%c0_31, %c0_32] : memref<128x128xbf16, #tpu.memory_space<vmem>>, vector<128x128xbf16>
    %cst_33 = arith.constant dense<0.000000e+00> : vector<8x128xf32>
    %45 = tpu.matmul %43, %44, %cst_33 {dimension_numbers = #tpu.dot_dimension_numbers<[1], [0], [0], [1], [0, 0, 1, 1], [], []>} : vector<8x128xbf16>, vector<128x128xbf16>, vector<8x128xf32> -> vector<8x128xf32>
    %c0_34 = arith.constant 0 : index
    %c0_35 = arith.constant 0 : index
    %46 = vector.load %arg14[%c0_34, %c0_35] : memref<1x128xf32, #tpu.memory_space<vmem>>, vector<1x128xf32>
    %47 = vector.broadcast %46 : vector<1x128xf32> to vector<8x128xf32>
    %48 = arith.cmpf oge, %45, %47 : vector<8x128xf32>
    %49 = arith.extui %48 : vector<8x128xi1> to vector<8x128xi32>
    %50 = arith.sitofp %49 : vector<8x128xi32> to vector<8x128xf32>
    %51 = arith.truncf %50 : vector<8x128xf32> to vector<8x128xbf16>
    %c0_36 = arith.constant 0 : index
    %c0_37 = arith.constant 0 : index
    %52 = vector.load %arg20[%c0_36, %c0_37] : memref<8x128xbf16, #tpu.memory_space<vmem>>, vector<8x128xbf16>
    tpu.vector_store %arg20[%c0_36, %c0_37], %51 {strides = array<i32>} : memref<8x128xbf16, #tpu.memory_space<vmem>>, vector<8x128xbf16>,
    %c0_38 = arith.constant 0 : index
    %c0_39 = arith.constant 0 : index
    %53 = vector.load %arg7[%c0_38, %c0_39] : memref<128x128xbf16, #tpu.memory_space<vmem>>, vector<128x128xbf16>
    %cst_40 = arith.constant dense<0.000000e+00> : vector<8x128xf32>
    %54 = tpu.matmul %51, %53, %cst_40 {dimension_numbers = #tpu.dot_dimension_numbers<[1], [0], [0], [1], [0, 0, 1, 1], [], []>} : vector<8x128xbf16>, vector<128x128xbf16>, vector<8x128xf32> -> vector<8x128xf32>
    %c0_41 = arith.constant 0 : index
    %c0_42 = arith.constant 0 : index
    %55 = vector.load %arg15[%c0_41, %c0_42] : memref<1x128xf32, #tpu.memory_space<vmem>>, vector<1x128xf32>
    %56 = vector.broadcast %55 : vector<1x128xf32> to vector<8x128xf32>
    %57 = arith.cmpf oge, %54, %56 : vector<8x128xf32>
    %58 = arith.extui %57 : vector<8x128xi1> to vector<8x128xi32>
    %59 = arith.sitofp %58 : vector<8x128xi32> to vector<8x128xf32>
    %60 = arith.truncf %59 : vector<8x128xf32> to vector<8x128xbf16>
    %c0_43 = arith.constant 0 : index
    %c0_44 = arith.constant 0 : index
    %61 = vector.load %arg8[%c0_43, %c0_44] : memref<128x128xbf16, #tpu.memory_space<vmem>>, vector<128x128xbf16>
    %cst_45 = arith.constant dense<0.000000e+00> : vector<8x128xf32>
    %62 = tpu.matmul %60, %61, %cst_45 {dimension_numbers = #tpu.dot_dimension_numbers<[1], [0], [0], [1], [0, 0, 1, 1], [], []>} : vector<8x128xbf16>, vector<128x128xbf16>, vector<8x128xf32> -> vector<8x128xf32>
    %c0_46 = arith.constant 0 : index
    %c0_47 = arith.constant 0 : index
    %63 = vector.load %arg16[%c0_46, %c0_47] : memref<1x128xf32, #tpu.memory_space<vmem>>, vector<1x128xf32>
    %64 = vector.broadcast %63 : vector<1x128xf32> to vector<8x128xf32>
    %65 = arith.cmpf oge, %62, %64 : vector<8x128xf32>
    %66 = arith.extui %65 : vector<8x128xi1> to vector<8x128xi32>
    %67 = arith.sitofp %66 : vector<8x128xi32> to vector<8x128xf32>
    %68 = arith.truncf %67 : vector<8x128xf32> to vector<8x128xbf16>
    %c0_48 = arith.constant 0 : index
    %c0_49 = arith.constant 0 : index
    %69 = vector.load %arg21[%c0_48, %c0_49] : memref<8x128xbf16, #tpu.memory_space<vmem>>, vector<8x128xbf16>
    tpu.vector_store %arg21[%c0_48, %c0_49], %68 {strides = array<i32>} : memref<8x128xbf16, #tpu.memory_space<vmem>>, vector<8x128xbf16>,
    return
  }
}

</mosaic_0001>

<llo_original>
// kernel: forward.1
$region0: #{forward.1}
  #allocation0 [shape = 'u32[]', space=smem, size = 0x4, offset = 0x4, fixed_abs, tag = 'smem constant byte address 0x4 - core index']
  #allocation1 [shape = 'u32[144,128]{1,0:T(1,128)}', space=vmem, size = 0x12000, scoped, tag = 'internal scratch']
  %s0 = inlined_call_operand.vmem [shape: bf16[8,1024], index: 0, kind: input, shape index: {}]
  %s1 = inlined_call_operand.hbm [shape: bf16[1024,1024], index: 1, kind: input, shape index: {}]
  %s2 = inlined_call_operand.hbm [shape: bf16[1024,512], index: 2, kind: input, shape index: {}]
  %s3 = inlined_call_operand.hbm [shape: bf16[512,256], index: 3, kind: input, shape index: {}]
  %s4 = inlined_call_operand.hbm [shape: bf16[256,128], index: 4, kind: input, shape index: {}]
  %s5 = inlined_call_operand.hbm [shape: bf16[128,128], index: 5, kind: input, shape index: {}]
  %s6 = inlined_call_operand.hbm [shape: bf16[128,128], index: 6, kind: input, shape index: {}]
  %s7 = inlined_call_operand.hbm [shape: bf16[128,128], index: 7, kind: input, shape index: {}]
  %s8 = inlined_call_operand.hbm [shape: bf16[128,128], index: 8, kind: input, shape index: {}]
  %s9 = inlined_call_operand.hbm [shape: f32[1,1024], index: 9, kind: input, shape index: {}]
  %s10 = inlined_call_operand.hbm [shape: f32[1,512], index: 10, kind: input, shape index: {}]
  %s11 = inlined_call_operand.hbm [shape: f32[1,256], index: 11, kind: input, shape index: {}]
  %s12 = inlined_call_operand.hbm [shape: f32[1,128], index: 12, kind: input, shape index: {}]
  %s13 = inlined_call_operand.hbm [shape: f32[1,128], index: 13, kind: input, shape index: {}]
  %s14 = inlined_call_operand.hbm [shape: f32[1,128], index: 14, kind: input, shape index: {}]
  %s15 = inlined_call_operand.hbm [shape: f32[1,128], index: 15, kind: input, shape index: {}]
  %s16 = inlined_call_operand.hbm [shape: f32[1,128], index: 16, kind: input, shape index: {}]
  %s17 = inlined_call_operand.vmem [shape: bf16[8,1024], index: 17, kind: output, shape index: {0}]
  %s18 = inlined_call_operand.vmem [shape: bf16[8,512], index: 18, kind: output, shape index: {1}]
  %s19 = inlined_call_operand.vmem [shape: bf16[8,128], index: 19, kind: output, shape index: {2}]
  %s20 = inlined_call_operand.vmem [shape: bf16[8,128], index: 20, kind: output, shape index: {3}]
  %s21 = inlined_call_operand.vmem [shape: bf16[8,128], index: 21, kind: output, shape index: {4}]
  %22 = xla_tuple %s17, %s18, %s19, %s20, %s21
  %s23 = sld [smem:[#allocation0]]
  $region174: #{forward.1} parent=0
    _
  %s25 = ssub.s32 1, %s23
  %s26 = scalar_select 0, %s25, %s23
  $region1: #{forward.1} parent=0
    #allocation2 [shape = 'u8[2097152]{0}', space=vmem, size = 0x200000, scoped, tag = 'input window, operand 1, single buffered']
    #allocation3 [shape = 's32[1]{0}', space=sflag, size = 0x4, scoped, tag = 'scoped memory for forward.1']
    #allocation4 [shape = 'u8[1048576]{0}', space=vmem, size = 0x100000, scoped, tag = 'input window, operand 2, single buffered']
    #allocation5 [shape = 's32[1]{0}', space=sflag, size = 0x4, scoped, tag = 'scoped memory for forward.1']
    #allocation6 [shape = 'u8[262144]{0}', space=vmem, size = 0x40000, scoped, tag = 'input window, operand 3, single buffered']
    #allocation7 [shape = 'u8[65536]{0}', space=vmem, size = 0x10000, scoped, tag = 'input window, operand 4, single buffered']
    #allocation8 [shape = 's32[1]{0}', space=sflag, size = 0x4, scoped, tag = 'scoped memory for forward.1']
    #allocation9 [shape = 'u8[32768]{0}', space=vmem, size = 0x8000, scoped, tag = 'input window, operand 5, single buffered']
    #allocation10 [shape = 'u8[32768]{0}', space=vmem, size = 0x8000, scoped, tag = 'input window, operand 6, single buffered']
    #allocation11 [shape = 's32[1]{0}', space=sflag, size = 0x4, scoped, tag = 'scoped memory for forward.1']
    #allocation12 [shape = 'u8[32768]{0}', space=vmem, size = 0x8000, scoped, tag = 'input window, operand 7, single buffered']
    #allocation13 [shape = 'u8[32768]{0}', space=vmem, size = 0x8000, scoped, tag = 'input window, operand 8, single buffered']
    #allocation14 [shape = 's32[1]{0}', space=sflag, size = 0x4, scoped, tag = 'scoped memory for forward.1']
    #allocation15 [shape = 'u8[4096]{0}', space=vmem, size = 0x1000, scoped, tag = 'input window, operand 9, single buffered']
    #allocation16 [shape = 'u8[2048]{0}', space=vmem, size = 0x800, scoped, tag = 'input window, operand 10, single buffered']
    #allocation17 [shape = 's32[1]{0}', space=sflag, size = 0x4, scoped, tag = 'scoped memory for forward.1']
    #allocation18 [shape = 'u8[1024]{0}', space=vmem, size = 0x400, scoped, tag = 'input window, operand 11, single buffered']
    #allocation19 [shape = 'u8[512]{0}', space=vmem, size = 0x400, scoped, tag = 'input window, operand 12, single buffered']
    #allocation20 [shape = 's32[1]{0}', space=sflag, size = 0x4, scoped, tag = 'scoped memory for forward.1']
    #allocation21 [shape = 'u8[512]{0}', space=vmem, size = 0x400, scoped, tag = 'input window, operand 13, single buffered']
    #allocation22 [shape = 'u8[512]{0}', space=vmem, size = 0x400, scoped, tag = 'input window, operand 14, single buffered']
    #allocation23 [shape = 's32[1]{0}', space=sflag, size = 0x4, scoped, tag = 'scoped memory for forward.1']
    #allocation24 [shape = 'u8[512]{0}', space=vmem, size = 0x400, scoped, tag = 'input window, operand 15, single buffered']
    #allocation25 [shape = 'u8[512]{0}', space=vmem, size = 0x400, scoped, tag = 'input window, operand 16, single buffered']
    #allocation26 [shape = 's32[1]{0}', space=sflag, size = 0x4, scoped, tag = 'scoped memory for forward.1']
    %27 = vsyncpa [#allocation3], 0
    %28 = vsyncpa [#allocation5], 0
    %29 = vsyncpa [#allocation8], 0
    %30 = vsyncpa [#allocation11], 0
    %31 = vsyncpa [#allocation14], 0
    %32 = vsyncpa [#allocation17], 0
    %33 = vsyncpa [#allocation20], 0
    %34 = vsyncpa [#allocation23], 0
    %35 = vsyncpa [#allocation26], 0
    // Predicated region
    $region2: #{forward.1} parent=1 // pred_check
      _
    $region3: #{forward.1} parent=1 // pred_check_branch
      %37 = sbr.rel (0) target = $region5
    $region4: #{forward.1} parent=1 // pred_region
      _
    $region5: #{forward.1} parent=1 // pred_fallthru
      _
    // Predicated region
    $region6: #{forward.1} parent=1 // pred_check
      _
    $region7: #{forward.1} parent=1 // pred_check_branch
      %39 = sbr.rel (0) target = $region9
    $region8: #{forward.1} parent=1 // pred_region
      %s41 = ssub.s32 65536, 65536
      %42 = vsyncadd [#allocation3], %s41
      %s43 = sshll.u32 [#allocation2], 4
      %s44 = int_to_ptr.vmem [resolvable:$true] %s43
      %49 = dma.hbm_to_vmem [thread:$0]  %s1, 65536, %s44, [#allocation3], 512, 512, 32
    $region9: #{forward.1} parent=1 // pred_fallthru
      _
    // Predicated region
    $region10: #{forward.1} parent=1 // pred_check
      _
    $region11: #{forward.1} parent=1 // pred_check_branch
      %51 = sbr.rel (0) target = $region13
    $region12: #{forward.1} parent=1 // pred_region
      %s53 = ssub.s32 32768, 32768
      %54 = vsyncadd [#allocation5], %s53
      %s55 = sshll.u32 [#allocation4], 4
      %s56 = int_to_ptr.vmem [resolvable:$true] %s55
      %61 = dma.hbm_to_vmem [thread:$0]  %s2, 32768, %s56, [#allocation5], 256, 256, 16
    $region13: #{forward.1} parent=1 // pred_fallthru
      _
    // Predicated region
    $region14: #{forward.1} parent=1 // pred_check
      _
    $region15: #{forward.1} parent=1 // pred_check_branch
      %63 = sbr.rel (0) target = $region17
    $region16: #{forward.1} parent=1 // pred_region
      %s65 = ssub.s32 8192, 8192
      %66 = vsyncadd [#allocation5], %s65
      %s67 = sshll.u32 [#allocation6], 4
      %s68 = int_to_ptr.vmem [resolvable:$true] %s67
      %73 = dma.hbm_to_vmem [thread:$0]  %s3, 8192, %s68, [#allocation5], 128, 128, 8
    $region17: #{forward.1} parent=1 // pred_fallthru
      _
    // Predicated region
    $region18: #{forward.1} parent=1 // pred_check
      _
    $region19: #{forward.1} parent=1 // pred_check_branch
      %75 = sbr.rel (0) target = $region21
    $region20: #{forward.1} parent=1 // pred_region
      %s77 = ssub.s32 2048, 2048
      %78 = vsyncadd [#allocation8], %s77
      %s79 = sshll.u32 [#allocation7], 4
      %s80 = int_to_ptr.vmem [resolvable:$true] %s79
      %85 = dma.hbm_to_vmem [thread:$0]  %s4, 2048, %s80, [#allocation8], 64, 64, 4
    $region21: #{forward.1} parent=1 // pred_fallthru
      _
    // Predicated region
    $region22: #{forward.1} parent=1 // pred_check
      _
    $region23: #{forward.1} parent=1 // pred_check_branch
      %87 = sbr.rel (0) target = $region25
    $region24: #{forward.1} parent=1 // pred_region
      %s89 = ssub.s32 1024, 1024
      %90 = vsyncadd [#allocation8], %s89
      %s91 = sshll.u32 [#allocation9], 4
      %s92 = int_to_ptr.vmem [resolvable:$true] %s91
      %97 = dma.hbm_to_vmem [thread:$0]  %s5, 1024, %s92, [#allocation8], 64, 64, 4
    $region25: #{forward.1} parent=1 // pred_fallthru
      _
    // Predicated region
    $region26: #{forward.1} parent=1 // pred_check
      _
    $region27: #{forward.1} parent=1 // pred_check_branch
      %99 = sbr.rel (0) target = $region29
    $region28: #{forward.1} parent=1 // pred_region
      %s101 = ssub.s32 1024, 1024
      %102 = vsyncadd [#allocation11], %s101
      %s103 = sshll.u32 [#allocation10], 4
      %s104 = int_to_ptr.vmem [resolvable:$true] %s103
      %109 = dma.hbm_to_vmem [thread:$0]  %s6, 1024, %s104, [#allocation11], 64, 64, 4
    $region29: #{forward.1} parent=1 // pred_fallthru
      _
    // Predicated region
    $region30: #{forward.1} parent=1 // pred_check
      _
    $region31: #{forward.1} parent=1 // pred_check_branch
      %111 = sbr.rel (0) target = $region33
    $region32: #{forward.1} parent=1 // pred_region
      %s113 = ssub.s32 1024, 1024
      %114 = vsyncadd [#allocation11], %s113
      %s115 = sshll.u32 [#allocation12], 4
      %s116 = int_to_ptr.vmem [resolvable:$true] %s115
      %121 = dma.hbm_to_vmem [thread:$0]  %s7, 1024, %s116, [#allocation11], 64, 64, 4
    $region33: #{forward.1} parent=1 // pred_fallthru
      _
    // Predicated region
    $region34: #{forward.1} parent=1 // pred_check
      _
    $region35: #{forward.1} parent=1 // pred_check_branch
      %123 = sbr.rel (0) target = $region37
    $region36: #{forward.1} parent=1 // pred_region
      %s125 = ssub.s32 1024, 1024
      %126 = vsyncadd [#allocation14], %s125
      %s127 = sshll.u32 [#allocation13], 4
      %s128 = int_to_ptr.vmem [resolvable:$true] %s127
      %133 = dma.hbm_to_vmem [thread:$0]  %s8, 1024, %s128, [#allocation14], 64, 64, 4
    $region37: #{forward.1} parent=1 // pred_fallthru
      _
    // Predicated region
    $region38: #{forward.1} parent=1 // pred_check
      _
    $region39: #{forward.1} parent=1 // pred_check_branch
      %135 = sbr.rel (0) target = $region41
    $region40: #{forward.1} parent=1 // pred_region
      %s137 = ssub.s32 128, 128
      %138 = vsyncadd [#allocation14], %s137
      %s140 = sshll.u32 [#allocation15], 4
      %s141 = int_to_ptr.vmem [resolvable:$true] %s140
      %143 = dma.hbm_to_vmem [thread:$0]  %s9, 128, %s141, [#allocation14]
    $region41: #{forward.1} parent=1 // pred_fallthru
      _
    // Predicated region
    $region42: #{forward.1} parent=1 // pred_check
      _
    $region43: #{forward.1} parent=1 // pred_check_branch
      %145 = sbr.rel (0) target = $region45
    $region44: #{forward.1} parent=1 // pred_region
      %s147 = ssub.s32 64, 64
      %148 = vsyncadd [#allocation17], %s147
      %s150 = sshll.u32 [#allocation16], 4
      %s151 = int_to_ptr.vmem [resolvable:$true] %s150
      %153 = dma.hbm_to_vmem [thread:$0]  %s10, 64, %s151, [#allocation17]
    $region45: #{forward.1} parent=1 // pred_fallthru
      _
    // Predicated region
    $region46: #{forward.1} parent=1 // pred_check
      _
    $region47: #{forward.1} parent=1 // pred_check_branch
      %155 = sbr.rel (0) target = $region49
    $region48: #{forward.1} parent=1 // pred_region
      %s157 = ssub.s32 32, 32
      %158 = vsyncadd [#allocation17], %s157
      %s160 = sshll.u32 [#allocation18], 4
      %s161 = int_to_ptr.vmem [resolvable:$true] %s160
      %163 = dma.hbm_to_vmem [thread:$0]  %s11, 32, %s161, [#allocation17]
    $region49: #{forward.1} parent=1 // pred_fallthru
      _
    // Predicated region
    $region50: #{forward.1} parent=1 // pred_check
      _
    $region51: #{forward.1} parent=1 // pred_check_branch
      %165 = sbr.rel (0) target = $region53
    $region52: #{forward.1} parent=1 // pred_region
      %s167 = ssub.s32 16, 16
      %168 = vsyncadd [#allocation20], %s167
      %s170 = sshll.u32 [#allocation19], 4
      %s171 = int_to_ptr.vmem [resolvable:$true] %s170
      %173 = dma.hbm_to_vmem [thread:$0]  %s12, 16, %s171, [#allocation20]
    $region53: #{forward.1} parent=1 // pred_fallthru
      _
    // Predicated region
    $region54: #{forward.1} parent=1 // pred_check
      _
    $region55: #{forward.1} parent=1 // pred_check_branch
      %175 = sbr.rel (0) target = $region57
    $region56: #{forward.1} parent=1 // pred_region
      %s177 = ssub.s32 16, 16
      %178 = vsyncadd [#allocation20], %s177
      %s180 = sshll.u32 [#allocation21], 4
      %s181 = int_to_ptr.vmem [resolvable:$true] %s180
      %183 = dma.hbm_to_vmem [thread:$0]  %s13, 16, %s181, [#allocation20]
    $region57: #{forward.1} parent=1 // pred_fallthru
      _
    // Predicated region
    $region58: #{forward.1} parent=1 // pred_check
      _
    $region59: #{forward.1} parent=1 // pred_check_branch
      %185 = sbr.rel (0) target = $region61
    $region60: #{forward.1} parent=1 // pred_region
      %s187 = ssub.s32 16, 16
      %188 = vsyncadd [#allocation23], %s187
      %s190 = sshll.u32 [#allocation22], 4
      %s191 = int_to_ptr.vmem [resolvable:$true] %s190
      %193 = dma.hbm_to_vmem [thread:$0]  %s14, 16, %s191, [#allocation23]
    $region61: #{forward.1} parent=1 // pred_fallthru
      _
    // Predicated region
    $region62: #{forward.1} parent=1 // pred_check
      _
    $region63: #{forward.1} parent=1 // pred_check_branch
      %195 = sbr.rel (0) target = $region65
    $region64: #{forward.1} parent=1 // pred_region
      %s197 = ssub.s32 16, 16
      %198 = vsyncadd [#allocation23], %s197
      %s200 = sshll.u32 [#allocation24], 4
      %s201 = int_to_ptr.vmem [resolvable:$true] %s200
      %203 = dma.hbm_to_vmem [thread:$0]  %s15, 16, %s201, [#allocation23]
    $region65: #{forward.1} parent=1 // pred_fallthru
      _
    // Predicated region
    $region66: #{forward.1} parent=1 // pred_check
      _
    $region67: #{forward.1} parent=1 // pred_check_branch
      %205 = sbr.rel (0) target = $region69
    $region68: #{forward.1} parent=1 // pred_region
      %s207 = ssub.s32 16, 16
      %208 = vsyncadd [#allocation26], %s207
      %s210 = sshll.u32 [#allocation25], 4
      %s211 = int_to_ptr.vmem [resolvable:$true] %s210
      %213 = dma.hbm_to_vmem [thread:$0]  %s16, 16, %s211, [#allocation26]
    $region69: #{forward.1} parent=1 // pred_fallthru
      _
    // Predicated region
    $region70: #{forward.1} parent=1 // pred_check
      _
    $region71: #{forward.1} parent=1 // pred_check_branch
      %215 = sbr.rel (0) target = $region73
    $region72: #{forward.1} parent=1 // pred_region
      %216 = dma.done [#allocation3], 65536
    $region73: #{forward.1} parent=1 // pred_fallthru
      _
    // Predicated region
    $region74: #{forward.1} parent=1 // pred_check
      _
    $region75: #{forward.1} parent=1 // pred_check_branch
      %218 = sbr.rel (0) target = $region77
    $region76: #{forward.1} parent=1 // pred_region
      %219 = dma.done [#allocation5], 32768
    $region77: #{forward.1} parent=1 // pred_fallthru
      _
    // Predicated region
    $region78: #{forward.1} parent=1 // pred_check
      _
    $region79: #{forward.1} parent=1 // pred_check_branch
      %221 = sbr.rel (0) target = $region81
    $region80: #{forward.1} parent=1 // pred_region
      %222 = dma.done [#allocation5], 8192
    $region81: #{forward.1} parent=1 // pred_fallthru
      _
    // Predicated region
    $region82: #{forward.1} parent=1 // pred_check
      _
    $region83: #{forward.1} parent=1 // pred_check_branch
      %224 = sbr.rel (0) target = $region85
    $region84: #{forward.1} parent=1 // pred_region
      %225 = dma.done [#allocation8], 2048
    $region85: #{forward.1} parent=1 // pred_fallthru
      _
    // Predicated region
    $region86: #{forward.1} parent=1 // pred_check
      _
    $region87: #{forward.1} parent=1 // pred_check_branch
      %227 = sbr.rel (0) target = $region89
    $region88: #{forward.1} parent=1 // pred_region
      %228 = dma.done [#allocation8], 1024
    $region89: #{forward.1} parent=1 // pred_fallthru
      _
    // Predicated region
    $region90: #{forward.1} parent=1 // pred_check
      _
    $region91: #{forward.1} parent=1 // pred_check_branch
      %230 = sbr.rel (0) target = $region93
    $region92: #{forward.1} parent=1 // pred_region
      %231 = dma.done [#allocation11], 1024
    $region93: #{forward.1} parent=1 // pred_fallthru
      _
    // Predicated region
    $region94: #{forward.1} parent=1 // pred_check
      _
    $region95: #{forward.1} parent=1 // pred_check_branch
      %233 = sbr.rel (0) target = $region97
    $region96: #{forward.1} parent=1 // pred_region
      %234 = dma.done [#allocation11], 1024
    $region97: #{forward.1} parent=1 // pred_fallthru
      _
    // Predicated region
    $region98: #{forward.1} parent=1 // pred_check
      _
    $region99: #{forward.1} parent=1 // pred_check_branch
      %236 = sbr.rel (0) target = $region101
    $region100: #{forward.1} parent=1 // pred_region
      %237 = dma.done [#allocation14], 1024
    $region101: #{forward.1} parent=1 // pred_fallthru
      _
    // Predicated region
    $region102: #{forward.1} parent=1 // pred_check
      _
    $region103: #{forward.1} parent=1 // pred_check_branch
      %239 = sbr.rel (0) target = $region105
    $region104: #{forward.1} parent=1 // pred_region
      %240 = dma.done [#allocation14], 128
    $region105: #{forward.1} parent=1 // pred_fallthru
      _
    // Predicated region
    $region106: #{forward.1} parent=1 // pred_check
      _
    $region107: #{forward.1} parent=1 // pred_check_branch
      %242 = sbr.rel (0) target = $region109
    $region108: #{forward.1} parent=1 // pred_region
      %243 = dma.done [#allocation17], 64
    $region109: #{forward.1} parent=1 // pred_fallthru
      _
    // Predicated region
    $region110: #{forward.1} parent=1 // pred_check
      _
    $region111: #{forward.1} parent=1 // pred_check_branch
      %245 = sbr.rel (0) target = $region113
    $region112: #{forward.1} parent=1 // pred_region
      %246 = dma.done [#allocation17], 32
    $region113: #{forward.1} parent=1 // pred_fallthru
      _
    // Predicated region
    $region114: #{forward.1} parent=1 // pred_check
      _
    $region115: #{forward.1} parent=1 // pred_check_branch
      %248 = sbr.rel (0) target = $region117
    $region116: #{forward.1} parent=1 // pred_region
      %249 = dma.done [#allocation20], 16
    $region117: #{forward.1} parent=1 // pred_fallthru
      _
    // Predicated region
    $region118: #{forward.1} parent=1 // pred_check
      _
    $region119: #{forward.1} parent=1 // pred_check_branch
      %251 = sbr.rel (0) target = $region121
    $region120: #{forward.1} parent=1 // pred_region
      %252 = dma.done [#allocation20], 16
    $region121: #{forward.1} parent=1 // pred_fallthru
      _
    // Predicated region
    $region122: #{forward.1} parent=1 // pred_check
      _
    $region123: #{forward.1} parent=1 // pred_check_branch
      %254 = sbr.rel (0) target = $region125
    $region124: #{forward.1} parent=1 // pred_region
      %255 = dma.done [#allocation23], 16
    $region125: #{forward.1} parent=1 // pred_fallthru
      _
    // Predicated region
    $region126: #{forward.1} parent=1 // pred_check
      _
    $region127: #{forward.1} parent=1 // pred_check_branch
      %257 = sbr.rel (0) target = $region129
    $region128: #{forward.1} parent=1 // pred_region
      %258 = dma.done [#allocation23], 16
    $region129: #{forward.1} parent=1 // pred_fallthru
      _
    // Predicated region
    $region130: #{forward.1} parent=1 // pred_check
      _
    $region131: #{forward.1} parent=1 // pred_check_branch
      %260 = sbr.rel (0) target = $region133
    $region132: #{forward.1} parent=1 // pred_region
      %261 = dma.done [#allocation26], 16
    $region133: #{forward.1} parent=1 // pred_fallthru
      _
    %v263 = vld [vmem:[%s0] sm:$0xff]
    %v264 = vld [vmem:[%s0 + $0x8] sm:$0xff]
    %v265 = vld [vmem:[%s0 + $0x10] sm:$0xff]
    %v266 = vld [vmem:[%s0 + $0x18] sm:$0xff]
    %v267 = vld [vmem:[#allocation2] sm:$0xff]
    %v268 = vld [vmem:[#allocation2 + $0x8] sm:$0xff]
    %v269 = vld [vmem:[#allocation2 + $0x10] sm:$0xff]
    %v270 = vld [vmem:[#allocation2 + $0x18] sm:$0xff]
    %v271 = vld [vmem:[#allocation2 + $0x20] sm:$0xff]
    %v272 = vld [vmem:[#allocation2 + $0x28] sm:$0xff]
    %v273 = vld [vmem:[#allocation2 + $0x30] sm:$0xff]
    %v274 = vld [vmem:[#allocation2 + $0x38] sm:$0xff]
    %v275 = vld [vmem:[#allocation2 + $0x40] sm:$0xff]
    %v276 = vld [vmem:[#allocation2 + $0x48] sm:$0xff]
    %v277 = vld [vmem:[#allocation2 + $0x50] sm:$0xff]
    %v278 = vld [vmem:[#allocation2 + $0x58] sm:$0xff]
    %v279 = vld [vmem:[#allocation2 + $0x60] sm:$0xff]
    %v280 = vld [vmem:[#allocation2 + $0x68] sm:$0xff]
    %v281 = vld [vmem:[#allocation2 + $0x70] sm:$0xff]
    %v282 = vld [vmem:[#allocation2 + $0x78] sm:$0xff]
    %v283 = vld [vmem:[#allocation2 + $0x80] sm:$0xff]
    %v284 = vld [vmem:[#allocation2 + $0x88] sm:$0xff]
    %v285 = vld [vmem:[#allocation2 + $0x90] sm:$0xff]
    %v286 = vld [vmem:[#allocation2 + $0x98] sm:$0xff]
    %v287 = vld [vmem:[#allocation2 + $0xa0] sm:$0xff]
    %v288 = vld [vmem:[#allocation2 + $0xa8] sm:$0xff]
    %v289 = vld [vmem:[#allocation2 + $0xb0] sm:$0xff]
    %v290 = vld [vmem:[#allocation2 + $0xb8] sm:$0xff]
    %v291 = vld [vmem:[#allocation2 + $0xc0] sm:$0xff]
    %v292 = vld [vmem:[#allocation2 + $0xc8] sm:$0xff]
    %v293 = vld [vmem:[#allocation2 + $0xd0] sm:$0xff]
    %v294 = vld [vmem:[#allocation2 + $0xd8] sm:$0xff]
    %v295 = vld [vmem:[#allocation2 + $0xe0] sm:$0xff]
    %v296 = vld [vmem:[#allocation2 + $0xe8] sm:$0xff]
    %v297 = vld [vmem:[#allocation2 + $0xf0] sm:$0xff]
    %v298 = vld [vmem:[#allocation2 + $0xf8] sm:$0xff]
    %v299 = vld [vmem:[#allocation2 + $0x100] sm:$0xff]
    %v300 = vld [vmem:[#allocation2 + $0x108] sm:$0xff]
    %v301 = vld [vmem:[#allocation2 + $0x110] sm:$0xff]
    %v302 = vld [vmem:[#allocation2 + $0x118] sm:$0xff]
    %v303 = vld [vmem:[#allocation2 + $0x120] sm:$0xff]
    %v304 = vld [vmem:[#allocation2 + $0x128] sm:$0xff]
    %v305 = vld [vmem:[#allocation2 + $0x130] sm:$0xff]
    %v306 = vld [vmem:[#allocation2 + $0x138] sm:$0xff]
    %v307 = vld [vmem:[#allocation2 + $0x140] sm:$0xff]
    %v308 = vld [vmem:[#allocation2 + $0x148] sm:$0xff]
    %v309 = vld [vmem:[#allocation2 + $0x150] sm:$0xff]
    %v310 = vld [vmem:[#allocation2 + $0x158] sm:$0xff]
    %v311 = vld [vmem:[#allocation2 + $0x160] sm:$0xff]
    %v312 = vld [vmem:[#allocation2 + $0x168] sm:$0xff]
    %v313 = vld [vmem:[#allocation2 + $0x170] sm:$0xff]
    %v314 = vld [vmem:[#allocation2 + $0x178] sm:$0xff]
    %v315 = vld [vmem:[#allocation2 + $0x180] sm:$0xff]
    %v316 = vld [vmem:[#allocation2 + $0x188] sm:$0xff]
    %v317 = vld [vmem:[#allocation2 + $0x190] sm:$0xff]
    %v318 = vld [vmem:[#allocation2 + $0x198] sm:$0xff]
    %v319 = vld [vmem:[#allocation2 + $0x1a0] sm:$0xff]
    %v320 = vld [vmem:[#allocation2 + $0x1a8] sm:$0xff]
    %v321 = vld [vmem:[#allocation2 + $0x1b0] sm:$0xff]
    %v322 = vld [vmem:[#allocation2 + $0x1b8] sm:$0xff]
    %v323 = vld [vmem:[#allocation2 + $0x1c0] sm:$0xff]
    %v324 = vld [vmem:[#allocation2 + $0x1c8] sm:$0xff]
    %v325 = vld [vmem:[#allocation2 + $0x1d0] sm:$0xff]
    %v326 = vld [vmem:[#allocation2 + $0x1d8] sm:$0xff]
    %v327 = vld [vmem:[#allocation2 + $0x1e0] sm:$0xff]
    %v328 = vld [vmem:[#allocation2 + $0x1e8] sm:$0xff]
    %v329 = vld [vmem:[#allocation2 + $0x1f0] sm:$0xff]
    %v330 = vld [vmem:[#allocation2 + $0x1f8] sm:$0xff]
    %v331 = vld [vmem:[#allocation2 + $0x200] sm:$0xff]
    %v332 = vld [vmem:[#allocation2 + $0x208] sm:$0xff]
    %v333 = vld [vmem:[#allocation2 + $0x210] sm:$0xff]
    %v334 = vld [vmem:[#allocation2 + $0x218] sm:$0xff]
    %v335 = vld [vmem:[#allocation2 + $0x220] sm:$0xff]
    %v336 = vld [vmem:[#allocation2 + $0x228] sm:$0xff]
    %v337 = vld [vmem:[#allocation2 + $0x230] sm:$0xff]
    %v338 = vld [vmem:[#allocation2 + $0x238] sm:$0xff]
    %v339 = vld [vmem:[#allocation2 + $0x240] sm:$0xff]
    %v340 = vld [vmem:[#allocation2 + $0x248] sm:$0xff]
    %v341 = vld [vmem:[#allocation2 + $0x250] sm:$0xff]
    %v342 = vld [vmem:[#allocation2 + $0x258] sm:$0xff]
    %v343 = vld [vmem:[#allocation2 + $0x260] sm:$0xff]
    %v344 = vld [vmem:[#allocation2 + $0x268] sm:$0xff]
    %v345 = vld [vmem:[#allocation2 + $0x270] sm:$0xff]
    %v346 = vld [vmem:[#allocation2 + $0x278] sm:$0xff]
    %v347 = vld [vmem:[#allocation2 + $0x280] sm:$0xff]
    %v348 = vld [vmem:[#allocation2 + $0x288] sm:$0xff]
    %v349 = vld [vmem:[#allocation2 + $0x290] sm:$0xff]
    %v350 = vld [vmem:[#allocation2 + $0x298] sm:$0xff]
    %v351 = vld [vmem:[#allocation2 + $0x2a0] sm:$0xff]
    %v352 = vld [vmem:[#allocation2 + $0x2a8] sm:$0xff]
    %v353 = vld [vmem:[#allocation2 + $0x2b0] sm:$0xff]
    %v354 = vld [vmem:[#allocation2 + $0x2b8] sm:$0xff]
    %v355 = vld [vmem:[#allocation2 + $0x2c0] sm:$0xff]
    %v356 = vld [vmem:[#allocation2 + $0x2c8] sm:$0xff]
    %v357 = vld [vmem:[#allocation2 + $0x2d0] sm:$0xff]
    %v358 = vld [vmem:[#allocation2 + $0x2d8] sm:$0xff]
    %v359 = vld [vmem:[#allocation2 + $0x2e0] sm:$0xff]
    %v360 = vld [vmem:[#allocation2 + $0x2e8] sm:$0xff]
    %v361 = vld [vmem:[#allocation2 + $0x2f0] sm:$0xff]
    %v362 = vld [vmem:[#allocation2 + $0x2f8] sm:$0xff]
    %v363 = vld [vmem:[#allocation2 + $0x300] sm:$0xff]
    %v364 = vld [vmem:[#allocation2 + $0x308] sm:$0xff]
    %v365 = vld [vmem:[#allocation2 + $0x310] sm:$0xff]
    %v366 = vld [vmem:[#allocation2 + $0x318] sm:$0xff]
    %v367 = vld [vmem:[#allocation2 + $0x320] sm:$0xff]
    %v368 = vld [vmem:[#allocation2 + $0x328] sm:$0xff]
    %v369 = vld [vmem:[#allocation2 + $0x330] sm:$0xff]
    %v370 = vld [vmem:[#allocation2 + $0x338] sm:$0xff]
    %v371 = vld [vmem:[#allocation2 + $0x340] sm:$0xff]
    %v372 = vld [vmem:[#allocation2 + $0x348] sm:$0xff]
    %v373 = vld [vmem:[#allocation2 + $0x350] sm:$0xff]
    %v374 = vld [vmem:[#allocation2 + $0x358] sm:$0xff]
    %v375 = vld [vmem:[#allocation2 + $0x360] sm:$0xff]
    %v376 = vld [vmem:[#allocation2 + $0x368] sm:$0xff]
    %v377 = vld [vmem:[#allocation2 + $0x370] sm:$0xff]
    %v378 = vld [vmem:[#allocation2 + $0x378] sm:$0xff]
    %v379 = vld [vmem:[#allocation2 + $0x380] sm:$0xff]
    %v380 = vld [vmem:[#allocation2 + $0x388] sm:$0xff]
    %v381 = vld [vmem:[#allocation2 + $0x390] sm:$0xff]
    %v382 = vld [vmem:[#allocation2 + $0x398] sm:$0xff]
    %v383 = vld [vmem:[#allocation2 + $0x3a0] sm:$0xff]
    %v384 = vld [vmem:[#allocation2 + $0x3a8] sm:$0xff]
    %v385 = vld [vmem:[#allocation2 + $0x3b0] sm:$0xff]
    %v386 = vld [vmem:[#allocation2 + $0x3b8] sm:$0xff]
    %v387 = vld [vmem:[#allocation2 + $0x3c0] sm:$0xff]
    %v388 = vld [vmem:[#allocation2 + $0x3c8] sm:$0xff]
    %v389 = vld [vmem:[#allocation2 + $0x3d0] sm:$0xff]
    %v390 = vld [vmem:[#allocation2 + $0x3d8] sm:$0xff]
    %v391 = vld [vmem:[#allocation2 + $0x3e0] sm:$0xff]
    %v392 = vld [vmem:[#allocation2 + $0x3e8] sm:$0xff]
    %v393 = vld [vmem:[#allocation2 + $0x3f0] sm:$0xff]
    %v394 = vld [vmem:[#allocation2 + $0x3f8] sm:$0xff]
    %v395 = vld [vmem:[#allocation2 + $0x400] sm:$0xff]
    %v396 = vld [vmem:[#allocation2 + $0x408] sm:$0xff]
    %v397 = vld [vmem:[#allocation2 + $0x410] sm:$0xff]
    %v398 = vld [vmem:[#allocation2 + $0x418] sm:$0xff]
    %v399 = vld [vmem:[#allocation2 + $0x420] sm:$0xff]
    %v400 = vld [vmem:[#allocation2 + $0x428] sm:$0xff]
    %v401 = vld [vmem:[#allocation2 + $0x430] sm:$0xff]
    %v402 = vld [vmem:[#allocation2 + $0x438] sm:$0xff]
    %v403 = vld [vmem:[#allocation2 + $0x440] sm:$0xff]
    %v404 = vld [vmem:[#allocation2 + $0x448] sm:$0xff]
    %v405 = vld [vmem:[#allocation2 + $0x450] sm:$0xff]
    %v406 = vld [vmem:[#allocation2 + $0x458] sm:$0xff]
    %v407 = vld [vmem:[#allocation2 + $0x460] sm:$0xff]
    %v408 = vld [vmem:[#allocation2 + $0x468] sm:$0xff]
    %v409 = vld [vmem:[#allocation2 + $0x470] sm:$0xff]
    %v410 = vld [vmem:[#allocation2 + $0x478] sm:$0xff]
    %v411 = vld [vmem:[#allocation2 + $0x480] sm:$0xff]
    %v412 = vld [vmem:[#allocation2 + $0x488] sm:$0xff]
    %v413 = vld [vmem:[#allocation2 + $0x490] sm:$0xff]
    %v414 = vld [vmem:[#allocation2 + $0x498] sm:$0xff]
    %v415 = vld [vmem:[#allocation2 + $0x4a0] sm:$0xff]
    %v416 = vld [vmem:[#allocation2 + $0x4a8] sm:$0xff]
    %v417 = vld [vmem:[#allocation2 + $0x4b0] sm:$0xff]
    %v418 = vld [vmem:[#allocation2 + $0x4b8] sm:$0xff]
    %v419 = vld [vmem:[#allocation2 + $0x4c0] sm:$0xff]
    %v420 = vld [vmem:[#allocation2 + $0x4c8] sm:$0xff]
    %v421 = vld [vmem:[#allocation2 + $0x4d0] sm:$0xff]
    %v422 = vld [vmem:[#allocation2 + $0x4d8] sm:$0xff]
    %v423 = vld [vmem:[#allocation2 + $0x4e0] sm:$0xff]
    %v424 = vld [vmem:[#allocation2 + $0x4e8] sm:$0xff]
    %v425 = vld [vmem:[#allocation2 + $0x4f0] sm:$0xff]
    %v426 = vld [vmem:[#allocation2 + $0x4f8] sm:$0xff]
    %v427 = vld [vmem:[#allocation2 + $0x500] sm:$0xff]
    %v428 = vld [vmem:[#allocation2 + $0x508] sm:$0xff]
    %v429 = vld [vmem:[#allocation2 + $0x510] sm:$0xff]
    %v430 = vld [vmem:[#allocation2 + $0x518] sm:$0xff]
    %v431 = vld [vmem:[#allocation2 + $0x520] sm:$0xff]
    %v432 = vld [vmem:[#allocation2 + $0x528] sm:$0xff]
    %v433 = vld [vmem:[#allocation2 + $0x530] sm:$0xff]
    %v434 = vld [vmem:[#allocation2 + $0x538] sm:$0xff]
    %v435 = vld [vmem:[#allocation2 + $0x540] sm:$0xff]
    %v436 = vld [vmem:[#allocation2 + $0x548] sm:$0xff]
    %v437 = vld [vmem:[#allocation2 + $0x550] sm:$0xff]
    %v438 = vld [vmem:[#allocation2 + $0x558] sm:$0xff]
    %v439 = vld [vmem:[#allocation2 + $0x560] sm:$0xff]
    %v440 = vld [vmem:[#allocation2 + $0x568] sm:$0xff]
    %v441 = vld [vmem:[#allocation2 + $0x570] sm:$0xff]
    %v442 = vld [vmem:[#allocation2 + $0x578] sm:$0xff]
    %v443 = vld [vmem:[#allocation2 + $0x580] sm:$0xff]
    %v444 = vld [vmem:[#allocation2 + $0x588] sm:$0xff]
    %v445 = vld [vmem:[#allocation2 + $0x590] sm:$0xff]
    %v446 = vld [vmem:[#allocation2 + $0x598] sm:$0xff]
    %v447 = vld [vmem:[#allocation2 + $0x5a0] sm:$0xff]
    %v448 = vld [vmem:[#allocation2 + $0x5a8] sm:$0xff]
    %v449 = vld [vmem:[#allocation2 + $0x5b0] sm:$0xff]
    %v450 = vld [vmem:[#allocation2 + $0x5b8] sm:$0xff]
    %v451 = vld [vmem:[#allocation2 + $0x5c0] sm:$0xff]
    %v452 = vld [vmem:[#allocation2 + $0x5c8] sm:$0xff]
    %v453 = vld [vmem:[#allocation2 + $0x5d0] sm:$0xff]
    %v454 = vld [vmem:[#allocation2 + $0x5d8] sm:$0xff]
    %v455 = vld [vmem:[#allocation2 + $0x5e0] sm:$0xff]
    %v456 = vld [vmem:[#allocation2 + $0x5e8] sm:$0xff]
    %v457 = vld [vmem:[#allocation2 + $0x5f0] sm:$0xff]
    %v458 = vld [vmem:[#allocation2 + $0x5f8] sm:$0xff]
    %v459 = vld [vmem:[#allocation2 + $0x600] sm:$0xff]
    %v460 = vld [vmem:[#allocation2 + $0x608] sm:$0xff]
    %v461 = vld [vmem:[#allocation2 + $0x610] sm:$0xff]
    %v462 = vld [vmem:[#allocation2 + $0x618] sm:$0xff]
    %v463 = vld [vmem:[#allocation2 + $0x620] sm:$0xff]
    %v464 = vld [vmem:[#allocation2 + $0x628] sm:$0xff]
    %v465 = vld [vmem:[#allocation2 + $0x630] sm:$0xff]
    %v466 = vld [vmem:[#allocation2 + $0x638] sm:$0xff]
    %v467 = vld [vmem:[#allocation2 + $0x640] sm:$0xff]
    %v468 = vld [vmem:[#allocation2 + $0x648] sm:$0xff]
    %v469 = vld [vmem:[#allocation2 + $0x650] sm:$0xff]
    %v470 = vld [vmem:[#allocation2 + $0x658] sm:$0xff]
    %v471 = vld [vmem:[#allocation2 + $0x660] sm:$0xff]
    %v472 = vld [vmem:[#allocation2 + $0x668] sm:$0xff]
    %v473 = vld [vmem:[#allocation2 + $0x670] sm:$0xff]
    %v474 = vld [vmem:[#allocation2 + $0x678] sm:$0xff]
    %v475 = vld [vmem:[#allocation2 + $0x680] sm:$0xff]
    %v476 = vld [vmem:[#allocation2 + $0x688] sm:$0xff]
    %v477 = vld [vmem:[#allocation2 + $0x690] sm:$0xff]
    %v478 = vld [vmem:[#allocation2 + $0x698] sm:$0xff]
    %v479 = vld [vmem:[#allocation2 + $0x6a0] sm:$0xff]
    %v480 = vld [vmem:[#allocation2 + $0x6a8] sm:$0xff]
    %v481 = vld [vmem:[#allocation2 + $0x6b0] sm:$0xff]
    %v482 = vld [vmem:[#allocation2 + $0x6b8] sm:$0xff]
    %v483 = vld [vmem:[#allocation2 + $0x6c0] sm:$0xff]
    %v484 = vld [vmem:[#allocation2 + $0x6c8] sm:$0xff]
    %v485 = vld [vmem:[#allocation2 + $0x6d0] sm:$0xff]
    %v486 = vld [vmem:[#allocation2 + $0x6d8] sm:$0xff]
    %v487 = vld [vmem:[#allocation2 + $0x6e0] sm:$0xff]
    %v488 = vld [vmem:[#allocation2 + $0x6e8] sm:$0xff]
    %v489 = vld [vmem:[#allocation2 + $0x6f0] sm:$0xff]
    %v490 = vld [vmem:[#allocation2 + $0x6f8] sm:$0xff]
    %v491 = vld [vmem:[#allocation2 + $0x700] sm:$0xff]
    %v492 = vld [vmem:[#allocation2 + $0x708] sm:$0xff]
    %v493 = vld [vmem:[#allocation2 + $0x710] sm:$0xff]
    %v494 = vld [vmem:[#allocation2 + $0x718] sm:$0xff]
    %v495 = vld [vmem:[#allocation2 + $0x720] sm:$0xff]
    %v496 = vld [vmem:[#allocation2 + $0x728] sm:$0xff]
    %v497 = vld [vmem:[#allocation2 + $0x730] sm:$0xff]
    %v498 = vld [vmem:[#allocation2 + $0x738] sm:$0xff]
    %v499 = vld [vmem:[#allocation2 + $0x740] sm:$0xff]
    %v500 = vld [vmem:[#allocation2 + $0x748] sm:$0xff]
    %v501 = vld [vmem:[#allocation2 + $0x750] sm:$0xff]
    %v502 = vld [vmem:[#allocation2 + $0x758] sm:$0xff]
    %v503 = vld [vmem:[#allocation2 + $0x760] sm:$0xff]
    %v504 = vld [vmem:[#allocation2 + $0x768] sm:$0xff]
    %v505 = vld [vmem:[#allocation2 + $0x770] sm:$0xff]
    %v506 = vld [vmem:[#allocation2 + $0x778] sm:$0xff]
    %v507 = vld [vmem:[#allocation2 + $0x780] sm:$0xff]
    %v508 = vld [vmem:[#allocation2 + $0x788] sm:$0xff]
    %v509 = vld [vmem:[#allocation2 + $0x790] sm:$0xff]
    %v510 = vld [vmem:[#allocation2 + $0x798] sm:$0xff]
    %v511 = vld [vmem:[#allocation2 + $0x7a0] sm:$0xff]
    %v512 = vld [vmem:[#allocation2 + $0x7a8] sm:$0xff]
    %v513 = vld [vmem:[#allocation2 + $0x7b0] sm:$0xff]
    %v514 = vld [vmem:[#allocation2 + $0x7b8] sm:$0xff]
    %v515 = vld [vmem:[#allocation2 + $0x7c0] sm:$0xff]
    %v516 = vld [vmem:[#allocation2 + $0x7c8] sm:$0xff]
    %v517 = vld [vmem:[#allocation2 + $0x7d0] sm:$0xff]
    %v518 = vld [vmem:[#allocation2 + $0x7d8] sm:$0xff]
    %v519 = vld [vmem:[#allocation2 + $0x7e0] sm:$0xff]
    %v520 = vld [vmem:[#allocation2 + $0x7e8] sm:$0xff]
    %v521 = vld [vmem:[#allocation2 + $0x7f0] sm:$0xff]
    %v522 = vld [vmem:[#allocation2 + $0x7f8] sm:$0xff]
    %v523 = vld [vmem:[#allocation2 + $0x800] sm:$0xff]
    %v524 = vld [vmem:[#allocation2 + $0x808] sm:$0xff]
    %v525 = vld [vmem:[#allocation2 + $0x810] sm:$0xff]
    %v526 = vld [vmem:[#allocation2 + $0x818] sm:$0xff]
    %v527 = vld [vmem:[#allocation2 + $0x820] sm:$0xff]
    %v528 = vld [vmem:[#allocation2 + $0x828] sm:$0xff]
    %v529 = vld [vmem:[#allocation2 + $0x830] sm:$0xff]
    %v530 = vld [vmem:[#allocation2 + $0x838] sm:$0xff]
    %v531 = vld [vmem:[#allocation2 + $0x840] sm:$0xff]
    %v532 = vld [vmem:[#allocation2 + $0x848] sm:$0xff]
    %v533 = vld [vmem:[#allocation2 + $0x850] sm:$0xff]
    %v534 = vld [vmem:[#allocation2 + $0x858] sm:$0xff]
    %v535 = vld [vmem:[#allocation2 + $0x860] sm:$0xff]
    %v536 = vld [vmem:[#allocation2 + $0x868] sm:$0xff]
    %v537 = vld [vmem:[#allocation2 + $0x870] sm:$0xff]
    %v538 = vld [vmem:[#allocation2 + $0x878] sm:$0xff]
    %v539 = vld [vmem:[#allocation2 + $0x880] sm:$0xff]
    %v540 = vld [vmem:[#allocation2 + $0x888] sm:$0xff]
    %v541 = vld [vmem:[#allocation2 + $0x890] sm:$0xff]
    %v542 = vld [vmem:[#allocation2 + $0x898] sm:$0xff]
    %v543 = vld [vmem:[#allocation2 + $0x8a0] sm:$0xff]
    %v544 = vld [vmem:[#allocation2 + $0x8a8] sm:$0xff]
    %v545 = vld [vmem:[#allocation2 + $0x8b0] sm:$0xff]
    %v546 = vld [vmem:[#allocation2 + $0x8b8] sm:$0xff]
    %v547 = vld [vmem:[#allocation2 + $0x8c0] sm:$0xff]
    %v548 = vld [vmem:[#allocation2 + $0x8c8] sm:$0xff]
    %v549 = vld [vmem:[#allocation2 + $0x8d0] sm:$0xff]
    %v550 = vld [vmem:[#allocation2 + $0x8d8] sm:$0xff]
    %v551 = vld [vmem:[#allocation2 + $0x8e0] sm:$0xff]
    %v552 = vld [vmem:[#allocation2 + $0x8e8] sm:$0xff]
    %v553 = vld [vmem:[#allocation2 + $0x8f0] sm:$0xff]
    %v554 = vld [vmem:[#allocation2 + $0x8f8] sm:$0xff]
    %v555 = vld [vmem:[#allocation2 + $0x900] sm:$0xff]
    %v556 = vld [vmem:[#allocation2 + $0x908] sm:$0xff]
    %v557 = vld [vmem:[#allocation2 + $0x910] sm:$0xff]
    %v558 = vld [vmem:[#allocation2 + $0x918] sm:$0xff]
    %v559 = vld [vmem:[#allocation2 + $0x920] sm:$0xff]
    %v560 = vld [vmem:[#allocation2 + $0x928] sm:$0xff]
    %v561 = vld [vmem:[#allocation2 + $0x930] sm:$0xff]
    %v562 = vld [vmem:[#allocation2 + $0x938] sm:$0xff]
    %v563 = vld [vmem:[#allocation2 + $0x940] sm:$0xff]
    %v564 = vld [vmem:[#allocation2 + $0x948] sm:$0xff]
    %v565 = vld [vmem:[#allocation2 + $0x950] sm:$0xff]
    %v566 = vld [vmem:[#allocation2 + $0x958] sm:$0xff]
    %v567 = vld [vmem:[#allocation2 + $0x960] sm:$0xff]
    %v568 = vld [vmem:[#allocation2 + $0x968] sm:$0xff]
    %v569 = vld [vmem:[#allocation2 + $0x970] sm:$0xff]
    %v570 = vld [vmem:[#allocation2 + $0x978] sm:$0xff]
    %v571 = vld [vmem:[#allocation2 + $0x980] sm:$0xff]
    %v572 = vld [vmem:[#allocation2 + $0x988] sm:$0xff]
    %v573 = vld [vmem:[#allocation2 + $0x990] sm:$0xff]
    %v574 = vld [vmem:[#allocation2 + $0x998] sm:$0xff]
    %v575 = vld [vmem:[#allocation2 + $0x9a0] sm:$0xff]
    %v576 = vld [vmem:[#allocation2 + $0x9a8] sm:$0xff]
    %v577 = vld [vmem:[#allocation2 + $0x9b0] sm:$0xff]
    %v578 = vld [vmem:[#allocation2 + $0x9b8] sm:$0xff]
    %v579 = vld [vmem:[#allocation2 + $0x9c0] sm:$0xff]
    %v580 = vld [vmem:[#allocation2 + $0x9c8] sm:$0xff]
    %v581 = vld [vmem:[#allocation2 + $0x9d0] sm:$0xff]
    %v582 = vld [vmem:[#allocation2 + $0x9d8] sm:$0xff]
    %v583 = vld [vmem:[#allocation2 + $0x9e0] sm:$0xff]
    %v584 = vld [vmem:[#allocation2 + $0x9e8] sm:$0xff]
    %v585 = vld [vmem:[#allocation2 + $0x9f0] sm:$0xff]
    %v586 = vld [vmem:[#allocation2 + $0x9f8] sm:$0xff]
    %v587 = vld [vmem:[#allocation2 + $0xa00] sm:$0xff]
    %v588 = vld [vmem:[#allocation2 + $0xa08] sm:$0xff]
    %v589 = vld [vmem:[#allocation2 + $0xa10] sm:$0xff]
    %v590 = vld [vmem:[#allocation2 + $0xa18] sm:$0xff]
    %v591 = vld [vmem:[#allocation2 + $0xa20] sm:$0xff]
    %v592 = vld [vmem:[#allocation2 + $0xa28] sm:$0xff]
    %v593 = vld [vmem:[#allocation2 + $0xa30] sm:$0xff]
    %v594 = vld [vmem:[#allocation2 + $0xa38] sm:$0xff]
    %v595 = vld [vmem:[#allocation2 + $0xa40] sm:$0xff]
    %v596 = vld [vmem:[#allocation2 + $0xa48] sm:$0xff]
    %v597 = vld [vmem:[#allocation2 + $0xa50] sm:$0xff]
    %v598 = vld [vmem:[#allocation2 + $0xa58] sm:$0xff]
    %v599 = vld [vmem:[#allocation2 + $0xa60] sm:$0xff]
    %v600 = vld [vmem:[#allocation2 + $0xa68] sm:$0xff]
    %v601 = vld [vmem:[#allocation2 + $0xa70] sm:$0xff]
    %v602 = vld [vmem:[#allocation2 + $0xa78] sm:$0xff]
    %v603 = vld [vmem:[#allocation2 + $0xa80] sm:$0xff]
    %v604 = vld [vmem:[#allocation2 + $0xa88] sm:$0xff]
    %v605 = vld [vmem:[#allocation2 + $0xa90] sm:$0xff]
    %v606 = vld [vmem:[#allocation2 + $0xa98] sm:$0xff]
    %v607 = vld [vmem:[#allocation2 + $0xaa0] sm:$0xff]
    %v608 = vld [vmem:[#allocation2 + $0xaa8] sm:$0xff]
    %v609 = vld [vmem:[#allocation2 + $0xab0] sm:$0xff]
    %v610 = vld [vmem:[#allocation2 + $0xab8] sm:$0xff]
    %v611 = vld [vmem:[#allocation2 + $0xac0] sm:$0xff]
    %v612 = vld [vmem:[#allocation2 + $0xac8] sm:$0xff]
    %v613 = vld [vmem:[#allocation2 + $0xad0] sm:$0xff]
    %v614 = vld [vmem:[#allocation2 + $0xad8] sm:$0xff]
    %v615 = vld [vmem:[#allocation2 + $0xae0] sm:$0xff]
    %v616 = vld [vmem:[#allocation2 + $0xae8] sm:$0xff]
    %v617 = vld [vmem:[#allocation2 + $0xaf0] sm:$0xff]
    %v618 = vld [vmem:[#allocation2 + $0xaf8] sm:$0xff]
    %v619 = vld [vmem:[#allocation2 + $0xb00] sm:$0xff]
    %v620 = vld [vmem:[#allocation2 + $0xb08] sm:$0xff]
    %v621 = vld [vmem:[#allocation2 + $0xb10] sm:$0xff]
    %v622 = vld [vmem:[#allocation2 + $0xb18] sm:$0xff]
    %v623 = vld [vmem:[#allocation2 + $0xb20] sm:$0xff]
    %v624 = vld [vmem:[#allocation2 + $0xb28] sm:$0xff]
    %v625 = vld [vmem:[#allocation2 + $0xb30] sm:$0xff]
    %v626 = vld [vmem:[#allocation2 + $0xb38] sm:$0xff]
    %v627 = vld [vmem:[#allocation2 + $0xb40] sm:$0xff]
    %v628 = vld [vmem:[#allocation2 + $0xb48] sm:$0xff]
    %v629 = vld [vmem:[#allocation2 + $0xb50] sm:$0xff]
    %v630 = vld [vmem:[#allocation2 + $0xb58] sm:$0xff]
    %v631 = vld [vmem:[#allocation2 + $0xb60] sm:$0xff]
    %v632 = vld [vmem:[#allocation2 + $0xb68] sm:$0xff]
    %v633 = vld [vmem:[#allocation2 + $0xb70] sm:$0xff]
    %v634 = vld [vmem:[#allocation2 + $0xb78] sm:$0xff]
    %v635 = vld [vmem:[#allocation2 + $0xb80] sm:$0xff]
    %v636 = vld [vmem:[#allocation2 + $0xb88] sm:$0xff]
    %v637 = vld [vmem:[#allocation2 + $0xb90] sm:$0xff]
    %v638 = vld [vmem:[#allocation2 + $0xb98] sm:$0xff]
    %v639 = vld [vmem:[#allocation2 + $0xba0] sm:$0xff]
    %v640 = vld [vmem:[#allocation2 + $0xba8] sm:$0xff]
    %v641 = vld [vmem:[#allocation2 + $0xbb0] sm:$0xff]
    %v642 = vld [vmem:[#allocation2 + $0xbb8] sm:$0xff]
    %v643 = vld [vmem:[#allocation2 + $0xbc0] sm:$0xff]
    %v644 = vld [vmem:[#allocation2 + $0xbc8] sm:$0xff]
    %v645 = vld [vmem:[#allocation2 + $0xbd0] sm:$0xff]
    %v646 = vld [vmem:[#allocation2 + $0xbd8] sm:$0xff]
    %v647 = vld [vmem:[#allocation2 + $0xbe0] sm:$0xff]
    %v648 = vld [vmem:[#allocation2 + $0xbe8] sm:$0xff]
    %v649 = vld [vmem:[#allocation2 + $0xbf0] sm:$0xff]
    %v650 = vld [vmem:[#allocation2 + $0xbf8] sm:$0xff]
    %v651 = vld [vmem:[#allocation2 + $0xc00] sm:$0xff]
    %v652 = vld [vmem:[#allocation2 + $0xc08] sm:$0xff]
    %v653 = vld [vmem:[#allocation2 + $0xc10] sm:$0xff]
    %v654 = vld [vmem:[#allocation2 + $0xc18] sm:$0xff]
    %v655 = vld [vmem:[#allocation2 + $0xc20] sm:$0xff]
    %v656 = vld [vmem:[#allocation2 + $0xc28] sm:$0xff]
    %v657 = vld [vmem:[#allocation2 + $0xc30] sm:$0xff]
    %v658 = vld [vmem:[#allocation2 + $0xc38] sm:$0xff]
    %v659 = vld [vmem:[#allocation2 + $0xc40] sm:$0xff]
    %v660 = vld [vmem:[#allocation2 + $0xc48] sm:$0xff]
    %v661 = vld [vmem:[#allocation2 + $0xc50] sm:$0xff]
    %v662 = vld [vmem:[#allocation2 + $0xc58] sm:$0xff]
    %v663 = vld [vmem:[#allocation2 + $0xc60] sm:$0xff]
    %v664 = vld [vmem:[#allocation2 + $0xc68] sm:$0xff]
    %v665 = vld [vmem:[#allocation2 + $0xc70] sm:$0xff]
    %v666 = vld [vmem:[#allocation2 + $0xc78] sm:$0xff]
    %v667 = vld [vmem:[#allocation2 + $0xc80] sm:$0xff]
    %v668 = vld [vmem:[#allocation2 + $0xc88] sm:$0xff]
    %v669 = vld [vmem:[#allocation2 + $0xc90] sm:$0xff]
    %v670 = vld [vmem:[#allocation2 + $0xc98] sm:$0xff]
    %v671 = vld [vmem:[#allocation2 + $0xca0] sm:$0xff]
    %v672 = vld [vmem:[#allocation2 + $0xca8] sm:$0xff]
    %v673 = vld [vmem:[#allocation2 + $0xcb0] sm:$0xff]
    %v674 = vld [vmem:[#allocation2 + $0xcb8] sm:$0xff]
    %v675 = vld [vmem:[#allocation2 + $0xcc0] sm:$0xff]
    %v676 = vld [vmem:[#allocation2 + $0xcc8] sm:$0xff]
    %v677 = vld [vmem:[#allocation2 + $0xcd0] sm:$0xff]
    %v678 = vld [vmem:[#allocation2 + $0xcd8] sm:$0xff]
    %v679 = vld [vmem:[#allocation2 + $0xce0] sm:$0xff]
    %v680 = vld [vmem:[#allocation2 + $0xce8] sm:$0xff]
    %v681 = vld [vmem:[#allocation2 + $0xcf0] sm:$0xff]
    %v682 = vld [vmem:[#allocation2 + $0xcf8] sm:$0xff]
    %v683 = vld [vmem:[#allocation2 + $0xd00] sm:$0xff]
    %v684 = vld [vmem:[#allocation2 + $0xd08] sm:$0xff]
    %v685 = vld [vmem:[#allocation2 + $0xd10] sm:$0xff]
    %v686 = vld [vmem:[#allocation2 + $0xd18] sm:$0xff]
    %v687 = vld [vmem:[#allocation2 + $0xd20] sm:$0xff]
    %v688 = vld [vmem:[#allocation2 + $0xd28] sm:$0xff]
    %v689 = vld [vmem:[#allocation2 + $0xd30] sm:$0xff]
    %v690 = vld [vmem:[#allocation2 + $0xd38] sm:$0xff]
    %v691 = vld [vmem:[#allocation2 + $0xd40] sm:$0xff]
    %v692 = vld [vmem:[#allocation2 + $0xd48] sm:$0xff]
    %v693 = vld [vmem:[#allocation2 + $0xd50] sm:$0xff]
    %v694 = vld [vmem:[#allocation2 + $0xd58] sm:$0xff]
    %v695 = vld [vmem:[#allocation2 + $0xd60] sm:$0xff]
    %v696 = vld [vmem:[#allocation2 + $0xd68] sm:$0xff]
    %v697 = vld [vmem:[#allocation2 + $0xd70] sm:$0xff]
    %v698 = vld [vmem:[#allocation2 + $0xd78] sm:$0xff]
    %v699 = vld [vmem:[#allocation2 + $0xd80] sm:$0xff]
    %v700 = vld [vmem:[#allocation2 + $0xd88] sm:$0xff]
    %v701 = vld [vmem:[#allocation2 + $0xd90] sm:$0xff]
    %v702 = vld [vmem:[#allocation2 + $0xd98] sm:$0xff]
    %v703 = vld [vmem:[#allocation2 + $0xda0] sm:$0xff]
    %v704 = vld [vmem:[#allocation2 + $0xda8] sm:$0xff]
    %v705 = vld [vmem:[#allocation2 + $0xdb0] sm:$0xff]
    %v706 = vld [vmem:[#allocation2 + $0xdb8] sm:$0xff]
    %v707 = vld [vmem:[#allocation2 + $0xdc0] sm:$0xff]
    %v708 = vld [vmem:[#allocation2 + $0xdc8] sm:$0xff]
    %v709 = vld [vmem:[#allocation2 + $0xdd0] sm:$0xff]
    %v710 = vld [vmem:[#allocation2 + $0xdd8] sm:$0xff]
    %v711 = vld [vmem:[#allocation2 + $0xde0] sm:$0xff]
    %v712 = vld [vmem:[#allocation2 + $0xde8] sm:$0xff]
    %v713 = vld [vmem:[#allocation2 + $0xdf0] sm:$0xff]
    %v714 = vld [vmem:[#allocation2 + $0xdf8] sm:$0xff]
    %v715 = vld [vmem:[#allocation2 + $0xe00] sm:$0xff]
    %v716 = vld [vmem:[#allocation2 + $0xe08] sm:$0xff]
    %v717 = vld [vmem:[#allocation2 + $0xe10] sm:$0xff]
    %v718 = vld [vmem:[#allocation2 + $0xe18] sm:$0xff]
    %v719 = vld [vmem:[#allocation2 + $0xe20] sm:$0xff]
    %v720 = vld [vmem:[#allocation2 + $0xe28] sm:$0xff]
    %v721 = vld [vmem:[#allocation2 + $0xe30] sm:$0xff]
    %v722 = vld [vmem:[#allocation2 + $0xe38] sm:$0xff]
    %v723 = vld [vmem:[#allocation2 + $0xe40] sm:$0xff]
    %v724 = vld [vmem:[#allocation2 + $0xe48] sm:$0xff]
    %v725 = vld [vmem:[#allocation2 + $0xe50] sm:$0xff]
    %v726 = vld [vmem:[#allocation2 + $0xe58] sm:$0xff]
    %v727 = vld [vmem:[#allocation2 + $0xe60] sm:$0xff]
    %v728 = vld [vmem:[#allocation2 + $0xe68] sm:$0xff]
    %v729 = vld [vmem:[#allocation2 + $0xe70] sm:$0xff]
    %v730 = vld [vmem:[#allocation2 + $0xe78] sm:$0xff]
    %v731 = vld [vmem:[#allocation2 + $0xe80] sm:$0xff]
    %v732 = vld [vmem:[#allocation2 + $0xe88] sm:$0xff]
    %v733 = vld [vmem:[#allocation2 + $0xe90] sm:$0xff]
    %v734 = vld [vmem:[#allocation2 + $0xe98] sm:$0xff]
    %v735 = vld [vmem:[#allocation2 + $0xea0] sm:$0xff]
    %v736 = vld [vmem:[#allocation2 + $0xea8] sm:$0xff]
    %v737 = vld [vmem:[#allocation2 + $0xeb0] sm:$0xff]
    %v738 = vld [vmem:[#allocation2 + $0xeb8] sm:$0xff]
    %v739 = vld [vmem:[#allocation2 + $0xec0] sm:$0xff]
    %v740 = vld [vmem:[#allocation2 + $0xec8] sm:$0xff]
    %v741 = vld [vmem:[#allocation2 + $0xed0] sm:$0xff]
    %v742 = vld [vmem:[#allocation2 + $0xed8] sm:$0xff]
    %v743 = vld [vmem:[#allocation2 + $0xee0] sm:$0xff]
    %v744 = vld [vmem:[#allocation2 + $0xee8] sm:$0xff]
    %v745 = vld [vmem:[#allocation2 + $0xef0] sm:$0xff]
    %v746 = vld [vmem:[#allocation2 + $0xef8] sm:$0xff]
    %v747 = vld [vmem:[#allocation2 + $0xf00] sm:$0xff]
    %v748 = vld [vmem:[#allocation2 + $0xf08] sm:$0xff]
    %v749 = vld [vmem:[#allocation2 + $0xf10] sm:$0xff]
    %v750 = vld [vmem:[#allocation2 + $0xf18] sm:$0xff]
    %v751 = vld [vmem:[#allocation2 + $0xf20] sm:$0xff]
    %v752 = vld [vmem:[#allocation2 + $0xf28] sm:$0xff]
    %v753 = vld [vmem:[#allocation2 + $0xf30] sm:$0xff]
    %v754 = vld [vmem:[#allocation2 + $0xf38] sm:$0xff]
    %v755 = vld [vmem:[#allocation2 + $0xf40] sm:$0xff]
    %v756 = vld [vmem:[#allocation2 + $0xf48] sm:$0xff]
    %v757 = vld [vmem:[#allocation2 + $0xf50] sm:$0xff]
    %v758 = vld [vmem:[#allocation2 + $0xf58] sm:$0xff]
    %v759 = vld [vmem:[#allocation2 + $0xf60] sm:$0xff]
    %v760 = vld [vmem:[#allocation2 + $0xf68] sm:$0xff]
    %v761 = vld [vmem:[#allocation2 + $0xf70] sm:$0xff]
    %v762 = vld [vmem:[#allocation2 + $0xf78] sm:$0xff]
    %v763 = vld [vmem:[#allocation2 + $0xf80] sm:$0xff]
    %v764 = vld [vmem:[#allocation2 + $0xf88] sm:$0xff]
    %v765 = vld [vmem:[#allocation2 + $0xf90] sm:$0xff]
    %v766 = vld [vmem:[#allocation2 + $0xf98] sm:$0xff]
    %v767 = vld [vmem:[#allocation2 + $0xfa0] sm:$0xff]
    %v768 = vld [vmem:[#allocation2 + $0xfa8] sm:$0xff]
    %v769 = vld [vmem:[#allocation2 + $0xfb0] sm:$0xff]
    %v770 = vld [vmem:[#allocation2 + $0xfb8] sm:$0xff]
    %v771 = vld [vmem:[#allocation2 + $0xfc0] sm:$0xff]
    %v772 = vld [vmem:[#allocation2 + $0xfc8] sm:$0xff]
    %v773 = vld [vmem:[#allocation2 + $0xfd0] sm:$0xff]
    %v774 = vld [vmem:[#allocation2 + $0xfd8] sm:$0xff]
    %v775 = vld [vmem:[#allocation2 + $0xfe0] sm:$0xff]
    %v776 = vld [vmem:[#allocation2 + $0xfe8] sm:$0xff]
    %v777 = vld [vmem:[#allocation2 + $0xff0] sm:$0xff]
    %v778 = vld [vmem:[#allocation2 + $0xff8] sm:$0xff]
    %v783 = vunpack.c.l.b16 %v263
    %v784 = vunpack.c.h.b16 %v263
    %v785 = vunpack.c.l.b16 %v264
    %v786 = vunpack.c.h.b16 %v264
    %v787 = vunpack.c.l.b16 %v265
    %v788 = vunpack.c.h.b16 %v265
    %v789 = vunpack.c.l.b16 %v266
    %v790 = vunpack.c.h.b16 %v266
    %v791 = vpack.c.b16 %v783, %v783
    %v792 = vpack.c.b16 %v784, %v784
    %v793 = vpack.c.b16 %v785, %v785
    %v794 = vpack.c.b16 %v786, %v786
    %v795 = vpack.c.b16 %v787, %v787
    %v796 = vpack.c.b16 %v788, %v788
    %v797 = vpack.c.b16 %v789, %v789
    %v798 = vpack.c.b16 %v790, %v790
    %v1319 = vunpack.c.l.b16 %v267
    %v1320 = vunpack.c.h.b16 %v267
    %v1321 = vunpack.c.l.b16 %v268
    %v1322 = vunpack.c.h.b16 %v268
    %v1323 = vunpack.c.l.b16 %v269
    %v1324 = vunpack.c.h.b16 %v269
    %v1325 = vunpack.c.l.b16 %v270
    %v1326 = vunpack.c.h.b16 %v270
    %v1327 = vunpack.c.l.b16 %v271
    %v1328 = vunpack.c.h.b16 %v271
    %v1329 = vunpack.c.l.b16 %v272
    %v1330 = vunpack.c.h.b16 %v272
    %v1331 = vunpack.c.l.b16 %v273
    %v1332 = vunpack.c.h.b16 %v273
    %v1333 = vunpack.c.l.b16 %v274
    %v1334 = vunpack.c.h.b16 %v274
    %v1335 = vunpack.c.l.b16 %v275
    %v1336 = vunpack.c.h.b16 %v275
    %v1337 = vunpack.c.l.b16 %v276
    %v1338 = vunpack.c.h.b16 %v276
    %v1339 = vunpack.c.l.b16 %v277
    %v1340 = vunpack.c.h.b16 %v277
    %v1341 = vunpack.c.l.b16 %v278
    %v1342 = vunpack.c.h.b16 %v278
    %v1343 = vunpack.c.l.b16 %v279
    %v1344 = vunpack.c.h.b16 %v279
    %v1345 = vunpack.c.l.b16 %v280
    %v1346 = vunpack.c.h.b16 %v280
    %v1347 = vunpack.c.l.b16 %v281
    %v1348 = vunpack.c.h.b16 %v281
    %v1349 = vunpack.c.l.b16 %v282
    %v1350 = vunpack.c.h.b16 %v282
    %v1351 = vunpack.c.l.b16 %v283
    %v1352 = vunpack.c.h.b16 %v283
    %v1353 = vunpack.c.l.b16 %v284
    %v1354 = vunpack.c.h.b16 %v284
    %v1355 = vunpack.c.l.b16 %v285
    %v1356 = vunpack.c.h.b16 %v285
    %v1357 = vunpack.c.l.b16 %v286
    %v1358 = vunpack.c.h.b16 %v286
    %v1359 = vunpack.c.l.b16 %v287
    %v1360 = vunpack.c.h.b16 %v287
    %v1361 = vunpack.c.l.b16 %v288
    %v1362 = vunpack.c.h.b16 %v288
    %v1363 = vunpack.c.l.b16 %v289
    %v1364 = vunpack.c.h.b16 %v289
    %v1365 = vunpack.c.l.b16 %v290
    %v1366 = vunpack.c.h.b16 %v290
    %v1367 = vunpack.c.l.b16 %v291
    %v1368 = vunpack.c.h.b16 %v291
    %v1369 = vunpack.c.l.b16 %v292
    %v1370 = vunpack.c.h.b16 %v292
    %v1371 = vunpack.c.l.b16 %v293
    %v1372 = vunpack.c.h.b16 %v293
    %v1373 = vunpack.c.l.b16 %v294
    %v1374 = vunpack.c.h.b16 %v294
    %v1375 = vunpack.c.l.b16 %v295
    %v1376 = vunpack.c.h.b16 %v295
    %v1377 = vunpack.c.l.b16 %v296
    %v1378 = vunpack.c.h.b16 %v296
    %v1379 = vunpack.c.l.b16 %v297
    %v1380 = vunpack.c.h.b16 %v297
    %v1381 = vunpack.c.l.b16 %v298
    %v1382 = vunpack.c.h.b16 %v298
    %v1383 = vunpack.c.l.b16 %v299
    %v1384 = vunpack.c.h.b16 %v299
    %v1385 = vunpack.c.l.b16 %v300
    %v1386 = vunpack.c.h.b16 %v300
    %v1387 = vunpack.c.l.b16 %v301
    %v1388 = vunpack.c.h.b16 %v301
    %v1389 = vunpack.c.l.b16 %v302
    %v1390 = vunpack.c.h.b16 %v302
    %v1391 = vunpack.c.l.b16 %v303
    %v1392 = vunpack.c.h.b16 %v303
    %v1393 = vunpack.c.l.b16 %v304
    %v1394 = vunpack.c.h.b16 %v304
    %v1395 = vunpack.c.l.b16 %v305
    %v1396 = vunpack.c.h.b16 %v305
    %v1397 = vunpack.c.l.b16 %v306
    %v1398 = vunpack.c.h.b16 %v306
    %v1399 = vunpack.c.l.b16 %v307
    %v1400 = vunpack.c.h.b16 %v307
    %v1401 = vunpack.c.l.b16 %v308
    %v1402 = vunpack.c.h.b16 %v308
    %v1403 = vunpack.c.l.b16 %v309
    %v1404 = vunpack.c.h.b16 %v309
    %v1405 = vunpack.c.l.b16 %v310
    %v1406 = vunpack.c.h.b16 %v310
    %v1407 = vunpack.c.l.b16 %v311
    %v1408 = vunpack.c.h.b16 %v311
    %v1409 = vunpack.c.l.b16 %v312
    %v1410 = vunpack.c.h.b16 %v312
    %v1411 = vunpack.c.l.b16 %v313
    %v1412 = vunpack.c.h.b16 %v313
    %v1413 = vunpack.c.l.b16 %v314
    %v1414 = vunpack.c.h.b16 %v314
    %v1415 = vunpack.c.l.b16 %v315
    %v1416 = vunpack.c.h.b16 %v315
    %v1417 = vunpack.c.l.b16 %v316
    %v1418 = vunpack.c.h.b16 %v316
    %v1419 = vunpack.c.l.b16 %v317
    %v1420 = vunpack.c.h.b16 %v317
    %v1421 = vunpack.c.l.b16 %v318
    %v1422 = vunpack.c.h.b16 %v318
    %v1423 = vunpack.c.l.b16 %v319
    %v1424 = vunpack.c.h.b16 %v319
    %v1425 = vunpack.c.l.b16 %v320
    %v1426 = vunpack.c.h.b16 %v320
    %v1427 = vunpack.c.l.b16 %v321
    %v1428 = vunpack.c.h.b16 %v321
    %v1429 = vunpack.c.l.b16 %v322
    %v1430 = vunpack.c.h.b16 %v322
    %v1431 = vunpack.c.l.b16 %v323
    %v1432 = vunpack.c.h.b16 %v323
    %v1433 = vunpack.c.l.b16 %v324
    %v1434 = vunpack.c.h.b16 %v324
    %v1435 = vunpack.c.l.b16 %v325
    %v1436 = vunpack.c.h.b16 %v325
    %v1437 = vunpack.c.l.b16 %v326
    %v1438 = vunpack.c.h.b16 %v326
    %v1439 = vunpack.c.l.b16 %v327
    %v1440 = vunpack.c.h.b16 %v327
    %v1441 = vunpack.c.l.b16 %v328
    %v1442 = vunpack.c.h.b16 %v328
    %v1443 = vunpack.c.l.b16 %v329
    %v1444 = vunpack.c.h.b16 %v329
    %v1445 = vunpack.c.l.b16 %v330
    %v1446 = vunpack.c.h.b16 %v330
    %v1447 = vunpack.c.l.b16 %v331
    %v1448 = vunpack.c.h.b16 %v331
    %v1449 = vunpack.c.l.b16 %v332
    %v1450 = vunpack.c.h.b16 %v332
    %v1451 = vunpack.c.l.b16 %v333
    %v1452 = vunpack.c.h.b16 %v333
    %v1453 = vunpack.c.l.b16 %v334
    %v1454 = vunpack.c.h.b16 %v334
    %v1455 = vunpack.c.l.b16 %v335
    %v1456 = vunpack.c.h.b16 %v335
    %v1457 = vunpack.c.l.b16 %v336
    %v1458 = vunpack.c.h.b16 %v336
    %v1459 = vunpack.c.l.b16 %v337
    %v1460 = vunpack.c.h.b16 %v337
    %v1461 = vunpack.c.l.b16 %v338
    %v1462 = vunpack.c.h.b16 %v338
    %v1463 = vunpack.c.l.b16 %v339
    %v1464 = vunpack.c.h.b16 %v339
    %v1465 = vunpack.c.l.b16 %v340
    %v1466 = vunpack.c.h.b16 %v340
    %v1467 = vunpack.c.l.b16 %v341
    %v1468 = vunpack.c.h.b16 %v341
    %v1469 = vunpack.c.l.b16 %v342
    %v1470 = vunpack.c.h.b16 %v342
    %v1471 = vunpack.c.l.b16 %v343
    %v1472 = vunpack.c.h.b16 %v343
    %v1473 = vunpack.c.l.b16 %v344
    %v1474 = vunpack.c.h.b16 %v344
    %v1475 = vunpack.c.l.b16 %v345
    %v1476 = vunpack.c.h.b16 %v345
    %v1477 = vunpack.c.l.b16 %v346
    %v1478 = vunpack.c.h.b16 %v346
    %v1479 = vunpack.c.l.b16 %v347
    %v1480 = vunpack.c.h.b16 %v347
    %v1481 = vunpack.c.l.b16 %v348
    %v1482 = vunpack.c.h.b16 %v348
    %v1483 = vunpack.c.l.b16 %v349
    %v1484 = vunpack.c.h.b16 %v349
    %v1485 = vunpack.c.l.b16 %v350
    %v1486 = vunpack.c.h.b16 %v350
    %v1487 = vunpack.c.l.b16 %v351
    %v1488 = vunpack.c.h.b16 %v351
    %v1489 = vunpack.c.l.b16 %v352
    %v1490 = vunpack.c.h.b16 %v352
    %v1491 = vunpack.c.l.b16 %v353
    %v1492 = vunpack.c.h.b16 %v353
    %v1493 = vunpack.c.l.b16 %v354
    %v1494 = vunpack.c.h.b16 %v354
    %v1495 = vunpack.c.l.b16 %v355
    %v1496 = vunpack.c.h.b16 %v355
    %v1497 = vunpack.c.l.b16 %v356
    %v1498 = vunpack.c.h.b16 %v356
    %v1499 = vunpack.c.l.b16 %v357
    %v1500 = vunpack.c.h.b16 %v357
    %v1501 = vunpack.c.l.b16 %v358
    %v1502 = vunpack.c.h.b16 %v358
    %v1503 = vunpack.c.l.b16 %v359
    %v1504 = vunpack.c.h.b16 %v359
    %v1505 = vunpack.c.l.b16 %v360
    %v1506 = vunpack.c.h.b16 %v360
    %v1507 = vunpack.c.l.b16 %v361
    %v1508 = vunpack.c.h.b16 %v361
    %v1509 = vunpack.c.l.b16 %v362
    %v1510 = vunpack.c.h.b16 %v362
    %v1511 = vunpack.c.l.b16 %v363
    %v1512 = vunpack.c.h.b16 %v363
    %v1513 = vunpack.c.l.b16 %v364
    %v1514 = vunpack.c.h.b16 %v364
    %v1515 = vunpack.c.l.b16 %v365
    %v1516 = vunpack.c.h.b16 %v365
    %v1517 = vunpack.c.l.b16 %v366
    %v1518 = vunpack.c.h.b16 %v366
    %v1519 = vunpack.c.l.b16 %v367
    %v1520 = vunpack.c.h.b16 %v367
    %v1521 = vunpack.c.l.b16 %v368
    %v1522 = vunpack.c.h.b16 %v368
    %v1523 = vunpack.c.l.b16 %v369
    %v1524 = vunpack.c.h.b16 %v369
    %v1525 = vunpack.c.l.b16 %v370
    %v1526 = vunpack.c.h.b16 %v370
    %v1527 = vunpack.c.l.b16 %v371
    %v1528 = vunpack.c.h.b16 %v371
    %v1529 = vunpack.c.l.b16 %v372
    %v1530 = vunpack.c.h.b16 %v372
    %v1531 = vunpack.c.l.b16 %v373
    %v1532 = vunpack.c.h.b16 %v373
    %v1533 = vunpack.c.l.b16 %v374
    %v1534 = vunpack.c.h.b16 %v374
    %v1535 = vunpack.c.l.b16 %v375
    %v1536 = vunpack.c.h.b16 %v375
    %v1537 = vunpack.c.l.b16 %v376
    %v1538 = vunpack.c.h.b16 %v376
    %v1539 = vunpack.c.l.b16 %v377
    %v1540 = vunpack.c.h.b16 %v377
    %v1541 = vunpack.c.l.b16 %v378
    %v1542 = vunpack.c.h.b16 %v378
    %v1543 = vunpack.c.l.b16 %v379
    %v1544 = vunpack.c.h.b16 %v379
    %v1545 = vunpack.c.l.b16 %v380
    %v1546 = vunpack.c.h.b16 %v380
    %v1547 = vunpack.c.l.b16 %v381
    %v1548 = vunpack.c.h.b16 %v381
    %v1549 = vunpack.c.l.b16 %v382
    %v1550 = vunpack.c.h.b16 %v382
    %v1551 = vunpack.c.l.b16 %v383
    %v1552 = vunpack.c.h.b16 %v383
    %v1553 = vunpack.c.l.b16 %v384
    %v1554 = vunpack.c.h.b16 %v384
    %v1555 = vunpack.c.l.b16 %v385
    %v1556 = vunpack.c.h.b16 %v385
    %v1557 = vunpack.c.l.b16 %v386
    %v1558 = vunpack.c.h.b16 %v386
    %v1559 = vunpack.c.l.b16 %v387
    %v1560 = vunpack.c.h.b16 %v387
    %v1561 = vunpack.c.l.b16 %v388
    %v1562 = vunpack.c.h.b16 %v388
    %v1563 = vunpack.c.l.b16 %v389
    %v1564 = vunpack.c.h.b16 %v389
    %v1565 = vunpack.c.l.b16 %v390
    %v1566 = vunpack.c.h.b16 %v390
    %v1567 = vunpack.c.l.b16 %v391
    %v1568 = vunpack.c.h.b16 %v391
    %v1569 = vunpack.c.l.b16 %v392
    %v1570 = vunpack.c.h.b16 %v392
    %v1571 = vunpack.c.l.b16 %v393
    %v1572 = vunpack.c.h.b16 %v393
    %v1573 = vunpack.c.l.b16 %v394
    %v1574 = vunpack.c.h.b16 %v394
    %v1575 = vunpack.c.l.b16 %v395
    %v1576 = vunpack.c.h.b16 %v395
    %v1577 = vunpack.c.l.b16 %v396
    %v1578 = vunpack.c.h.b16 %v396
    %v1579 = vunpack.c.l.b16 %v397
    %v1580 = vunpack.c.h.b16 %v397
    %v1581 = vunpack.c.l.b16 %v398
    %v1582 = vunpack.c.h.b16 %v398
    %v1583 = vunpack.c.l.b16 %v399
    %v1584 = vunpack.c.h.b16 %v399
    %v1585 = vunpack.c.l.b16 %v400
    %v1586 = vunpack.c.h.b16 %v400
    %v1587 = vunpack.c.l.b16 %v401
    %v1588 = vunpack.c.h.b16 %v401
    %v1589 = vunpack.c.l.b16 %v402
    %v1590 = vunpack.c.h.b16 %v402
    %v1591 = vunpack.c.l.b16 %v403
    %v1592 = vunpack.c.h.b16 %v403
    %v1593 = vunpack.c.l.b16 %v404
    %v1594 = vunpack.c.h.b16 %v404
    %v1595 = vunpack.c.l.b16 %v405
    %v1596 = vunpack.c.h.b16 %v405
    %v1597 = vunpack.c.l.b16 %v406
    %v1598 = vunpack.c.h.b16 %v406
    %v1599 = vunpack.c.l.b16 %v407
    %v1600 = vunpack.c.h.b16 %v407
    %v1601 = vunpack.c.l.b16 %v408
    %v1602 = vunpack.c.h.b16 %v408
    %v1603 = vunpack.c.l.b16 %v409
    %v1604 = vunpack.c.h.b16 %v409
    %v1605 = vunpack.c.l.b16 %v410
    %v1606 = vunpack.c.h.b16 %v410
    %v1607 = vunpack.c.l.b16 %v411
    %v1608 = vunpack.c.h.b16 %v411
    %v1609 = vunpack.c.l.b16 %v412
    %v1610 = vunpack.c.h.b16 %v412
    %v1611 = vunpack.c.l.b16 %v413
    %v1612 = vunpack.c.h.b16 %v413
    %v1613 = vunpack.c.l.b16 %v414
    %v1614 = vunpack.c.h.b16 %v414
    %v1615 = vunpack.c.l.b16 %v415
    %v1616 = vunpack.c.h.b16 %v415
    %v1617 = vunpack.c.l.b16 %v416
    %v1618 = vunpack.c.h.b16 %v416
    %v1619 = vunpack.c.l.b16 %v417
    %v1620 = vunpack.c.h.b16 %v417
    %v1621 = vunpack.c.l.b16 %v418
    %v1622 = vunpack.c.h.b16 %v418
    %v1623 = vunpack.c.l.b16 %v419
    %v1624 = vunpack.c.h.b16 %v419
    %v1625 = vunpack.c.l.b16 %v420
    %v1626 = vunpack.c.h.b16 %v420
    %v1627 = vunpack.c.l.b16 %v421
    %v1628 = vunpack.c.h.b16 %v421
    %v1629 = vunpack.c.l.b16 %v422
    %v1630 = vunpack.c.h.b16 %v422
    %v1631 = vunpack.c.l.b16 %v423
    %v1632 = vunpack.c.h.b16 %v423
    %v1633 = vunpack.c.l.b16 %v424
    %v1634 = vunpack.c.h.b16 %v424
    %v1635 = vunpack.c.l.b16 %v425
    %v1636 = vunpack.c.h.b16 %v425
    %v1637 = vunpack.c.l.b16 %v426
    %v1638 = vunpack.c.h.b16 %v426
    %v1639 = vunpack.c.l.b16 %v427
    %v1640 = vunpack.c.h.b16 %v427
    %v1641 = vunpack.c.l.b16 %v428
    %v1642 = vunpack.c.h.b16 %v428
    %v1643 = vunpack.c.l.b16 %v429
    %v1644 = vunpack.c.h.b16 %v429
    %v1645 = vunpack.c.l.b16 %v430
    %v1646 = vunpack.c.h.b16 %v430
    %v1647 = vunpack.c.l.b16 %v431
    %v1648 = vunpack.c.h.b16 %v431
    %v1649 = vunpack.c.l.b16 %v432
    %v1650 = vunpack.c.h.b16 %v432
    %v1651 = vunpack.c.l.b16 %v433
    %v1652 = vunpack.c.h.b16 %v433
    %v1653 = vunpack.c.l.b16 %v434
    %v1654 = vunpack.c.h.b16 %v434
    %v1655 = vunpack.c.l.b16 %v435
    %v1656 = vunpack.c.h.b16 %v435
    %v1657 = vunpack.c.l.b16 %v436
    %v1658 = vunpack.c.h.b16 %v436
    %v1659 = vunpack.c.l.b16 %v437
    %v1660 = vunpack.c.h.b16 %v437
    %v1661 = vunpack.c.l.b16 %v438
    %v1662 = vunpack.c.h.b16 %v438
    %v1663 = vunpack.c.l.b16 %v439
    %v1664 = vunpack.c.h.b16 %v439
    %v1665 = vunpack.c.l.b16 %v440
    %v1666 = vunpack.c.h.b16 %v440
    %v1667 = vunpack.c.l.b16 %v441
    %v1668 = vunpack.c.h.b16 %v441
    %v1669 = vunpack.c.l.b16 %v442
    %v1670 = vunpack.c.h.b16 %v442
    %v1671 = vunpack.c.l.b16 %v443
    %v1672 = vunpack.c.h.b16 %v443
    %v1673 = vunpack.c.l.b16 %v444
    %v1674 = vunpack.c.h.b16 %v444
    %v1675 = vunpack.c.l.b16 %v445
    %v1676 = vunpack.c.h.b16 %v445
    %v1677 = vunpack.c.l.b16 %v446
    %v1678 = vunpack.c.h.b16 %v446
    %v1679 = vunpack.c.l.b16 %v447
    %v1680 = vunpack.c.h.b16 %v447
    %v1681 = vunpack.c.l.b16 %v448
    %v1682 = vunpack.c.h.b16 %v448
    %v1683 = vunpack.c.l.b16 %v449
    %v1684 = vunpack.c.h.b16 %v449
    %v1685 = vunpack.c.l.b16 %v450
    %v1686 = vunpack.c.h.b16 %v450
    %v1687 = vunpack.c.l.b16 %v451
    %v1688 = vunpack.c.h.b16 %v451
    %v1689 = vunpack.c.l.b16 %v452
    %v1690 = vunpack.c.h.b16 %v452
    %v1691 = vunpack.c.l.b16 %v453
    %v1692 = vunpack.c.h.b16 %v453
    %v1693 = vunpack.c.l.b16 %v454
    %v1694 = vunpack.c.h.b16 %v454
    %v1695 = vunpack.c.l.b16 %v455
    %v1696 = vunpack.c.h.b16 %v455
    %v1697 = vunpack.c.l.b16 %v456
    %v1698 = vunpack.c.h.b16 %v456
    %v1699 = vunpack.c.l.b16 %v457
    %v1700 = vunpack.c.h.b16 %v457
    %v1701 = vunpack.c.l.b16 %v458
    %v1702 = vunpack.c.h.b16 %v458
    %v1703 = vunpack.c.l.b16 %v459
    %v1704 = vunpack.c.h.b16 %v459
    %v1705 = vunpack.c.l.b16 %v460
    %v1706 = vunpack.c.h.b16 %v460
    %v1707 = vunpack.c.l.b16 %v461
    %v1708 = vunpack.c.h.b16 %v461
    %v1709 = vunpack.c.l.b16 %v462
    %v1710 = vunpack.c.h.b16 %v462
    %v1711 = vunpack.c.l.b16 %v463
    %v1712 = vunpack.c.h.b16 %v463
    %v1713 = vunpack.c.l.b16 %v464
    %v1714 = vunpack.c.h.b16 %v464
    %v1715 = vunpack.c.l.b16 %v465
    %v1716 = vunpack.c.h.b16 %v465
    %v1717 = vunpack.c.l.b16 %v466
    %v1718 = vunpack.c.h.b16 %v466
    %v1719 = vunpack.c.l.b16 %v467
    %v1720 = vunpack.c.h.b16 %v467
    %v1721 = vunpack.c.l.b16 %v468
    %v1722 = vunpack.c.h.b16 %v468
    %v1723 = vunpack.c.l.b16 %v469
    %v1724 = vunpack.c.h.b16 %v469
    %v1725 = vunpack.c.l.b16 %v470
    %v1726 = vunpack.c.h.b16 %v470
    %v1727 = vunpack.c.l.b16 %v471
    %v1728 = vunpack.c.h.b16 %v471
    %v1729 = vunpack.c.l.b16 %v472
    %v1730 = vunpack.c.h.b16 %v472
    %v1731 = vunpack.c.l.b16 %v473
    %v1732 = vunpack.c.h.b16 %v473
    %v1733 = vunpack.c.l.b16 %v474
    %v1734 = vunpack.c.h.b16 %v474
    %v1735 = vunpack.c.l.b16 %v475
    %v1736 = vunpack.c.h.b16 %v475
    %v1737 = vunpack.c.l.b16 %v476
    %v1738 = vunpack.c.h.b16 %v476
    %v1739 = vunpack.c.l.b16 %v477
    %v1740 = vunpack.c.h.b16 %v477
    %v1741 = vunpack.c.l.b16 %v478
    %v1742 = vunpack.c.h.b16 %v478
    %v1743 = vunpack.c.l.b16 %v479
    %v1744 = vunpack.c.h.b16 %v479
    %v1745 = vunpack.c.l.b16 %v480
    %v1746 = vunpack.c.h.b16 %v480
    %v1747 = vunpack.c.l.b16 %v481
    %v1748 = vunpack.c.h.b16 %v481
    %v1749 = vunpack.c.l.b16 %v482
    %v1750 = vunpack.c.h.b16 %v482
    %v1751 = vunpack.c.l.b16 %v483
    %v1752 = vunpack.c.h.b16 %v483
    %v1753 = vunpack.c.l.b16 %v484
    %v1754 = vunpack.c.h.b16 %v484
    %v1755 = vunpack.c.l.b16 %v485
    %v1756 = vunpack.c.h.b16 %v485
    %v1757 = vunpack.c.l.b16 %v486
    %v1758 = vunpack.c.h.b16 %v486
    %v1759 = vunpack.c.l.b16 %v487
    %v1760 = vunpack.c.h.b16 %v487
    %v1761 = vunpack.c.l.b16 %v488
    %v1762 = vunpack.c.h.b16 %v488
    %v1763 = vunpack.c.l.b16 %v489
    %v1764 = vunpack.c.h.b16 %v489
    %v1765 = vunpack.c.l.b16 %v490
    %v1766 = vunpack.c.h.b16 %v490
    %v1767 = vunpack.c.l.b16 %v491
    %v1768 = vunpack.c.h.b16 %v491
    %v1769 = vunpack.c.l.b16 %v492
    %v1770 = vunpack.c.h.b16 %v492
    %v1771 = vunpack.c.l.b16 %v493
    %v1772 = vunpack.c.h.b16 %v493
    %v1773 = vunpack.c.l.b16 %v494
    %v1774 = vunpack.c.h.b16 %v494
    %v1775 = vunpack.c.l.b16 %v495
    %v1776 = vunpack.c.h.b16 %v495
    %v1777 = vunpack.c.l.b16 %v496
    %v1778 = vunpack.c.h.b16 %v496
    %v1779 = vunpack.c.l.b16 %v497
    %v1780 = vunpack.c.h.b16 %v497
    %v1781 = vunpack.c.l.b16 %v498
    %v1782 = vunpack.c.h.b16 %v498
    %v1783 = vunpack.c.l.b16 %v499
    %v1784 = vunpack.c.h.b16 %v499
    %v1785 = vunpack.c.l.b16 %v500
    %v1786 = vunpack.c.h.b16 %v500
    %v1787 = vunpack.c.l.b16 %v501
    %v1788 = vunpack.c.h.b16 %v501
    %v1789 = vunpack.c.l.b16 %v502
    %v1790 = vunpack.c.h.b16 %v502
    %v1791 = vunpack.c.l.b16 %v503
    %v1792 = vunpack.c.h.b16 %v503
    %v1793 = vunpack.c.l.b16 %v504
    %v1794 = vunpack.c.h.b16 %v504
    %v1795 = vunpack.c.l.b16 %v505
    %v1796 = vunpack.c.h.b16 %v505
    %v1797 = vunpack.c.l.b16 %v506
    %v1798 = vunpack.c.h.b16 %v506
    %v1799 = vunpack.c.l.b16 %v507
    %v1800 = vunpack.c.h.b16 %v507
    %v1801 = vunpack.c.l.b16 %v508
    %v1802 = vunpack.c.h.b16 %v508
    %v1803 = vunpack.c.l.b16 %v509
    %v1804 = vunpack.c.h.b16 %v509
    %v1805 = vunpack.c.l.b16 %v510
    %v1806 = vunpack.c.h.b16 %v510
    %v1807 = vunpack.c.l.b16 %v511
    %v1808 = vunpack.c.h.b16 %v511
    %v1809 = vunpack.c.l.b16 %v512
    %v1810 = vunpack.c.h.b16 %v512
    %v1811 = vunpack.c.l.b16 %v513
    %v1812 = vunpack.c.h.b16 %v513
    %v1813 = vunpack.c.l.b16 %v514
    %v1814 = vunpack.c.h.b16 %v514
    %v1815 = vunpack.c.l.b16 %v515
    %v1816 = vunpack.c.h.b16 %v515
    %v1817 = vunpack.c.l.b16 %v516
    %v1818 = vunpack.c.h.b16 %v516
    %v1819 = vunpack.c.l.b16 %v517
    %v1820 = vunpack.c.h.b16 %v517
    %v1821 = vunpack.c.l.b16 %v518
    %v1822 = vunpack.c.h.b16 %v518
    %v1823 = vunpack.c.l.b16 %v519
    %v1824 = vunpack.c.h.b16 %v519
    %v1825 = vunpack.c.l.b16 %v520
    %v1826 = vunpack.c.h.b16 %v520
    %v1827 = vunpack.c.l.b16 %v521
    %v1828 = vunpack.c.h.b16 %v521
    %v1829 = vunpack.c.l.b16 %v522
    %v1830 = vunpack.c.h.b16 %v522
    %v1831 = vunpack.c.l.b16 %v523
    %v1832 = vunpack.c.h.b16 %v523
    %v1833 = vunpack.c.l.b16 %v524
    %v1834 = vunpack.c.h.b16 %v524
    %v1835 = vunpack.c.l.b16 %v525
    %v1836 = vunpack.c.h.b16 %v525
    %v1837 = vunpack.c.l.b16 %v526
    %v1838 = vunpack.c.h.b16 %v526
    %v1839 = vunpack.c.l.b16 %v527
    %v1840 = vunpack.c.h.b16 %v527
    %v1841 = vunpack.c.l.b16 %v528
    %v1842 = vunpack.c.h.b16 %v528
    %v1843 = vunpack.c.l.b16 %v529
    %v1844 = vunpack.c.h.b16 %v529
    %v1845 = vunpack.c.l.b16 %v530
    %v1846 = vunpack.c.h.b16 %v530
    %v1847 = vunpack.c.l.b16 %v531
    %v1848 = vunpack.c.h.b16 %v531
    %v1849 = vunpack.c.l.b16 %v532
    %v1850 = vunpack.c.h.b16 %v532
    %v1851 = vunpack.c.l.b16 %v533
    %v1852 = vunpack.c.h.b16 %v533
    %v1853 = vunpack.c.l.b16 %v534
    %v1854 = vunpack.c.h.b16 %v534
    %v1855 = vunpack.c.l.b16 %v535
    %v1856 = vunpack.c.h.b16 %v535
    %v1857 = vunpack.c.l.b16 %v536
    %v1858 = vunpack.c.h.b16 %v536
    %v1859 = vunpack.c.l.b16 %v537
    %v1860 = vunpack.c.h.b16 %v537
    %v1861 = vunpack.c.l.b16 %v538
    %v1862 = vunpack.c.h.b16 %v538
    %v1863 = vunpack.c.l.b16 %v539
    %v1864 = vunpack.c.h.b16 %v539
    %v1865 = vunpack.c.l.b16 %v540
    %v1866 = vunpack.c.h.b16 %v540
    %v1867 = vunpack.c.l.b16 %v541
    %v1868 = vunpack.c.h.b16 %v541
    %v1869 = vunpack.c.l.b16 %v542
    %v1870 = vunpack.c.h.b16 %v542
    %v1871 = vunpack.c.l.b16 %v543
    %v1872 = vunpack.c.h.b16 %v543
    %v1873 = vunpack.c.l.b16 %v544
    %v1874 = vunpack.c.h.b16 %v544
    %v1875 = vunpack.c.l.b16 %v545
    %v1876 = vunpack.c.h.b16 %v545
    %v1877 = vunpack.c.l.b16 %v546
    %v1878 = vunpack.c.h.b16 %v546
    %v1879 = vunpack.c.l.b16 %v547
    %v1880 = vunpack.c.h.b16 %v547
    %v1881 = vunpack.c.l.b16 %v548
    %v1882 = vunpack.c.h.b16 %v548
    %v1883 = vunpack.c.l.b16 %v549
    %v1884 = vunpack.c.h.b16 %v549
    %v1885 = vunpack.c.l.b16 %v550
    %v1886 = vunpack.c.h.b16 %v550
    %v1887 = vunpack.c.l.b16 %v551
    %v1888 = vunpack.c.h.b16 %v551
    %v1889 = vunpack.c.l.b16 %v552
    %v1890 = vunpack.c.h.b16 %v552
    %v1891 = vunpack.c.l.b16 %v553
    %v1892 = vunpack.c.h.b16 %v553
    %v1893 = vunpack.c.l.b16 %v554
    %v1894 = vunpack.c.h.b16 %v554
    %v1895 = vunpack.c.l.b16 %v555
    %v1896 = vunpack.c.h.b16 %v555
    %v1897 = vunpack.c.l.b16 %v556
    %v1898 = vunpack.c.h.b16 %v556
    %v1899 = vunpack.c.l.b16 %v557
    %v1900 = vunpack.c.h.b16 %v557
    %v1901 = vunpack.c.l.b16 %v558
    %v1902 = vunpack.c.h.b16 %v558
    %v1903 = vunpack.c.l.b16 %v559
    %v1904 = vunpack.c.h.b16 %v559
    %v1905 = vunpack.c.l.b16 %v560
    %v1906 = vunpack.c.h.b16 %v560
    %v1907 = vunpack.c.l.b16 %v561
    %v1908 = vunpack.c.h.b16 %v561
    %v1909 = vunpack.c.l.b16 %v562
    %v1910 = vunpack.c.h.b16 %v562
    %v1911 = vunpack.c.l.b16 %v563
    %v1912 = vunpack.c.h.b16 %v563
    %v1913 = vunpack.c.l.b16 %v564
    %v1914 = vunpack.c.h.b16 %v564
    %v1915 = vunpack.c.l.b16 %v565
    %v1916 = vunpack.c.h.b16 %v565
    %v1917 = vunpack.c.l.b16 %v566
    %v1918 = vunpack.c.h.b16 %v566
    %v1919 = vunpack.c.l.b16 %v567
    %v1920 = vunpack.c.h.b16 %v567
    %v1921 = vunpack.c.l.b16 %v568
    %v1922 = vunpack.c.h.b16 %v568
    %v1923 = vunpack.c.l.b16 %v569
    %v1924 = vunpack.c.h.b16 %v569
    %v1925 = vunpack.c.l.b16 %v570
    %v1926 = vunpack.c.h.b16 %v570
    %v1927 = vunpack.c.l.b16 %v571
    %v1928 = vunpack.c.h.b16 %v571
    %v1929 = vunpack.c.l.b16 %v572
    %v1930 = vunpack.c.h.b16 %v572
    %v1931 = vunpack.c.l.b16 %v573
    %v1932 = vunpack.c.h.b16 %v573
    %v1933 = vunpack.c.l.b16 %v574
    %v1934 = vunpack.c.h.b16 %v574
    %v1935 = vunpack.c.l.b16 %v575
    %v1936 = vunpack.c.h.b16 %v575
    %v1937 = vunpack.c.l.b16 %v576
    %v1938 = vunpack.c.h.b16 %v576
    %v1939 = vunpack.c.l.b16 %v577
    %v1940 = vunpack.c.h.b16 %v577
    %v1941 = vunpack.c.l.b16 %v578
    %v1942 = vunpack.c.h.b16 %v578
    %v1943 = vunpack.c.l.b16 %v579
    %v1944 = vunpack.c.h.b16 %v579
    %v1945 = vunpack.c.l.b16 %v580
    %v1946 = vunpack.c.h.b16 %v580
    %v1947 = vunpack.c.l.b16 %v581
    %v1948 = vunpack.c.h.b16 %v581
    %v1949 = vunpack.c.l.b16 %v582
    %v1950 = vunpack.c.h.b16 %v582
    %v1951 = vunpack.c.l.b16 %v583
    %v1952 = vunpack.c.h.b16 %v583
    %v1953 = vunpack.c.l.b16 %v584
    %v1954 = vunpack.c.h.b16 %v584
    %v1955 = vunpack.c.l.b16 %v585
    %v1956 = vunpack.c.h.b16 %v585
    %v1957 = vunpack.c.l.b16 %v586
    %v1958 = vunpack.c.h.b16 %v586
    %v1959 = vunpack.c.l.b16 %v587
    %v1960 = vunpack.c.h.b16 %v587
    %v1961 = vunpack.c.l.b16 %v588
    %v1962 = vunpack.c.h.b16 %v588
    %v1963 = vunpack.c.l.b16 %v589
    %v1964 = vunpack.c.h.b16 %v589
    %v1965 = vunpack.c.l.b16 %v590
    %v1966 = vunpack.c.h.b16 %v590
    %v1967 = vunpack.c.l.b16 %v591
    %v1968 = vunpack.c.h.b16 %v591
    %v1969 = vunpack.c.l.b16 %v592
    %v1970 = vunpack.c.h.b16 %v592
    %v1971 = vunpack.c.l.b16 %v593
    %v1972 = vunpack.c.h.b16 %v593
    %v1973 = vunpack.c.l.b16 %v594
    %v1974 = vunpack.c.h.b16 %v594
    %v1975 = vunpack.c.l.b16 %v595
    %v1976 = vunpack.c.h.b16 %v595
    %v1977 = vunpack.c.l.b16 %v596
    %v1978 = vunpack.c.h.b16 %v596
    %v1979 = vunpack.c.l.b16 %v597
    %v1980 = vunpack.c.h.b16 %v597
    %v1981 = vunpack.c.l.b16 %v598
    %v1982 = vunpack.c.h.b16 %v598
    %v1983 = vunpack.c.l.b16 %v599
    %v1984 = vunpack.c.h.b16 %v599
    %v1985 = vunpack.c.l.b16 %v600
    %v1986 = vunpack.c.h.b16 %v600
    %v1987 = vunpack.c.l.b16 %v601
    %v1988 = vunpack.c.h.b16 %v601
    %v1989 = vunpack.c.l.b16 %v602
    %v1990 = vunpack.c.h.b16 %v602
    %v1991 = vunpack.c.l.b16 %v603
    %v1992 = vunpack.c.h.b16 %v603
    %v1993 = vunpack.c.l.b16 %v604
    %v1994 = vunpack.c.h.b16 %v604
    %v1995 = vunpack.c.l.b16 %v605
    %v1996 = vunpack.c.h.b16 %v605
    %v1997 = vunpack.c.l.b16 %v606
    %v1998 = vunpack.c.h.b16 %v606
    %v1999 = vunpack.c.l.b16 %v607
    %v2000 = vunpack.c.h.b16 %v607
    %v2001 = vunpack.c.l.b16 %v608
    %v2002 = vunpack.c.h.b16 %v608
    %v2003 = vunpack.c.l.b16 %v609
    %v2004 = vunpack.c.h.b16 %v609
    %v2005 = vunpack.c.l.b16 %v610
    %v2006 = vunpack.c.h.b16 %v610
    %v2007 = vunpack.c.l.b16 %v611
    %v2008 = vunpack.c.h.b16 %v611
    %v2009 = vunpack.c.l.b16 %v612
    %v2010 = vunpack.c.h.b16 %v612
    %v2011 = vunpack.c.l.b16 %v613
    %v2012 = vunpack.c.h.b16 %v613
    %v2013 = vunpack.c.l.b16 %v614
    %v2014 = vunpack.c.h.b16 %v614
    %v2015 = vunpack.c.l.b16 %v615
    %v2016 = vunpack.c.h.b16 %v615
    %v2017 = vunpack.c.l.b16 %v616
    %v2018 = vunpack.c.h.b16 %v616
    %v2019 = vunpack.c.l.b16 %v617
    %v2020 = vunpack.c.h.b16 %v617
    %v2021 = vunpack.c.l.b16 %v618
    %v2022 = vunpack.c.h.b16 %v618
    %v2023 = vunpack.c.l.b16 %v619
    %v2024 = vunpack.c.h.b16 %v619
    %v2025 = vunpack.c.l.b16 %v620
    %v2026 = vunpack.c.h.b16 %v620
    %v2027 = vunpack.c.l.b16 %v621
    %v2028 = vunpack.c.h.b16 %v621
    %v2029 = vunpack.c.l.b16 %v622
    %v2030 = vunpack.c.h.b16 %v622
    %v2031 = vunpack.c.l.b16 %v623
    %v2032 = vunpack.c.h.b16 %v623
    %v2033 = vunpack.c.l.b16 %v624
    %v2034 = vunpack.c.h.b16 %v624
    %v2035 = vunpack.c.l.b16 %v625
    %v2036 = vunpack.c.h.b16 %v625
    %v2037 = vunpack.c.l.b16 %v626
    %v2038 = vunpack.c.h.b16 %v626
    %v2039 = vunpack.c.l.b16 %v627
    %v2040 = vunpack.c.h.b16 %v627
    %v2041 = vunpack.c.l.b16 %v628
    %v2042 = vunpack.c.h.b16 %v628
    %v2043 = vunpack.c.l.b16 %v629
    %v2044 = vunpack.c.h.b16 %v629
    %v2045 = vunpack.c.l.b16 %v630
    %v2046 = vunpack.c.h.b16 %v630
    %v2047 = vunpack.c.l.b16 %v631
    %v2048 = vunpack.c.h.b16 %v631
    %v2049 = vunpack.c.l.b16 %v632
    %v2050 = vunpack.c.h.b16 %v632
    %v2051 = vunpack.c.l.b16 %v633
    %v2052 = vunpack.c.h.b16 %v633
    %v2053 = vunpack.c.l.b16 %v634
    %v2054 = vunpack.c.h.b16 %v634
    %v2055 = vunpack.c.l.b16 %v635
    %v2056 = vunpack.c.h.b16 %v635
    %v2057 = vunpack.c.l.b16 %v636
    %v2058 = vunpack.c.h.b16 %v636
    %v2059 = vunpack.c.l.b16 %v637
    %v2060 = vunpack.c.h.b16 %v637
    %v2061 = vunpack.c.l.b16 %v638
    %v2062 = vunpack.c.h.b16 %v638
    %v2063 = vunpack.c.l.b16 %v639
    %v2064 = vunpack.c.h.b16 %v639
    %v2065 = vunpack.c.l.b16 %v640
    %v2066 = vunpack.c.h.b16 %v640
    %v2067 = vunpack.c.l.b16 %v641
    %v2068 = vunpack.c.h.b16 %v641
    %v2069 = vunpack.c.l.b16 %v642
    %v2070 = vunpack.c.h.b16 %v642
    %v2071 = vunpack.c.l.b16 %v643
    %v2072 = vunpack.c.h.b16 %v643
    %v2073 = vunpack.c.l.b16 %v644
    %v2074 = vunpack.c.h.b16 %v644
    %v2075 = vunpack.c.l.b16 %v645
    %v2076 = vunpack.c.h.b16 %v645
    %v2077 = vunpack.c.l.b16 %v646
    %v2078 = vunpack.c.h.b16 %v646
    %v2079 = vunpack.c.l.b16 %v647
    %v2080 = vunpack.c.h.b16 %v647
    %v2081 = vunpack.c.l.b16 %v648
    %v2082 = vunpack.c.h.b16 %v648
    %v2083 = vunpack.c.l.b16 %v649
    %v2084 = vunpack.c.h.b16 %v649
    %v2085 = vunpack.c.l.b16 %v650
    %v2086 = vunpack.c.h.b16 %v650
    %v2087 = vunpack.c.l.b16 %v651
    %v2088 = vunpack.c.h.b16 %v651
    %v2089 = vunpack.c.l.b16 %v652
    %v2090 = vunpack.c.h.b16 %v652
    %v2091 = vunpack.c.l.b16 %v653
    %v2092 = vunpack.c.h.b16 %v653
    %v2093 = vunpack.c.l.b16 %v654
    %v2094 = vunpack.c.h.b16 %v654
    %v2095 = vunpack.c.l.b16 %v655
    %v2096 = vunpack.c.h.b16 %v655
    %v2097 = vunpack.c.l.b16 %v656
    %v2098 = vunpack.c.h.b16 %v656
    %v2099 = vunpack.c.l.b16 %v657
    %v2100 = vunpack.c.h.b16 %v657
    %v2101 = vunpack.c.l.b16 %v658
    %v2102 = vunpack.c.h.b16 %v658
    %v2103 = vunpack.c.l.b16 %v659
    %v2104 = vunpack.c.h.b16 %v659
    %v2105 = vunpack.c.l.b16 %v660
    %v2106 = vunpack.c.h.b16 %v660
    %v2107 = vunpack.c.l.b16 %v661
    %v2108 = vunpack.c.h.b16 %v661
    %v2109 = vunpack.c.l.b16 %v662
    %v2110 = vunpack.c.h.b16 %v662
    %v2111 = vunpack.c.l.b16 %v663
    %v2112 = vunpack.c.h.b16 %v663
    %v2113 = vunpack.c.l.b16 %v664
    %v2114 = vunpack.c.h.b16 %v664
    %v2115 = vunpack.c.l.b16 %v665
    %v2116 = vunpack.c.h.b16 %v665
    %v2117 = vunpack.c.l.b16 %v666
    %v2118 = vunpack.c.h.b16 %v666
    %v2119 = vunpack.c.l.b16 %v667
    %v2120 = vunpack.c.h.b16 %v667
    %v2121 = vunpack.c.l.b16 %v668
    %v2122 = vunpack.c.h.b16 %v668
    %v2123 = vunpack.c.l.b16 %v669
    %v2124 = vunpack.c.h.b16 %v669
    %v2125 = vunpack.c.l.b16 %v670
    %v2126 = vunpack.c.h.b16 %v670
    %v2127 = vunpack.c.l.b16 %v671
    %v2128 = vunpack.c.h.b16 %v671
    %v2129 = vunpack.c.l.b16 %v672
    %v2130 = vunpack.c.h.b16 %v672
    %v2131 = vunpack.c.l.b16 %v673
    %v2132 = vunpack.c.h.b16 %v673
    %v2133 = vunpack.c.l.b16 %v674
    %v2134 = vunpack.c.h.b16 %v674
    %v2135 = vunpack.c.l.b16 %v675
    %v2136 = vunpack.c.h.b16 %v675
    %v2137 = vunpack.c.l.b16 %v676
    %v2138 = vunpack.c.h.b16 %v676
    %v2139 = vunpack.c.l.b16 %v677
    %v2140 = vunpack.c.h.b16 %v677
    %v2141 = vunpack.c.l.b16 %v678
    %v2142 = vunpack.c.h.b16 %v678
    %v2143 = vunpack.c.l.b16 %v679
    %v2144 = vunpack.c.h.b16 %v679
    %v2145 = vunpack.c.l.b16 %v680
    %v2146 = vunpack.c.h.b16 %v680
    %v2147 = vunpack.c.l.b16 %v681
    %v2148 = vunpack.c.h.b16 %v681
    %v2149 = vunpack.c.l.b16 %v682
    %v2150 = vunpack.c.h.b16 %v682
    %v2151 = vunpack.c.l.b16 %v683
    %v2152 = vunpack.c.h.b16 %v683
    %v2153 = vunpack.c.l.b16 %v684
    %v2154 = vunpack.c.h.b16 %v684
    %v2155 = vunpack.c.l.b16 %v685
    %v2156 = vunpack.c.h.b16 %v685
    %v2157 = vunpack.c.l.b16 %v686
    %v2158 = vunpack.c.h.b16 %v686
    %v2159 = vunpack.c.l.b16 %v687
    %v2160 = vunpack.c.h.b16 %v687
    %v2161 = vunpack.c.l.b16 %v688
    %v2162 = vunpack.c.h.b16 %v688
    %v2163 = vunpack.c.l.b16 %v689
    %v2164 = vunpack.c.h.b16 %v689
    %v2165 = vunpack.c.l.b16 %v690
    %v2166 = vunpack.c.h.b16 %v690
    %v2167 = vunpack.c.l.b16 %v691
    %v2168 = vunpack.c.h.b16 %v691
    %v2169 = vunpack.c.l.b16 %v692
    %v2170 = vunpack.c.h.b16 %v692
    %v2171 = vunpack.c.l.b16 %v693
    %v2172 = vunpack.c.h.b16 %v693
    %v2173 = vunpack.c.l.b16 %v694
    %v2174 = vunpack.c.h.b16 %v694
    %v2175 = vunpack.c.l.b16 %v695
    %v2176 = vunpack.c.h.b16 %v695
    %v2177 = vunpack.c.l.b16 %v696
    %v2178 = vunpack.c.h.b16 %v696
    %v2179 = vunpack.c.l.b16 %v697
    %v2180 = vunpack.c.h.b16 %v697
    %v2181 = vunpack.c.l.b16 %v698
    %v2182 = vunpack.c.h.b16 %v698
    %v2183 = vunpack.c.l.b16 %v699
    %v2184 = vunpack.c.h.b16 %v699
    %v2185 = vunpack.c.l.b16 %v700
    %v2186 = vunpack.c.h.b16 %v700
    %v2187 = vunpack.c.l.b16 %v701
    %v2188 = vunpack.c.h.b16 %v701
    %v2189 = vunpack.c.l.b16 %v702
    %v2190 = vunpack.c.h.b16 %v702
    %v2191 = vunpack.c.l.b16 %v703
    %v2192 = vunpack.c.h.b16 %v703
    %v2193 = vunpack.c.l.b16 %v704
    %v2194 = vunpack.c.h.b16 %v704
    %v2195 = vunpack.c.l.b16 %v705
    %v2196 = vunpack.c.h.b16 %v705
    %v2197 = vunpack.c.l.b16 %v706
    %v2198 = vunpack.c.h.b16 %v706
    %v2199 = vunpack.c.l.b16 %v707
    %v2200 = vunpack.c.h.b16 %v707
    %v2201 = vunpack.c.l.b16 %v708
    %v2202 = vunpack.c.h.b16 %v708
    %v2203 = vunpack.c.l.b16 %v709
    %v2204 = vunpack.c.h.b16 %v709
    %v2205 = vunpack.c.l.b16 %v710
    %v2206 = vunpack.c.h.b16 %v710
    %v2207 = vunpack.c.l.b16 %v711
    %v2208 = vunpack.c.h.b16 %v711
    %v2209 = vunpack.c.l.b16 %v712
    %v2210 = vunpack.c.h.b16 %v712
    %v2211 = vunpack.c.l.b16 %v713
    %v2212 = vunpack.c.h.b16 %v713
    %v2213 = vunpack.c.l.b16 %v714
    %v2214 = vunpack.c.h.b16 %v714
    %v2215 = vunpack.c.l.b16 %v715
    %v2216 = vunpack.c.h.b16 %v715
    %v2217 = vunpack.c.l.b16 %v716
    %v2218 = vunpack.c.h.b16 %v716
    %v2219 = vunpack.c.l.b16 %v717
    %v2220 = vunpack.c.h.b16 %v717
    %v2221 = vunpack.c.l.b16 %v718
    %v2222 = vunpack.c.h.b16 %v718
    %v2223 = vunpack.c.l.b16 %v719
    %v2224 = vunpack.c.h.b16 %v719
    %v2225 = vunpack.c.l.b16 %v720
    %v2226 = vunpack.c.h.b16 %v720
    %v2227 = vunpack.c.l.b16 %v721
    %v2228 = vunpack.c.h.b16 %v721
    %v2229 = vunpack.c.l.b16 %v722
    %v2230 = vunpack.c.h.b16 %v722
    %v2231 = vunpack.c.l.b16 %v723
    %v2232 = vunpack.c.h.b16 %v723
    %v2233 = vunpack.c.l.b16 %v724
    %v2234 = vunpack.c.h.b16 %v724
    %v2235 = vunpack.c.l.b16 %v725
    %v2236 = vunpack.c.h.b16 %v725
    %v2237 = vunpack.c.l.b16 %v726
    %v2238 = vunpack.c.h.b16 %v726
    %v2239 = vunpack.c.l.b16 %v727
    %v2240 = vunpack.c.h.b16 %v727
    %v2241 = vunpack.c.l.b16 %v728
    %v2242 = vunpack.c.h.b16 %v728
    %v2243 = vunpack.c.l.b16 %v729
    %v2244 = vunpack.c.h.b16 %v729
    %v2245 = vunpack.c.l.b16 %v730
    %v2246 = vunpack.c.h.b16 %v730
    %v2247 = vunpack.c.l.b16 %v731
    %v2248 = vunpack.c.h.b16 %v731
    %v2249 = vunpack.c.l.b16 %v732
    %v2250 = vunpack.c.h.b16 %v732
    %v2251 = vunpack.c.l.b16 %v733
    %v2252 = vunpack.c.h.b16 %v733
    %v2253 = vunpack.c.l.b16 %v734
    %v2254 = vunpack.c.h.b16 %v734
    %v2255 = vunpack.c.l.b16 %v735
    %v2256 = vunpack.c.h.b16 %v735
    %v2257 = vunpack.c.l.b16 %v736
    %v2258 = vunpack.c.h.b16 %v736
    %v2259 = vunpack.c.l.b16 %v737
    %v2260 = vunpack.c.h.b16 %v737
    %v2261 = vunpack.c.l.b16 %v738
    %v2262 = vunpack.c.h.b16 %v738
    %v2263 = vunpack.c.l.b16 %v739
    %v2264 = vunpack.c.h.b16 %v739
    %v2265 = vunpack.c.l.b16 %v740
    %v2266 = vunpack.c.h.b16 %v740
    %v2267 = vunpack.c.l.b16 %v741
    %v2268 = vunpack.c.h.b16 %v741
    %v2269 = vunpack.c.l.b16 %v742
    %v2270 = vunpack.c.h.b16 %v742
    %v2271 = vunpack.c.l.b16 %v743
    %v2272 = vunpack.c.h.b16 %v743
    %v2273 = vunpack.c.l.b16 %v744
    %v2274 = vunpack.c.h.b16 %v744
    %v2275 = vunpack.c.l.b16 %v745
    %v2276 = vunpack.c.h.b16 %v745
    %v2277 = vunpack.c.l.b16 %v746
    %v2278 = vunpack.c.h.b16 %v746
    %v2279 = vunpack.c.l.b16 %v747
    %v2280 = vunpack.c.h.b16 %v747
    %v2281 = vunpack.c.l.b16 %v748
    %v2282 = vunpack.c.h.b16 %v748
    %v2283 = vunpack.c.l.b16 %v749
    %v2284 = vunpack.c.h.b16 %v749
    %v2285 = vunpack.c.l.b16 %v750
    %v2286 = vunpack.c.h.b16 %v750
    %v2287 = vunpack.c.l.b16 %v751
    %v2288 = vunpack.c.h.b16 %v751
    %v2289 = vunpack.c.l.b16 %v752
    %v2290 = vunpack.c.h.b16 %v752
    %v2291 = vunpack.c.l.b16 %v753
    %v2292 = vunpack.c.h.b16 %v753
    %v2293 = vunpack.c.l.b16 %v754
    %v2294 = vunpack.c.h.b16 %v754
    %v2295 = vunpack.c.l.b16 %v755
    %v2296 = vunpack.c.h.b16 %v755
    %v2297 = vunpack.c.l.b16 %v756
    %v2298 = vunpack.c.h.b16 %v756
    %v2299 = vunpack.c.l.b16 %v757
    %v2300 = vunpack.c.h.b16 %v757
    %v2301 = vunpack.c.l.b16 %v758
    %v2302 = vunpack.c.h.b16 %v758
    %v2303 = vunpack.c.l.b16 %v759
    %v2304 = vunpack.c.h.b16 %v759
    %v2305 = vunpack.c.l.b16 %v760
    %v2306 = vunpack.c.h.b16 %v760
    %v2307 = vunpack.c.l.b16 %v761
    %v2308 = vunpack.c.h.b16 %v761
    %v2309 = vunpack.c.l.b16 %v762
    %v2310 = vunpack.c.h.b16 %v762
    %v2311 = vunpack.c.l.b16 %v763
    %v2312 = vunpack.c.h.b16 %v763
    %v2313 = vunpack.c.l.b16 %v764
    %v2314 = vunpack.c.h.b16 %v764
    %v2315 = vunpack.c.l.b16 %v765
    %v2316 = vunpack.c.h.b16 %v765
    %v2317 = vunpack.c.l.b16 %v766
    %v2318 = vunpack.c.h.b16 %v766
    %v2319 = vunpack.c.l.b16 %v767
    %v2320 = vunpack.c.h.b16 %v767
    %v2321 = vunpack.c.l.b16 %v768
    %v2322 = vunpack.c.h.b16 %v768
    %v2323 = vunpack.c.l.b16 %v769
    %v2324 = vunpack.c.h.b16 %v769
    %v2325 = vunpack.c.l.b16 %v770
    %v2326 = vunpack.c.h.b16 %v770
    %v2327 = vunpack.c.l.b16 %v771
    %v2328 = vunpack.c.h.b16 %v771
    %v2329 = vunpack.c.l.b16 %v772
    %v2330 = vunpack.c.h.b16 %v772
    %v2331 = vunpack.c.l.b16 %v773
    %v2332 = vunpack.c.h.b16 %v773
    %v2333 = vunpack.c.l.b16 %v774
    %v2334 = vunpack.c.h.b16 %v774
    %v2335 = vunpack.c.l.b16 %v775
    %v2336 = vunpack.c.h.b16 %v775
    %v2337 = vunpack.c.l.b16 %v776
    %v2338 = vunpack.c.h.b16 %v776
    %v2339 = vunpack.c.l.b16 %v777
    %v2340 = vunpack.c.h.b16 %v777
    %v2341 = vunpack.c.l.b16 %v778
    %v2342 = vunpack.c.h.b16 %v778
    %v2343 = vpack.c.b16 %v1327, %v1319
    %v2344 = vpack.c.b16 %v1328, %v1320
    %v2345 = vpack.c.b16 %v1329, %v1321
    %v2346 = vpack.c.b16 %v1330, %v1322
    %v2347 = vpack.c.b16 %v1331, %v1323
    %v2348 = vpack.c.b16 %v1332, %v1324
    %v2349 = vpack.c.b16 %v1333, %v1325
    %v2350 = vpack.c.b16 %v1334, %v1326
    %v2351 = vpack.c.b16 %v1343, %v1335
    %v2352 = vpack.c.b16 %v1344, %v1336
    %v2353 = vpack.c.b16 %v1345, %v1337
    %v2354 = vpack.c.b16 %v1346, %v1338
    %v2355 = vpack.c.b16 %v1347, %v1339
    %v2356 = vpack.c.b16 %v1348, %v1340
    %v2357 = vpack.c.b16 %v1349, %v1341
    %v2358 = vpack.c.b16 %v1350, %v1342
    %v2359 = vpack.c.b16 %v1359, %v1351
    %v2360 = vpack.c.b16 %v1360, %v1352
    %v2361 = vpack.c.b16 %v1361, %v1353
    %v2362 = vpack.c.b16 %v1362, %v1354
    %v2363 = vpack.c.b16 %v1363, %v1355
    %v2364 = vpack.c.b16 %v1364, %v1356
    %v2365 = vpack.c.b16 %v1365, %v1357
    %v2366 = vpack.c.b16 %v1366, %v1358
    %v2367 = vpack.c.b16 %v1375, %v1367
    %v2368 = vpack.c.b16 %v1376, %v1368
    %v2369 = vpack.c.b16 %v1377, %v1369
    %v2370 = vpack.c.b16 %v1378, %v1370
    %v2371 = vpack.c.b16 %v1379, %v1371
    %v2372 = vpack.c.b16 %v1380, %v1372
    %v2373 = vpack.c.b16 %v1381, %v1373
    %v2374 = vpack.c.b16 %v1382, %v1374
    %v2375 = vpack.c.b16 %v1391, %v1383
    %v2376 = vpack.c.b16 %v1392, %v1384
    %v2377 = vpack.c.b16 %v1393, %v1385
    %v2378 = vpack.c.b16 %v1394, %v1386
    %v2379 = vpack.c.b16 %v1395, %v1387
    %v2380 = vpack.c.b16 %v1396, %v1388
    %v2381 = vpack.c.b16 %v1397, %v1389
    %v2382 = vpack.c.b16 %v1398, %v1390
    %v2383 = vpack.c.b16 %v1407, %v1399
    %v2384 = vpack.c.b16 %v1408, %v1400
    %v2385 = vpack.c.b16 %v1409, %v1401
    %v2386 = vpack.c.b16 %v1410, %v1402
    %v2387 = vpack.c.b16 %v1411, %v1403
    %v2388 = vpack.c.b16 %v1412, %v1404
    %v2389 = vpack.c.b16 %v1413, %v1405
    %v2390 = vpack.c.b16 %v1414, %v1406
    %v2391 = vpack.c.b16 %v1423, %v1415
    %v2392 = vpack.c.b16 %v1424, %v1416
    %v2393 = vpack.c.b16 %v1425, %v1417
    %v2394 = vpack.c.b16 %v1426, %v1418
    %v2395 = vpack.c.b16 %v1427, %v1419
    %v2396 = vpack.c.b16 %v1428, %v1420
    %v2397 = vpack.c.b16 %v1429, %v1421
    %v2398 = vpack.c.b16 %v1430, %v1422
    %v2399 = vpack.c.b16 %v1439, %v1431
    %v2400 = vpack.c.b16 %v1440, %v1432
    %v2401 = vpack.c.b16 %v1441, %v1433
    %v2402 = vpack.c.b16 %v1442, %v1434
    %v2403 = vpack.c.b16 %v1443, %v1435
    %v2404 = vpack.c.b16 %v1444, %v1436
    %v2405 = vpack.c.b16 %v1445, %v1437
    %v2406 = vpack.c.b16 %v1446, %v1438
    %v2407 = vpack.c.b16 %v1455, %v1447
    %v2408 = vpack.c.b16 %v1456, %v1448
    %v2409 = vpack.c.b16 %v1457, %v1449
    %v2410 = vpack.c.b16 %v1458, %v1450
    %v2411 = vpack.c.b16 %v1459, %v1451
    %v2412 = vpack.c.b16 %v1460, %v1452
    %v2413 = vpack.c.b16 %v1461, %v1453
    %v2414 = vpack.c.b16 %v1462, %v1454
    %v2415 = vpack.c.b16 %v1471, %v1463
    %v2416 = vpack.c.b16 %v1472, %v1464
    %v2417 = vpack.c.b16 %v1473, %v1465
    %v2418 = vpack.c.b16 %v1474, %v1466
    %v2419 = vpack.c.b16 %v1475, %v1467
    %v2420 = vpack.c.b16 %v1476, %v1468
    %v2421 = vpack.c.b16 %v1477, %v1469
    %v2422 = vpack.c.b16 %v1478, %v1470
    %v2423 = vpack.c.b16 %v1487, %v1479
    %v2424 = vpack.c.b16 %v1488, %v1480
    %v2425 = vpack.c.b16 %v1489, %v1481
    %v2426 = vpack.c.b16 %v1490, %v1482
    %v2427 = vpack.c.b16 %v1491, %v1483
    %v2428 = vpack.c.b16 %v1492, %v1484
    %v2429 = vpack.c.b16 %v1493, %v1485
    %v2430 = vpack.c.b16 %v1494, %v1486
    %v2431 = vpack.c.b16 %v1503, %v1495
    %v2432 = vpack.c.b16 %v1504, %v1496
    %v2433 = vpack.c.b16 %v1505, %v1497
    %v2434 = vpack.c.b16 %v1506, %v1498
    %v2435 = vpack.c.b16 %v1507, %v1499
    %v2436 = vpack.c.b16 %v1508, %v1500
    %v2437 = vpack.c.b16 %v1509, %v1501
    %v2438 = vpack.c.b16 %v1510, %v1502
    %v2439 = vpack.c.b16 %v1519, %v1511
    %v2440 = vpack.c.b16 %v1520, %v1512
    %v2441 = vpack.c.b16 %v1521, %v1513
    %v2442 = vpack.c.b16 %v1522, %v1514
    %v2443 = vpack.c.b16 %v1523, %v1515
    %v2444 = vpack.c.b16 %v1524, %v1516
    %v2445 = vpack.c.b16 %v1525, %v1517
    %v2446 = vpack.c.b16 %v1526, %v1518
    %v2447 = vpack.c.b16 %v1535, %v1527
    %v2448 = vpack.c.b16 %v1536, %v1528
    %v2449 = vpack.c.b16 %v1537, %v1529
    %v2450 = vpack.c.b16 %v1538, %v1530
    %v2451 = vpack.c.b16 %v1539, %v1531
    %v2452 = vpack.c.b16 %v1540, %v1532
    %v2453 = vpack.c.b16 %v1541, %v1533
    %v2454 = vpack.c.b16 %v1542, %v1534
    %v2455 = vpack.c.b16 %v1551, %v1543
    %v2456 = vpack.c.b16 %v1552, %v1544
    %v2457 = vpack.c.b16 %v1553, %v1545
    %v2458 = vpack.c.b16 %v1554, %v1546
    %v2459 = vpack.c.b16 %v1555, %v1547
    %v2460 = vpack.c.b16 %v1556, %v1548
    %v2461 = vpack.c.b16 %v1557, %v1549
    %v2462 = vpack.c.b16 %v1558, %v1550
    %v2463 = vpack.c.b16 %v1567, %v1559
    %v2464 = vpack.c.b16 %v1568, %v1560
    %v2465 = vpack.c.b16 %v1569, %v1561
    %v2466 = vpack.c.b16 %v1570, %v1562
    %v2467 = vpack.c.b16 %v1571, %v1563
    %v2468 = vpack.c.b16 %v1572, %v1564
    %v2469 = vpack.c.b16 %v1573, %v1565
    %v2470 = vpack.c.b16 %v1574, %v1566
    %v2471 = vpack.c.b16 %v1583, %v1575
    %v2472 = vpack.c.b16 %v1584, %v1576
    %v2473 = vpack.c.b16 %v1585, %v1577
    %v2474 = vpack.c.b16 %v1586, %v1578
    %v2475 = vpack.c.b16 %v1587, %v1579
    %v2476 = vpack.c.b16 %v1588, %v1580
    %v2477 = vpack.c.b16 %v1589, %v1581
    %v2478 = vpack.c.b16 %v1590, %v1582
    %v2479 = vpack.c.b16 %v1599, %v1591
    %v2480 = vpack.c.b16 %v1600, %v1592
    %v2481 = vpack.c.b16 %v1601, %v1593
    %v2482 = vpack.c.b16 %v1602, %v1594
    %v2483 = vpack.c.b16 %v1603, %v1595
    %v2484 = vpack.c.b16 %v1604, %v1596
    %v2485 = vpack.c.b16 %v1605, %v1597
    %v2486 = vpack.c.b16 %v1606, %v1598
    %v2487 = vpack.c.b16 %v1615, %v1607
    %v2488 = vpack.c.b16 %v1616, %v1608
    %v2489 = vpack.c.b16 %v1617, %v1609
    %v2490 = vpack.c.b16 %v1618, %v1610
    %v2491 = vpack.c.b16 %v1619, %v1611
    %v2492 = vpack.c.b16 %v1620, %v1612
    %v2493 = vpack.c.b16 %v1621, %v1613
    %v2494 = vpack.c.b16 %v1622, %v1614
    %v2495 = vpack.c.b16 %v1631, %v1623
    %v2496 = vpack.c.b16 %v1632, %v1624
    %v2497 = vpack.c.b16 %v1633, %v1625
    %v2498 = vpack.c.b16 %v1634, %v1626
    %v2499 = vpack.c.b16 %v1635, %v1627
    %v2500 = vpack.c.b16 %v1636, %v1628
    %v2501 = vpack.c.b16 %v1637, %v1629
    %v2502 = vpack.c.b16 %v1638, %v1630
    %v2503 = vpack.c.b16 %v1647, %v1639
    %v2504 = vpack.c.b16 %v1648, %v1640
    %v2505 = vpack.c.b16 %v1649, %v1641
    %v2506 = vpack.c.b16 %v1650, %v1642
    %v2507 = vpack.c.b16 %v1651, %v1643
    %v2508 = vpack.c.b16 %v1652, %v1644
    %v2509 = vpack.c.b16 %v1653, %v1645
    %v2510 = vpack.c.b16 %v1654, %v1646
    %v2511 = vpack.c.b16 %v1663, %v1655
    %v2512 = vpack.c.b16 %v1664, %v1656
    %v2513 = vpack.c.b16 %v1665, %v1657
    %v2514 = vpack.c.b16 %v1666, %v1658
    %v2515 = vpack.c.b16 %v1667, %v1659
    %v2516 = vpack.c.b16 %v1668, %v1660
    %v2517 = vpack.c.b16 %v1669, %v1661
    %v2518 = vpack.c.b16 %v1670, %v1662
    %v2519 = vpack.c.b16 %v1679, %v1671
    %v2520 = vpack.c.b16 %v1680, %v1672
    %v2521 = vpack.c.b16 %v1681, %v1673
    %v2522 = vpack.c.b16 %v1682, %v1674
    %v2523 = vpack.c.b16 %v1683, %v1675
    %v2524 = vpack.c.b16 %v1684, %v1676
    %v2525 = vpack.c.b16 %v1685, %v1677
    %v2526 = vpack.c.b16 %v1686, %v1678
    %v2527 = vpack.c.b16 %v1695, %v1687
    %v2528 = vpack.c.b16 %v1696, %v1688
    %v2529 = vpack.c.b16 %v1697, %v1689
    %v2530 = vpack.c.b16 %v1698, %v1690
    %v2531 = vpack.c.b16 %v1699, %v1691
    %v2532 = vpack.c.b16 %v1700, %v1692
    %v2533 = vpack.c.b16 %v1701, %v1693
    %v2534 = vpack.c.b16 %v1702, %v1694
    %v2535 = vpack.c.b16 %v1711, %v1703
    %v2536 = vpack.c.b16 %v1712, %v1704
    %v2537 = vpack.c.b16 %v1713, %v1705
    %v2538 = vpack.c.b16 %v1714, %v1706
    %v2539 = vpack.c.b16 %v1715, %v1707
    %v2540 = vpack.c.b16 %v1716, %v1708
    %v2541 = vpack.c.b16 %v1717, %v1709
    %v2542 = vpack.c.b16 %v1718, %v1710
    %v2543 = vpack.c.b16 %v1727, %v1719
    %v2544 = vpack.c.b16 %v1728, %v1720
    %v2545 = vpack.c.b16 %v1729, %v1721
    %v2546 = vpack.c.b16 %v1730, %v1722
    %v2547 = vpack.c.b16 %v1731, %v1723
    %v2548 = vpack.c.b16 %v1732, %v1724
    %v2549 = vpack.c.b16 %v1733, %v1725
    %v2550 = vpack.c.b16 %v1734, %v1726
    %v2551 = vpack.c.b16 %v1743, %v1735
    %v2552 = vpack.c.b16 %v1744, %v1736
    %v2553 = vpack.c.b16 %v1745, %v1737
    %v2554 = vpack.c.b16 %v1746, %v1738
    %v2555 = vpack.c.b16 %v1747, %v1739
    %v2556 = vpack.c.b16 %v1748, %v1740
    %v2557 = vpack.c.b16 %v1749, %v1741
    %v2558 = vpack.c.b16 %v1750, %v1742
    %v2559 = vpack.c.b16 %v1759, %v1751
    %v2560 = vpack.c.b16 %v1760, %v1752
    %v2561 = vpack.c.b16 %v1761, %v1753
    %v2562 = vpack.c.b16 %v1762, %v1754
    %v2563 = vpack.c.b16 %v1763, %v1755
    %v2564 = vpack.c.b16 %v1764, %v1756
    %v2565 = vpack.c.b16 %v1765, %v1757
    %v2566 = vpack.c.b16 %v1766, %v1758
    %v2567 = vpack.c.b16 %v1775, %v1767
    %v2568 = vpack.c.b16 %v1776, %v1768
    %v2569 = vpack.c.b16 %v1777, %v1769
    %v2570 = vpack.c.b16 %v1778, %v1770
    %v2571 = vpack.c.b16 %v1779, %v1771
    %v2572 = vpack.c.b16 %v1780, %v1772
    %v2573 = vpack.c.b16 %v1781, %v1773
    %v2574 = vpack.c.b16 %v1782, %v1774
    %v2575 = vpack.c.b16 %v1791, %v1783
    %v2576 = vpack.c.b16 %v1792, %v1784
    %v2577 = vpack.c.b16 %v1793, %v1785
    %v2578 = vpack.c.b16 %v1794, %v1786
    %v2579 = vpack.c.b16 %v1795, %v1787
    %v2580 = vpack.c.b16 %v1796, %v1788
    %v2581 = vpack.c.b16 %v1797, %v1789
    %v2582 = vpack.c.b16 %v1798, %v1790
    %v2583 = vpack.c.b16 %v1807, %v1799
    %v2584 = vpack.c.b16 %v1808, %v1800
    %v2585 = vpack.c.b16 %v1809, %v1801
    %v2586 = vpack.c.b16 %v1810, %v1802
    %v2587 = vpack.c.b16 %v1811, %v1803
    %v2588 = vpack.c.b16 %v1812, %v1804
    %v2589 = vpack.c.b16 %v1813, %v1805
    %v2590 = vpack.c.b16 %v1814, %v1806
    %v2591 = vpack.c.b16 %v1823, %v1815
    %v2592 = vpack.c.b16 %v1824, %v1816
    %v2593 = vpack.c.b16 %v1825, %v1817
    %v2594 = vpack.c.b16 %v1826, %v1818
    %v2595 = vpack.c.b16 %v1827, %v1819
    %v2596 = vpack.c.b16 %v1828, %v1820
    %v2597 = vpack.c.b16 %v1829, %v1821
    %v2598 = vpack.c.b16 %v1830, %v1822
    %v2599 = vpack.c.b16 %v1839, %v1831
    %v2600 = vpack.c.b16 %v1840, %v1832
    %v2601 = vpack.c.b16 %v1841, %v1833
    %v2602 = vpack.c.b16 %v1842, %v1834
    %v2603 = vpack.c.b16 %v1843, %v1835
    %v2604 = vpack.c.b16 %v1844, %v1836
    %v2605 = vpack.c.b16 %v1845, %v1837
    %v2606 = vpack.c.b16 %v1846, %v1838
    %v2607 = vpack.c.b16 %v1855, %v1847
    %v2608 = vpack.c.b16 %v1856, %v1848
    %v2609 = vpack.c.b16 %v1857, %v1849
    %v2610 = vpack.c.b16 %v1858, %v1850
    %v2611 = vpack.c.b16 %v1859, %v1851
    %v2612 = vpack.c.b16 %v1860, %v1852
    %v2613 = vpack.c.b16 %v1861, %v1853
    %v2614 = vpack.c.b16 %v1862, %v1854
    %v2615 = vpack.c.b16 %v1871, %v1863
    %v2616 = vpack.c.b16 %v1872, %v1864
    %v2617 = vpack.c.b16 %v1873, %v1865
    %v2618 = vpack.c.b16 %v1874, %v1866
    %v2619 = vpack.c.b16 %v1875, %v1867
    %v2620 = vpack.c.b16 %v1876, %v1868
    %v2621 = vpack.c.b16 %v1877, %v1869
    %v2622 = vpack.c.b16 %v1878, %v1870
    %v2623 = vpack.c.b16 %v1887, %v1879
    %v2624 = vpack.c.b16 %v1888, %v1880
    %v2625 = vpack.c.b16 %v1889, %v1881
    %v2626 = vpack.c.b16 %v1890, %v1882
    %v2627 = vpack.c.b16 %v1891, %v1883
    %v2628 = vpack.c.b16 %v1892, %v1884
    %v2629 = vpack.c.b16 %v1893, %v1885
    %v2630 = vpack.c.b16 %v1894, %v1886
    %v2631 = vpack.c.b16 %v1903, %v1895
    %v2632 = vpack.c.b16 %v1904, %v1896
    %v2633 = vpack.c.b16 %v1905, %v1897
    %v2634 = vpack.c.b16 %v1906, %v1898
    %v2635 = vpack.c.b16 %v1907, %v1899
    %v2636 = vpack.c.b16 %v1908, %v1900
    %v2637 = vpack.c.b16 %v1909, %v1901
    %v2638 = vpack.c.b16 %v1910, %v1902
    %v2639 = vpack.c.b16 %v1919, %v1911
    %v2640 = vpack.c.b16 %v1920, %v1912
    %v2641 = vpack.c.b16 %v1921, %v1913
    %v2642 = vpack.c.b16 %v1922, %v1914
    %v2643 = vpack.c.b16 %v1923, %v1915
    %v2644 = vpack.c.b16 %v1924, %v1916
    %v2645 = vpack.c.b16 %v1925, %v1917
    %v2646 = vpack.c.b16 %v1926, %v1918
    %v2647 = vpack.c.b16 %v1935, %v1927
    %v2648 = vpack.c.b16 %v1936, %v1928
    %v2649 = vpack.c.b16 %v1937, %v1929
    %v2650 = vpack.c.b16 %v1938, %v1930
    %v2651 = vpack.c.b16 %v1939, %v1931
    %v2652 = vpack.c.b16 %v1940, %v1932
    %v2653 = vpack.c.b16 %v1941, %v1933
    %v2654 = vpack.c.b16 %v1942, %v1934
    %v2655 = vpack.c.b16 %v1951, %v1943
    %v2656 = vpack.c.b16 %v1952, %v1944
    %v2657 = vpack.c.b16 %v1953, %v1945
    %v2658 = vpack.c.b16 %v1954, %v1946
    %v2659 = vpack.c.b16 %v1955, %v1947
    %v2660 = vpack.c.b16 %v1956, %v1948
    %v2661 = vpack.c.b16 %v1957, %v1949
    %v2662 = vpack.c.b16 %v1958, %v1950
    %v2663 = vpack.c.b16 %v1967, %v1959
    %v2664 = vpack.c.b16 %v1968, %v1960
    %v2665 = vpack.c.b16 %v1969, %v1961
    %v2666 = vpack.c.b16 %v1970, %v1962
    %v2667 = vpack.c.b16 %v1971, %v1963
    %v2668 = vpack.c.b16 %v1972, %v1964
    %v2669 = vpack.c.b16 %v1973, %v1965
    %v2670 = vpack.c.b16 %v1974, %v1966
    %v2671 = vpack.c.b16 %v1983, %v1975
    %v2672 = vpack.c.b16 %v1984, %v1976
    %v2673 = vpack.c.b16 %v1985, %v1977
    %v2674 = vpack.c.b16 %v1986, %v1978
    %v2675 = vpack.c.b16 %v1987, %v1979
    %v2676 = vpack.c.b16 %v1988, %v1980
    %v2677 = vpack.c.b16 %v1989, %v1981
    %v2678 = vpack.c.b16 %v1990, %v1982
    %v2679 = vpack.c.b16 %v1999, %v1991
    %v2680 = vpack.c.b16 %v2000, %v1992
    %v2681 = vpack.c.b16 %v2001, %v1993
    %v2682 = vpack.c.b16 %v2002, %v1994
    %v2683 = vpack.c.b16 %v2003, %v1995
    %v2684 = vpack.c.b16 %v2004, %v1996
    %v2685 = vpack.c.b16 %v2005, %v1997
    %v2686 = vpack.c.b16 %v2006, %v1998
    %v2687 = vpack.c.b16 %v2015, %v2007
    %v2688 = vpack.c.b16 %v2016, %v2008
    %v2689 = vpack.c.b16 %v2017, %v2009
    %v2690 = vpack.c.b16 %v2018, %v2010
    %v2691 = vpack.c.b16 %v2019, %v2011
    %v2692 = vpack.c.b16 %v2020, %v2012
    %v2693 = vpack.c.b16 %v2021, %v2013
    %v2694 = vpack.c.b16 %v2022, %v2014
    %v2695 = vpack.c.b16 %v2031, %v2023
    %v2696 = vpack.c.b16 %v2032, %v2024
    %v2697 = vpack.c.b16 %v2033, %v2025
    %v2698 = vpack.c.b16 %v2034, %v2026
    %v2699 = vpack.c.b16 %v2035, %v2027
    %v2700 = vpack.c.b16 %v2036, %v2028
    %v2701 = vpack.c.b16 %v2037, %v2029
    %v2702 = vpack.c.b16 %v2038, %v2030
    %v2703 = vpack.c.b16 %v2047, %v2039
    %v2704 = vpack.c.b16 %v2048, %v2040
    %v2705 = vpack.c.b16 %v2049, %v2041
    %v2706 = vpack.c.b16 %v2050, %v2042
    %v2707 = vpack.c.b16 %v2051, %v2043
    %v2708 = vpack.c.b16 %v2052, %v2044
    %v2709 = vpack.c.b16 %v2053, %v2045
    %v2710 = vpack.c.b16 %v2054, %v2046
    %v2711 = vpack.c.b16 %v2063, %v2055
    %v2712 = vpack.c.b16 %v2064, %v2056
    %v2713 = vpack.c.b16 %v2065, %v2057
    %v2714 = vpack.c.b16 %v2066, %v2058
    %v2715 = vpack.c.b16 %v2067, %v2059
    %v2716 = vpack.c.b16 %v2068, %v2060
    %v2717 = vpack.c.b16 %v2069, %v2061
    %v2718 = vpack.c.b16 %v2070, %v2062
    %v2719 = vpack.c.b16 %v2079, %v2071
    %v2720 = vpack.c.b16 %v2080, %v2072
    %v2721 = vpack.c.b16 %v2081, %v2073
    %v2722 = vpack.c.b16 %v2082, %v2074
    %v2723 = vpack.c.b16 %v2083, %v2075
    %v2724 = vpack.c.b16 %v2084, %v2076
    %v2725 = vpack.c.b16 %v2085, %v2077
    %v2726 = vpack.c.b16 %v2086, %v2078
    %v2727 = vpack.c.b16 %v2095, %v2087
    %v2728 = vpack.c.b16 %v2096, %v2088
    %v2729 = vpack.c.b16 %v2097, %v2089
    %v2730 = vpack.c.b16 %v2098, %v2090
    %v2731 = vpack.c.b16 %v2099, %v2091
    %v2732 = vpack.c.b16 %v2100, %v2092
    %v2733 = vpack.c.b16 %v2101, %v2093
    %v2734 = vpack.c.b16 %v2102, %v2094
    %v2735 = vpack.c.b16 %v2111, %v2103
    %v2736 = vpack.c.b16 %v2112, %v2104
    %v2737 = vpack.c.b16 %v2113, %v2105
    %v2738 = vpack.c.b16 %v2114, %v2106
    %v2739 = vpack.c.b16 %v2115, %v2107
    %v2740 = vpack.c.b16 %v2116, %v2108
    %v2741 = vpack.c.b16 %v2117, %v2109
    %v2742 = vpack.c.b16 %v2118, %v2110
    %v2743 = vpack.c.b16 %v2127, %v2119
    %v2744 = vpack.c.b16 %v2128, %v2120
    %v2745 = vpack.c.b16 %v2129, %v2121
    %v2746 = vpack.c.b16 %v2130, %v2122
    %v2747 = vpack.c.b16 %v2131, %v2123
    %v2748 = vpack.c.b16 %v2132, %v2124
    %v2749 = vpack.c.b16 %v2133, %v2125
    %v2750 = vpack.c.b16 %v2134, %v2126
    %v2751 = vpack.c.b16 %v2143, %v2135
    %v2752 = vpack.c.b16 %v2144, %v2136
    %v2753 = vpack.c.b16 %v2145, %v2137
    %v2754 = vpack.c.b16 %v2146, %v2138
    %v2755 = vpack.c.b16 %v2147, %v2139
    %v2756 = vpack.c.b16 %v2148, %v2140
    %v2757 = vpack.c.b16 %v2149, %v2141
    %v2758 = vpack.c.b16 %v2150, %v2142
    %v2759 = vpack.c.b16 %v2159, %v2151
    %v2760 = vpack.c.b16 %v2160, %v2152
    %v2761 = vpack.c.b16 %v2161, %v2153
    %v2762 = vpack.c.b16 %v2162, %v2154
    %v2763 = vpack.c.b16 %v2163, %v2155
    %v2764 = vpack.c.b16 %v2164, %v2156
    %v2765 = vpack.c.b16 %v2165, %v2157
    %v2766 = vpack.c.b16 %v2166, %v2158
    %v2767 = vpack.c.b16 %v2175, %v2167
    %v2768 = vpack.c.b16 %v2176, %v2168
    %v2769 = vpack.c.b16 %v2177, %v2169
    %v2770 = vpack.c.b16 %v2178, %v2170
    %v2771 = vpack.c.b16 %v2179, %v2171
    %v2772 = vpack.c.b16 %v2180, %v2172
    %v2773 = vpack.c.b16 %v2181, %v2173
    %v2774 = vpack.c.b16 %v2182, %v2174
    %v2775 = vpack.c.b16 %v2191, %v2183
    %v2776 = vpack.c.b16 %v2192, %v2184
    %v2777 = vpack.c.b16 %v2193, %v2185
    %v2778 = vpack.c.b16 %v2194, %v2186
    %v2779 = vpack.c.b16 %v2195, %v2187
    %v2780 = vpack.c.b16 %v2196, %v2188
    %v2781 = vpack.c.b16 %v2197, %v2189
    %v2782 = vpack.c.b16 %v2198, %v2190
    %v2783 = vpack.c.b16 %v2207, %v2199
    %v2784 = vpack.c.b16 %v2208, %v2200
    %v2785 = vpack.c.b16 %v2209, %v2201
    %v2786 = vpack.c.b16 %v2210, %v2202
    %v2787 = vpack.c.b16 %v2211, %v2203
    %v2788 = vpack.c.b16 %v2212, %v2204
    %v2789 = vpack.c.b16 %v2213, %v2205
    %v2790 = vpack.c.b16 %v2214, %v2206
    %v2791 = vpack.c.b16 %v2223, %v2215
    %v2792 = vpack.c.b16 %v2224, %v2216
    %v2793 = vpack.c.b16 %v2225, %v2217
    %v2794 = vpack.c.b16 %v2226, %v2218
    %v2795 = vpack.c.b16 %v2227, %v2219
    %v2796 = vpack.c.b16 %v2228, %v2220
    %v2797 = vpack.c.b16 %v2229, %v2221
    %v2798 = vpack.c.b16 %v2230, %v2222
    %v2799 = vpack.c.b16 %v2239, %v2231
    %v2800 = vpack.c.b16 %v2240, %v2232
    %v2801 = vpack.c.b16 %v2241, %v2233
    %v2802 = vpack.c.b16 %v2242, %v2234
    %v2803 = vpack.c.b16 %v2243, %v2235
    %v2804 = vpack.c.b16 %v2244, %v2236
    %v2805 = vpack.c.b16 %v2245, %v2237
    %v2806 = vpack.c.b16 %v2246, %v2238
    %v2807 = vpack.c.b16 %v2255, %v2247
    %v2808 = vpack.c.b16 %v2256, %v2248
    %v2809 = vpack.c.b16 %v2257, %v2249
    %v2810 = vpack.c.b16 %v2258, %v2250
    %v2811 = vpack.c.b16 %v2259, %v2251
    %v2812 = vpack.c.b16 %v2260, %v2252
    %v2813 = vpack.c.b16 %v2261, %v2253
    %v2814 = vpack.c.b16 %v2262, %v2254
    %v2815 = vpack.c.b16 %v2271, %v2263
    %v2816 = vpack.c.b16 %v2272, %v2264
    %v2817 = vpack.c.b16 %v2273, %v2265
    %v2818 = vpack.c.b16 %v2274, %v2266
    %v2819 = vpack.c.b16 %v2275, %v2267
    %v2820 = vpack.c.b16 %v2276, %v2268
    %v2821 = vpack.c.b16 %v2277, %v2269
    %v2822 = vpack.c.b16 %v2278, %v2270
    %v2823 = vpack.c.b16 %v2287, %v2279
    %v2824 = vpack.c.b16 %v2288, %v2280
    %v2825 = vpack.c.b16 %v2289, %v2281
    %v2826 = vpack.c.b16 %v2290, %v2282
    %v2827 = vpack.c.b16 %v2291, %v2283
    %v2828 = vpack.c.b16 %v2292, %v2284
    %v2829 = vpack.c.b16 %v2293, %v2285
    %v2830 = vpack.c.b16 %v2294, %v2286
    %v2831 = vpack.c.b16 %v2303, %v2295
    %v2832 = vpack.c.b16 %v2304, %v2296
    %v2833 = vpack.c.b16 %v2305, %v2297
    %v2834 = vpack.c.b16 %v2306, %v2298
    %v2835 = vpack.c.b16 %v2307, %v2299
    %v2836 = vpack.c.b16 %v2308, %v2300
    %v2837 = vpack.c.b16 %v2309, %v2301
    %v2838 = vpack.c.b16 %v2310, %v2302
    %v2839 = vpack.c.b16 %v2319, %v2311
    %v2840 = vpack.c.b16 %v2320, %v2312
    %v2841 = vpack.c.b16 %v2321, %v2313
    %v2842 = vpack.c.b16 %v2322, %v2314
    %v2843 = vpack.c.b16 %v2323, %v2315
    %v2844 = vpack.c.b16 %v2324, %v2316
    %v2845 = vpack.c.b16 %v2325, %v2317
    %v2846 = vpack.c.b16 %v2326, %v2318
    %v2847 = vpack.c.b16 %v2335, %v2327
    %v2848 = vpack.c.b16 %v2336, %v2328
    %v2849 = vpack.c.b16 %v2337, %v2329
    %v2850 = vpack.c.b16 %v2338, %v2330
    %v2851 = vpack.c.b16 %v2339, %v2331
    %v2852 = vpack.c.b16 %v2340, %v2332
    %v2853 = vpack.c.b16 %v2341, %v2333
    %v2854 = vpack.c.b16 %v2342, %v2334
    %3367 = vmatprep.subr.bf16.mxu0 %v2344
    %3368 = vmatpush1.bf16.msra.mxu0 %v2343
    %3369 = vmatprep.subr.bf16.mxu0 %v2352
    %3370 = vmatpush1.bf16.msra.mxu0 %v2351
    %3371 = vmatprep.subr.bf16.mxu0 %v2360
    %3372 = vmatpush1.bf16.msra.mxu0 %v2359
    %3373 = vmatprep.subr.bf16.mxu0 %v2368
    %3374 = vmatpush1.bf16.msra.mxu0 %v2367
    %3375 = vmatprep.subr.bf16.mxu0 %v2376
    %3376 = vmatpush1.bf16.msra.mxu0 %v2375
    %3377 = vmatprep.subr.bf16.mxu0 %v2384
    %3378 = vmatpush1.bf16.msra.mxu0 %v2383
    %3379 = vmatprep.subr.bf16.mxu0 %v2392
    %3380 = vmatpush1.bf16.msra.mxu0 %v2391
    %3381 = vmatprep.subr.bf16.mxu0 %v2400
    %3382 = vmatpush1.bf16.msra.mxu0 %v2399
    %3383 = vmatprep.subr.bf16.mxu0 %v2408
    %3384 = vmatpush1.bf16.msra.mxu0 %v2407
    %3385 = vmatprep.subr.bf16.mxu0 %v2416
    %3386 = vmatpush1.bf16.msra.mxu0 %v2415
    %3387 = vmatprep.subr.bf16.mxu0 %v2424
    %3388 = vmatpush1.bf16.msra.mxu0 %v2423
    %3389 = vmatprep.subr.bf16.mxu0 %v2432
    %3390 = vmatpush1.bf16.msra.mxu0 %v2431
    %3391 = vmatprep.subr.bf16.mxu0 %v2440
    %3392 = vmatpush1.bf16.msra.mxu0 %v2439
    %3393 = vmatprep.subr.bf16.mxu0 %v2448
    %3394 = vmatpush1.bf16.msra.mxu0 %v2447
    %3395 = vmatprep.subr.bf16.mxu0 %v2456
    %3396 = vmatpush1.bf16.msra.mxu0 %v2455
    %3397 = vmatprep.subr.bf16.mxu0 %v2464
    %3398 = vmatpush1.bf16.msra.mxu0 %v2463
    %3399 = vmatprep.mubr.bf16.mxu0 %v792
    %3400 = vmatmul.mubr.bf16.gmra.mrb[0].mxu0 %v791
    %v3401 = vpop.f32.mrb[0].mxu0
    %v3402 = vadd.f32 0.0, %v3401
    %v3403 = vpop.f32.mrb[0].mxu0
    %v3404 = vadd.f32 0.0, %v3403
    %v3405 = vpop.f32.mrb[0].mxu0
    %v3406 = vpop.f32.mrb[0].mxu0
    %3407 = vdwg.mxu0
    %3408 = vmatprep.subr.bf16.mxu0 %v2472
    %3409 = vmatpush1.bf16.msra.mxu0 %v2471
    %3410 = vmatprep.subr.bf16.mxu0 %v2480
    %3411 = vmatpush1.bf16.msra.mxu0 %v2479
    %3412 = vmatprep.subr.bf16.mxu0 %v2488
    %3413 = vmatpush1.bf16.msra.mxu0 %v2487
    %3414 = vmatprep.subr.bf16.mxu0 %v2496
    %3415 = vmatpush1.bf16.msra.mxu0 %v2495
    %3416 = vmatprep.subr.bf16.mxu0 %v2504
    %3417 = vmatpush1.bf16.msra.mxu0 %v2503
    %3418 = vmatprep.subr.bf16.mxu0 %v2512
    %3419 = vmatpush1.bf16.msra.mxu0 %v2511
    %3420 = vmatprep.subr.bf16.mxu0 %v2520
    %3421 = vmatpush1.bf16.msra.mxu0 %v2519
    %3422 = vmatprep.subr.bf16.mxu0 %v2528
    %3423 = vmatpush1.bf16.msra.mxu0 %v2527
    %3424 = vmatprep.subr.bf16.mxu0 %v2536
    %3425 = vmatpush1.bf16.msra.mxu0 %v2535
    %3426 = vmatprep.subr.bf16.mxu0 %v2544
    %3427 = vmatpush1.bf16.msra.mxu0 %v2543
    %3428 = vmatprep.subr.bf16.mxu0 %v2552
    %3429 = vmatpush1.bf16.msra.mxu0 %v2551
    %3430 = vmatprep.subr.bf16.mxu0 %v2560
    %3431 = vmatpush1.bf16.msra.mxu0 %v2559
    %3432 = vmatprep.subr.bf16.mxu0 %v2568
    %3433 = vmatpush1.bf16.msra.mxu0 %v2567
    %3434 = vmatprep.subr.bf16.mxu0 %v2576
    %3435 = vmatpush1.bf16.msra.mxu0 %v2575
    %3436 = vmatprep.subr.bf16.mxu0 %v2584
    %3437 = vmatpush1.bf16.msra.mxu0 %v2583
    %3438 = vmatprep.subr.bf16.mxu0 %v2592
    %3439 = vmatpush1.bf16.msra.mxu0 %v2591
    %3440 = vmatprep.mubr.bf16.mxu0 %v794
    %3441 = vmatmul.mubr.bf16.gmra.mrb[0].mxu0 %v793
    %v3442 = vpop.f32.mrb[0].mxu0
    %v3443 = vadd.f32 %v3402, %v3442
    %v3444 = vpop.f32.mrb[0].mxu0
    %v3445 = vadd.f32 %v3404, %v3444
    %v3446 = vpop.f32.mrb[0].mxu0
    %v3447 = vpop.f32.mrb[0].mxu0
    %3448 = vdwg.mxu0
    %3449 = vmatprep.subr.bf16.mxu0 %v2600
    %3450 = vmatpush1.bf16.msra.mxu0 %v2599
    %3451 = vmatprep.subr.bf16.mxu0 %v2608
    %3452 = vmatpush1.bf16.msra.mxu0 %v2607
    %3453 = vmatprep.subr.bf16.mxu0 %v2616
    %3454 = vmatpush1.bf16.msra.mxu0 %v2615
    %3455 = vmatprep.subr.bf16.mxu0 %v2624
    %3456 = vmatpush1.bf16.msra.mxu0 %v2623
    %3457 = vmatprep.subr.bf16.mxu0 %v2632
    %3458 = vmatpush1.bf16.msra.mxu0 %v2631
    %3459 = vmatprep.subr.bf16.mxu0 %v2640
    %3460 = vmatpush1.bf16.msra.mxu0 %v2639
    %3461 = vmatprep.subr.bf16.mxu0 %v2648
    %3462 = vmatpush1.bf16.msra.mxu0 %v2647
    %3463 = vmatprep.subr.bf16.mxu0 %v2656
    %3464 = vmatpush1.bf16.msra.mxu0 %v2655
    %3465 = vmatprep.subr.bf16.mxu0 %v2664
    %3466 = vmatpush1.bf16.msra.mxu0 %v2663
    %3467 = vmatprep.subr.bf16.mxu0 %v2672
    %3468 = vmatpush1.bf16.msra.mxu0 %v2671
    %3469 = vmatprep.subr.bf16.mxu0 %v2680
    %3470 = vmatpush1.bf16.msra.mxu0 %v2679
    %3471 = vmatprep.subr.bf16.mxu0 %v2688
    %3472 = vmatpush1.bf16.msra.mxu0 %v2687
    %3473 = vmatprep.subr.bf16.mxu0 %v2696
    %3474 = vmatpush1.bf16.msra.mxu0 %v2695
    %3475 = vmatprep.subr.bf16.mxu0 %v2704
    %3476 = vmatpush1.bf16.msra.mxu0 %v2703
    %3477 = vmatprep.subr.bf16.mxu0 %v2712
    %3478 = vmatpush1.bf16.msra.mxu0 %v2711
    %3479 = vmatprep.subr.bf16.mxu0 %v2720
    %3480 = vmatpush1.bf16.msra.mxu0 %v2719
    %3481 = vmatprep.mubr.bf16.mxu0 %v796
    %3482 = vmatmul.mubr.bf16.gmra.mrb[0].mxu0 %v795
    %v3483 = vpop.f32.mrb[0].mxu0
    %v3484 = vadd.f32 %v3443, %v3483
    %v3485 = vpop.f32.mrb[0].mxu0
    %v3486 = vadd.f32 %v3445, %v3485
    %v3487 = vpop.f32.mrb[0].mxu0
    %v3488 = vpop.f32.mrb[0].mxu0
    %3489 = vdwg.mxu0
    %3490 = vmatprep.subr.bf16.mxu0 %v2728
    %3491 = vmatpush1.bf16.msra.mxu0 %v2727
    %3492 = vmatprep.subr.bf16.mxu0 %v2736
    %3493 = vmatpush1.bf16.msra.mxu0 %v2735
    %3494 = vmatprep.subr.bf16.mxu0 %v2744
    %3495 = vmatpush1.bf16.msra.mxu0 %v2743
    %3496 = vmatprep.subr.bf16.mxu0 %v2752
    %3497 = vmatpush1.bf16.msra.mxu0 %v2751
    %3498 = vmatprep.subr.bf16.mxu0 %v2760
    %3499 = vmatpush1.bf16.msra.mxu0 %v2759
    %3500 = vmatprep.subr.bf16.mxu0 %v2768
    %3501 = vmatpush1.bf16.msra.mxu0 %v2767
    %3502 = vmatprep.subr.bf16.mxu0 %v2776
    %3503 = vmatpush1.bf16.msra.mxu0 %v2775
    %3504 = vmatprep.subr.bf16.mxu0 %v2784
    %3505 = vmatpush1.bf16.msra.mxu0 %v2783
    %3506 = vmatprep.subr.bf16.mxu0 %v2792
    %3507 = vmatpush1.bf16.msra.mxu0 %v2791
    %3508 = vmatprep.subr.bf16.mxu0 %v2800
    %3509 = vmatpush1.bf16.msra.mxu0 %v2799
    %3510 = vmatprep.subr.bf16.mxu0 %v2808
    %3511 = vmatpush1.bf16.msra.mxu0 %v2807
    %3512 = vmatprep.subr.bf16.mxu0 %v2816
    %3513 = vmatpush1.bf16.msra.mxu0 %v2815
    %3514 = vmatprep.subr.bf16.mxu0 %v2824
    %3515 = vmatpush1.bf16.msra.mxu0 %v2823
    %3516 = vmatprep.subr.bf16.mxu0 %v2832
    %3517 = vmatpush1.bf16.msra.mxu0 %v2831
    %3518 = vmatprep.subr.bf16.mxu0 %v2840
    %3519 = vmatpush1.bf16.msra.mxu0 %v2839
    %3520 = vmatprep.subr.bf16.mxu0 %v2848
    %3521 = vmatpush1.bf16.msra.mxu0 %v2847
    %3522 = vmatprep.mubr.bf16.mxu0 %v798
    %3523 = vmatmul.mubr.bf16.gmra.mrb[0].mxu0 %v797
    %v3524 = vpop.f32.mrb[0].mxu0
    %v3525 = vadd.f32 %v3484, %v3524
    %v3526 = vpop.f32.mrb[0].mxu0
    %v3527 = vadd.f32 %v3486, %v3526
    %v3528 = vpop.f32.mrb[0].mxu0
    %v3529 = vpop.f32.mrb[0].mxu0
    %3530 = vdwg.mxu0
    %3531 = vmatprep.subr.bf16.mxu0 %v2346
    %3532 = vmatpush1.bf16.msra.mxu0 %v2345
    %3533 = vmatprep.subr.bf16.mxu0 %v2354
    %3534 = vmatpush1.bf16.msra.mxu0 %v2353
    %3535 = vmatprep.subr.bf16.mxu0 %v2362
    %3536 = vmatpush1.bf16.msra.mxu0 %v2361
    %3537 = vmatprep.subr.bf16.mxu0 %v2370
    %3538 = vmatpush1.bf16.msra.mxu0 %v2369
    %3539 = vmatprep.subr.bf16.mxu0 %v2378
    %3540 = vmatpush1.bf16.msra.mxu0 %v2377
    %3541 = vmatprep.subr.bf16.mxu0 %v2386
    %3542 = vmatpush1.bf16.msra.mxu0 %v2385
    %3543 = vmatprep.subr.bf16.mxu0 %v2394
    %3544 = vmatpush1.bf16.msra.mxu0 %v2393
    %3545 = vmatprep.subr.bf16.mxu0 %v2402
    %3546 = vmatpush1.bf16.msra.mxu0 %v2401
    %3547 = vmatprep.subr.bf16.mxu0 %v2410
    %3548 = vmatpush1.bf16.msra.mxu0 %v2409
    %3549 = vmatprep.subr.bf16.mxu0 %v2418
    %3550 = vmatpush1.bf16.msra.mxu0 %v2417
    %3551 = vmatprep.subr.bf16.mxu0 %v2426
    %3552 = vmatpush1.bf16.msra.mxu0 %v2425
    %3553 = vmatprep.subr.bf16.mxu0 %v2434
    %3554 = vmatpush1.bf16.msra.mxu0 %v2433
    %3555 = vmatprep.subr.bf16.mxu0 %v2442
    %3556 = vmatpush1.bf16.msra.mxu0 %v2441
    %3557 = vmatprep.subr.bf16.mxu0 %v2450
    %3558 = vmatpush1.bf16.msra.mxu0 %v2449
    %3559 = vmatprep.subr.bf16.mxu0 %v2458
    %3560 = vmatpush1.bf16.msra.mxu0 %v2457
    %3561 = vmatprep.subr.bf16.mxu0 %v2466
    %3562 = vmatpush1.bf16.msra.mxu0 %v2465
    %3563 = vmatprep.mubr.bf16.mxu0 %v792
    %3564 = vmatmul.mubr.bf16.gmra.mrb[0].mxu0 %v791
    %v3565 = vpop.f32.mrb[0].mxu0
    %v3566 = vadd.f32 0.0, %v3565
    %v3567 = vpop.f32.mrb[0].mxu0
    %v3568 = vadd.f32 0.0, %v3567
    %v3569 = vpop.f32.mrb[0].mxu0
    %v3570 = vpop.f32.mrb[0].mxu0
    %3571 = vdwg.mxu0
    %3572 = vmatprep.subr.bf16.mxu0 %v2474
    %3573 = vmatpush1.bf16.msra.mxu0 %v2473
    %3574 = vmatprep.subr.bf16.mxu0 %v2482
    %3575 = vmatpush1.bf16.msra.mxu0 %v2481
    %3576 = vmatprep.subr.bf16.mxu0 %v2490
    %3577 = vmatpush1.bf16.msra.mxu0 %v2489
    %3578 = vmatprep.subr.bf16.mxu0 %v2498
    %3579 = vmatpush1.bf16.msra.mxu0 %v2497
    %3580 = vmatprep.subr.bf16.mxu0 %v2506
    %3581 = vmatpush1.bf16.msra.mxu0 %v2505
    %3582 = vmatprep.subr.bf16.mxu0 %v2514
    %3583 = vmatpush1.bf16.msra.mxu0 %v2513
    %3584 = vmatprep.subr.bf16.mxu0 %v2522
    %3585 = vmatpush1.bf16.msra.mxu0 %v2521
    %3586 = vmatprep.subr.bf16.mxu0 %v2530
    %3587 = vmatpush1.bf16.msra.mxu0 %v2529
    %3588 = vmatprep.subr.bf16.mxu0 %v2538
    %3589 = vmatpush1.bf16.msra.mxu0 %v2537
    %3590 = vmatprep.subr.bf16.mxu0 %v2546
    %3591 = vmatpush1.bf16.msra.mxu0 %v2545
    %3592 = vmatprep.subr.bf16.mxu0 %v2554
    %3593 = vmatpush1.bf16.msra.mxu0 %v2553
    %3594 = vmatprep.subr.bf16.mxu0 %v2562
    %3595 = vmatpush1.bf16.msra.mxu0 %v2561
    %3596 = vmatprep.subr.bf16.mxu0 %v2570
    %3597 = vmatpush1.bf16.msra.mxu0 %v2569
    %3598 = vmatprep.subr.bf16.mxu0 %v2578
    %3599 = vmatpush1.bf16.msra.mxu0 %v2577
    %3600 = vmatprep.subr.bf16.mxu0 %v2586
    %3601 = vmatpush1.bf16.msra.mxu0 %v2585
    %3602 = vmatprep.subr.bf16.mxu0 %v2594
    %3603 = vmatpush1.bf16.msra.mxu0 %v2593
    %3604 = vmatprep.mubr.bf16.mxu0 %v794
    %3605 = vmatmul.mubr.bf16.gmra.mrb[0].mxu0 %v793
    %v3606 = vpop.f32.mrb[0].mxu0
    %v3607 = vadd.f32 %v3566, %v3606
    %v3608 = vpop.f32.mrb[0].mxu0
    %v3609 = vadd.f32 %v3568, %v3608
    %v3610 = vpop.f32.mrb[0].mxu0
    %v3611 = vpop.f32.mrb[0].mxu0
    %3612 = vdwg.mxu0
    %3613 = vmatprep.subr.bf16.mxu0 %v2602
    %3614 = vmatpush1.bf16.msra.mxu0 %v2601
    %3615 = vmatprep.subr.bf16.mxu0 %v2610
    %3616 = vmatpush1.bf16.msra.mxu0 %v2609
    %3617 = vmatprep.subr.bf16.mxu0 %v2618
    %3618 = vmatpush1.bf16.msra.mxu0 %v2617
    %3619 = vmatprep.subr.bf16.mxu0 %v2626
    %3620 = vmatpush1.bf16.msra.mxu0 %v2625
    %3621 = vmatprep.subr.bf16.mxu0 %v2634
    %3622 = vmatpush1.bf16.msra.mxu0 %v2633
    %3623 = vmatprep.subr.bf16.mxu0 %v2642
    %3624 = vmatpush1.bf16.msra.mxu0 %v2641
    %3625 = vmatprep.subr.bf16.mxu0 %v2650
    %3626 = vmatpush1.bf16.msra.mxu0 %v2649
    %3627 = vmatprep.subr.bf16.mxu0 %v2658
    %3628 = vmatpush1.bf16.msra.mxu0 %v2657
    %3629 = vmatprep.subr.bf16.mxu0 %v2666
    %3630 = vmatpush1.bf16.msra.mxu0 %v2665
    %3631 = vmatprep.subr.bf16.mxu0 %v2674
    %3632 = vmatpush1.bf16.msra.mxu0 %v2673
    %3633 = vmatprep.subr.bf16.mxu0 %v2682
    %3634 = vmatpush1.bf16.msra.mxu0 %v2681
    %3635 = vmatprep.subr.bf16.mxu0 %v2690
    %3636 = vmatpush1.bf16.msra.mxu0 %v2689
    %3637 = vmatprep.subr.bf16.mxu0 %v2698
    %3638 = vmatpush1.bf16.msra.mxu0 %v2697
    %3639 = vmatprep.subr.bf16.mxu0 %v2706
    %3640 = vmatpush1.bf16.msra.mxu0 %v2705
    %3641 = vmatprep.subr.bf16.mxu0 %v2714
    %3642 = vmatpush1.bf16.msra.mxu0 %v2713
    %3643 = vmatprep.subr.bf16.mxu0 %v2722
    %3644 = vmatpush1.bf16.msra.mxu0 %v2721
    %3645 = vmatprep.mubr.bf16.mxu0 %v796
    %3646 = vmatmul.mubr.bf16.gmra.mrb[0].mxu0 %v795
    %v3647 = vpop.f32.mrb[0].mxu0
    %v3648 = vadd.f32 %v3607, %v3647
    %v3649 = vpop.f32.mrb[0].mxu0
    %v3650 = vadd.f32 %v3609, %v3649
    %v3651 = vpop.f32.mrb[0].mxu0
    %v3652 = vpop.f32.mrb[0].mxu0
    %3653 = vdwg.mxu0
    %3654 = vmatprep.subr.bf16.mxu0 %v2730
    %3655 = vmatpush1.bf16.msra.mxu0 %v2729
    %3656 = vmatprep.subr.bf16.mxu0 %v2738
    %3657 = vmatpush1.bf16.msra.mxu0 %v2737
    %3658 = vmatprep.subr.bf16.mxu0 %v2746
    %3659 = vmatpush1.bf16.msra.mxu0 %v2745
    %3660 = vmatprep.subr.bf16.mxu0 %v2754
    %3661 = vmatpush1.bf16.msra.mxu0 %v2753
    %3662 = vmatprep.subr.bf16.mxu0 %v2762
    %3663 = vmatpush1.bf16.msra.mxu0 %v2761
    %3664 = vmatprep.subr.bf16.mxu0 %v2770
    %3665 = vmatpush1.bf16.msra.mxu0 %v2769
    %3666 = vmatprep.subr.bf16.mxu0 %v2778
    %3667 = vmatpush1.bf16.msra.mxu0 %v2777
    %3668 = vmatprep.subr.bf16.mxu0 %v2786
    %3669 = vmatpush1.bf16.msra.mxu0 %v2785
    %3670 = vmatprep.subr.bf16.mxu0 %v2794
    %3671 = vmatpush1.bf16.msra.mxu0 %v2793
    %3672 = vmatprep.subr.bf16.mxu0 %v2802
    %3673 = vmatpush1.bf16.msra.mxu0 %v2801
    %3674 = vmatprep.subr.bf16.mxu0 %v2810
    %3675 = vmatpush1.bf16.msra.mxu0 %v2809
    %3676 = vmatprep.subr.bf16.mxu0 %v2818
    %3677 = vmatpush1.bf16.msra.mxu0 %v2817
    %3678 = vmatprep.subr.bf16.mxu0 %v2826
    %3679 = vmatpush1.bf16.msra.mxu0 %v2825
    %3680 = vmatprep.subr.bf16.mxu0 %v2834
    %3681 = vmatpush1.bf16.msra.mxu0 %v2833
    %3682 = vmatprep.subr.bf16.mxu0 %v2842
    %3683 = vmatpush1.bf16.msra.mxu0 %v2841
    %3684 = vmatprep.subr.bf16.mxu0 %v2850
    %3685 = vmatpush1.bf16.msra.mxu0 %v2849
    %3686 = vmatprep.mubr.bf16.mxu0 %v798
    %3687 = vmatmul.mubr.bf16.gmra.mrb[0].mxu0 %v797
    %v3688 = vpop.f32.mrb[0].mxu0
    %v3689 = vadd.f32 %v3648, %v3688
    %v3690 = vpop.f32.mrb[0].mxu0
    %v3691 = vadd.f32 %v3650, %v3690
    %v3692 = vpop.f32.mrb[0].mxu0
    %v3693 = vpop.f32.mrb[0].mxu0
    %3694 = vdwg.mxu0
    %3695 = vmatprep.subr.bf16.mxu0 %v2348
    %3696 = vmatpush1.bf16.msra.mxu0 %v2347
    %3697 = vmatprep.subr.bf16.mxu0 %v2356
    %3698 = vmatpush1.bf16.msra.mxu0 %v2355
    %3699 = vmatprep.subr.bf16.mxu0 %v2364
    %3700 = vmatpush1.bf16.msra.mxu0 %v2363
    %3701 = vmatprep.subr.bf16.mxu0 %v2372
    %3702 = vmatpush1.bf16.msra.mxu0 %v2371
    %3703 = vmatprep.subr.bf16.mxu0 %v2380
    %3704 = vmatpush1.bf16.msra.mxu0 %v2379
    %3705 = vmatprep.subr.bf16.mxu0 %v2388
    %3706 = vmatpush1.bf16.msra.mxu0 %v2387
    %3707 = vmatprep.subr.bf16.mxu0 %v2396
    %3708 = vmatpush1.bf16.msra.mxu0 %v2395
    %3709 = vmatprep.subr.bf16.mxu0 %v2404
    %3710 = vmatpush1.bf16.msra.mxu0 %v2403
    %3711 = vmatprep.subr.bf16.mxu0 %v2412
    %3712 = vmatpush1.bf16.msra.mxu0 %v2411
    %3713 = vmatprep.subr.bf16.mxu0 %v2420
    %3714 = vmatpush1.bf16.msra.mxu0 %v2419
    %3715 = vmatprep.subr.bf16.mxu0 %v2428
    %3716 = vmatpush1.bf16.msra.mxu0 %v2427
    %3717 = vmatprep.subr.bf16.mxu0 %v2436
    %3718 = vmatpush1.bf16.msra.mxu0 %v2435
    %3719 = vmatprep.subr.bf16.mxu0 %v2444
    %3720 = vmatpush1.bf16.msra.mxu0 %v2443
    %3721 = vmatprep.subr.bf16.mxu0 %v2452
    %3722 = vmatpush1.bf16.msra.mxu0 %v2451
    %3723 = vmatprep.subr.bf16.mxu0 %v2460
    %3724 = vmatpush1.bf16.msra.mxu0 %v2459
    %3725 = vmatprep.subr.bf16.mxu0 %v2468
    %3726 = vmatpush1.bf16.msra.mxu0 %v2467
    %3727 = vmatprep.mubr.bf16.mxu0 %v792
    %3728 = vmatmul.mubr.bf16.gmra.mrb[0].mxu0 %v791
    %v3729 = vpop.f32.mrb[0].mxu0
    %v3730 = vadd.f32 0.0, %v3729
    %v3731 = vpop.f32.mrb[0].mxu0
    %v3732 = vadd.f32 0.0, %v3731
    %v3733 = vpop.f32.mrb[0].mxu0
    %v3734 = vpop.f32.mrb[0].mxu0
    %3735 = vdwg.mxu0
    %3736 = vmatprep.subr.bf16.mxu0 %v2476
    %3737 = vmatpush1.bf16.msra.mxu0 %v2475
    %3738 = vmatprep.subr.bf16.mxu0 %v2484
    %3739 = vmatpush1.bf16.msra.mxu0 %v2483
    %3740 = vmatprep.subr.bf16.mxu0 %v2492
    %3741 = vmatpush1.bf16.msra.mxu0 %v2491
    %3742 = vmatprep.subr.bf16.mxu0 %v2500
    %3743 = vmatpush1.bf16.msra.mxu0 %v2499
    %3744 = vmatprep.subr.bf16.mxu0 %v2508
    %3745 = vmatpush1.bf16.msra.mxu0 %v2507
    %3746 = vmatprep.subr.bf16.mxu0 %v2516
    %3747 = vmatpush1.bf16.msra.mxu0 %v2515
    %3748 = vmatprep.subr.bf16.mxu0 %v2524
    %3749 = vmatpush1.bf16.msra.mxu0 %v2523
    %3750 = vmatprep.subr.bf16.mxu0 %v2532
    %3751 = vmatpush1.bf16.msra.mxu0 %v2531
    %3752 = vmatprep.subr.bf16.mxu0 %v2540
    %3753 = vmatpush1.bf16.msra.mxu0 %v2539
    %3754 = vmatprep.subr.bf16.mxu0 %v2548
    %3755 = vmatpush1.bf16.msra.mxu0 %v2547
    %3756 = vmatprep.subr.bf16.mxu0 %v2556
    %3757 = vmatpush1.bf16.msra.mxu0 %v2555
    %3758 = vmatprep.subr.bf16.mxu0 %v2564
    %3759 = vmatpush1.bf16.msra.mxu0 %v2563
    %3760 = vmatprep.subr.bf16.mxu0 %v2572
    %3761 = vmatpush1.bf16.msra.mxu0 %v2571
    %3762 = vmatprep.subr.bf16.mxu0 %v2580
    %3763 = vmatpush1.bf16.msra.mxu0 %v2579
    %3764 = vmatprep.subr.bf16.mxu0 %v2588
    %3765 = vmatpush1.bf16.msra.mxu0 %v2587
    %3766 = vmatprep.subr.bf16.mxu0 %v2596
    %3767 = vmatpush1.bf16.msra.mxu0 %v2595
    %3768 = vmatprep.mubr.bf16.mxu0 %v794
    %3769 = vmatmul.mubr.bf16.gmra.mrb[0].mxu0 %v793
    %v3770 = vpop.f32.mrb[0].mxu0
    %v3771 = vadd.f32 %v3730, %v3770
    %v3772 = vpop.f32.mrb[0].mxu0
    %v3773 = vadd.f32 %v3732, %v3772
    %v3774 = vpop.f32.mrb[0].mxu0
    %v3775 = vpop.f32.mrb[0].mxu0
    %3776 = vdwg.mxu0
    %3777 = vmatprep.subr.bf16.mxu0 %v2604
    %3778 = vmatpush1.bf16.msra.mxu0 %v2603
    %3779 = vmatprep.subr.bf16.mxu0 %v2612
    %3780 = vmatpush1.bf16.msra.mxu0 %v2611
    %3781 = vmatprep.subr.bf16.mxu0 %v2620
    %3782 = vmatpush1.bf16.msra.mxu0 %v2619
    %3783 = vmatprep.subr.bf16.mxu0 %v2628
    %3784 = vmatpush1.bf16.msra.mxu0 %v2627
    %3785 = vmatprep.subr.bf16.mxu0 %v2636
    %3786 = vmatpush1.bf16.msra.mxu0 %v2635
    %3787 = vmatprep.subr.bf16.mxu0 %v2644
    %3788 = vmatpush1.bf16.msra.mxu0 %v2643
    %3789 = vmatprep.subr.bf16.mxu0 %v2652
    %3790 = vmatpush1.bf16.msra.mxu0 %v2651
    %3791 = vmatprep.subr.bf16.mxu0 %v2660
    %3792 = vmatpush1.bf16.msra.mxu0 %v2659
    %3793 = vmatprep.subr.bf16.mxu0 %v2668
    %3794 = vmatpush1.bf16.msra.mxu0 %v2667
    %3795 = vmatprep.subr.bf16.mxu0 %v2676
    %3796 = vmatpush1.bf16.msra.mxu0 %v2675
    %3797 = vmatprep.subr.bf16.mxu0 %v2684
    %3798 = vmatpush1.bf16.msra.mxu0 %v2683
    %3799 = vmatprep.subr.bf16.mxu0 %v2692
    %3800 = vmatpush1.bf16.msra.mxu0 %v2691
    %3801 = vmatprep.subr.bf16.mxu0 %v2700
    %3802 = vmatpush1.bf16.msra.mxu0 %v2699
    %3803 = vmatprep.subr.bf16.mxu0 %v2708
    %3804 = vmatpush1.bf16.msra.mxu0 %v2707
    %3805 = vmatprep.subr.bf16.mxu0 %v2716
    %3806 = vmatpush1.bf16.msra.mxu0 %v2715
    %3807 = vmatprep.subr.bf16.mxu0 %v2724
    %3808 = vmatpush1.bf16.msra.mxu0 %v2723
    %3809 = vmatprep.mubr.bf16.mxu0 %v796
    %3810 = vmatmul.mubr.bf16.gmra.mrb[0].mxu0 %v795
    %v3811 = vpop.f32.mrb[0].mxu0
    %v3812 = vadd.f32 %v3771, %v3811
    %v3813 = vpop.f32.mrb[0].mxu0
    %v3814 = vadd.f32 %v3773, %v3813
    %v3815 = vpop.f32.mrb[0].mxu0
    %v3816 = vpop.f32.mrb[0].mxu0
    %3817 = vdwg.mxu0
    %3818 = vmatprep.subr.bf16.mxu0 %v2732
    %3819 = vmatpush1.bf16.msra.mxu0 %v2731
    %3820 = vmatprep.subr.bf16.mxu0 %v2740
    %3821 = vmatpush1.bf16.msra.mxu0 %v2739
    %3822 = vmatprep.subr.bf16.mxu0 %v2748
    %3823 = vmatpush1.bf16.msra.mxu0 %v2747
    %3824 = vmatprep.subr.bf16.mxu0 %v2756
    %3825 = vmatpush1.bf16.msra.mxu0 %v2755
    %3826 = vmatprep.subr.bf16.mxu0 %v2764
    %3827 = vmatpush1.bf16.msra.mxu0 %v2763
    %3828 = vmatprep.subr.bf16.mxu0 %v2772
    %3829 = vmatpush1.bf16.msra.mxu0 %v2771
    %3830 = vmatprep.subr.bf16.mxu0 %v2780
    %3831 = vmatpush1.bf16.msra.mxu0 %v2779
    %3832 = vmatprep.subr.bf16.mxu0 %v2788
    %3833 = vmatpush1.bf16.msra.mxu0 %v2787
    %3834 = vmatprep.subr.bf16.mxu0 %v2796
    %3835 = vmatpush1.bf16.msra.mxu0 %v2795
    %3836 = vmatprep.subr.bf16.mxu0 %v2804
    %3837 = vmatpush1.bf16.msra.mxu0 %v2803
    %3838 = vmatprep.subr.bf16.mxu0 %v2812
    %3839 = vmatpush1.bf16.msra.mxu0 %v2811
    %3840 = vmatprep.subr.bf16.mxu0 %v2820
    %3841 = vmatpush1.bf16.msra.mxu0 %v2819
    %3842 = vmatprep.subr.bf16.mxu0 %v2828
    %3843 = vmatpush1.bf16.msra.mxu0 %v2827
    %3844 = vmatprep.subr.bf16.mxu0 %v2836
    %3845 = vmatpush1.bf16.msra.mxu0 %v2835
    %3846 = vmatprep.subr.bf16.mxu0 %v2844
    %3847 = vmatpush1.bf16.msra.mxu0 %v2843
    %3848 = vmatprep.subr.bf16.mxu0 %v2852
    %3849 = vmatpush1.bf16.msra.mxu0 %v2851
    %3850 = vmatprep.mubr.bf16.mxu0 %v798
    %3851 = vmatmul.mubr.bf16.gmra.mrb[0].mxu0 %v797
    %v3852 = vpop.f32.mrb[0].mxu0
    %v3853 = vadd.f32 %v3812, %v3852
    %v3854 = vpop.f32.mrb[0].mxu0
    %v3855 = vadd.f32 %v3814, %v3854
    %v3856 = vpop.f32.mrb[0].mxu0
    %v3857 = vpop.f32.mrb[0].mxu0
    %3858 = vdwg.mxu0
    %3859 = vmatprep.subr.bf16.mxu0 %v2350
    %3860 = vmatpush1.bf16.msra.mxu0 %v2349
    %3861 = vmatprep.subr.bf16.mxu0 %v2358
    %3862 = vmatpush1.bf16.msra.mxu0 %v2357
    %3863 = vmatprep.subr.bf16.mxu0 %v2366
    %3864 = vmatpush1.bf16.msra.mxu0 %v2365
    %3865 = vmatprep.subr.bf16.mxu0 %v2374
    %3866 = vmatpush1.bf16.msra.mxu0 %v2373
    %3867 = vmatprep.subr.bf16.mxu0 %v2382
    %3868 = vmatpush1.bf16.msra.mxu0 %v2381
    %3869 = vmatprep.subr.bf16.mxu0 %v2390
    %3870 = vmatpush1.bf16.msra.mxu0 %v2389
    %3871 = vmatprep.subr.bf16.mxu0 %v2398
    %3872 = vmatpush1.bf16.msra.mxu0 %v2397
    %3873 = vmatprep.subr.bf16.mxu0 %v2406
    %3874 = vmatpush1.bf16.msra.mxu0 %v2405
    %3875 = vmatprep.subr.bf16.mxu0 %v2414
    %3876 = vmatpush1.bf16.msra.mxu0 %v2413
    %3877 = vmatprep.subr.bf16.mxu0 %v2422
    %3878 = vmatpush1.bf16.msra.mxu0 %v2421
    %3879 = vmatprep.subr.bf16.mxu0 %v2430
    %3880 = vmatpush1.bf16.msra.mxu0 %v2429
    %3881 = vmatprep.subr.bf16.mxu0 %v2438
    %3882 = vmatpush1.bf16.msra.mxu0 %v2437
    %3883 = vmatprep.subr.bf16.mxu0 %v2446
    %3884 = vmatpush1.bf16.msra.mxu0 %v2445
    %3885 = vmatprep.subr.bf16.mxu0 %v2454
    %3886 = vmatpush1.bf16.msra.mxu0 %v2453
    %3887 = vmatprep.subr.bf16.mxu0 %v2462
    %3888 = vmatpush1.bf16.msra.mxu0 %v2461
    %3889 = vmatprep.subr.bf16.mxu0 %v2470
    %3890 = vmatpush1.bf16.msra.mxu0 %v2469
    %3891 = vmatprep.mubr.bf16.mxu0 %v792
    %3892 = vmatmul.mubr.bf16.gmra.mrb[0].mxu0 %v791
    %v3893 = vpop.f32.mrb[0].mxu0
    %v3894 = vadd.f32 0.0, %v3893
    %v3895 = vpop.f32.mrb[0].mxu0
    %v3896 = vadd.f32 0.0, %v3895
    %v3897 = vpop.f32.mrb[0].mxu0
    %v3898 = vpop.f32.mrb[0].mxu0
    %3899 = vdwg.mxu0
    %3900 = vmatprep.subr.bf16.mxu0 %v2478
    %3901 = vmatpush1.bf16.msra.mxu0 %v2477
    %3902 = vmatprep.subr.bf16.mxu0 %v2486
    %3903 = vmatpush1.bf16.msra.mxu0 %v2485
    %3904 = vmatprep.subr.bf16.mxu0 %v2494
    %3905 = vmatpush1.bf16.msra.mxu0 %v2493
    %3906 = vmatprep.subr.bf16.mxu0 %v2502
    %3907 = vmatpush1.bf16.msra.mxu0 %v2501
    %3908 = vmatprep.subr.bf16.mxu0 %v2510
    %3909 = vmatpush1.bf16.msra.mxu0 %v2509
    %3910 = vmatprep.subr.bf16.mxu0 %v2518
    %3911 = vmatpush1.bf16.msra.mxu0 %v2517
    %3912 = vmatprep.subr.bf16.mxu0 %v2526
    %3913 = vmatpush1.bf16.msra.mxu0 %v2525
    %3914 = vmatprep.subr.bf16.mxu0 %v2534
    %3915 = vmatpush1.bf16.msra.mxu0 %v2533
    %3916 = vmatprep.subr.bf16.mxu0 %v2542
    %3917 = vmatpush1.bf16.msra.mxu0 %v2541
    %3918 = vmatprep.subr.bf16.mxu0 %v2550
    %3919 = vmatpush1.bf16.msra.mxu0 %v2549
    %3920 = vmatprep.subr.bf16.mxu0 %v2558
    %3921 = vmatpush1.bf16.msra.mxu0 %v2557
    %3922 = vmatprep.subr.bf16.mxu0 %v2566
    %3923 = vmatpush1.bf16.msra.mxu0 %v2565
    %3924 = vmatprep.subr.bf16.mxu0 %v2574
    %3925 = vmatpush1.bf16.msra.mxu0 %v2573
    %3926 = vmatprep.subr.bf16.mxu0 %v2582
    %3927 = vmatpush1.bf16.msra.mxu0 %v2581
    %3928 = vmatprep.subr.bf16.mxu0 %v2590
    %3929 = vmatpush1.bf16.msra.mxu0 %v2589
    %3930 = vmatprep.subr.bf16.mxu0 %v2598
    %3931 = vmatpush1.bf16.msra.mxu0 %v2597
    %3932 = vmatprep.mubr.bf16.mxu0 %v794
    %3933 = vmatmul.mubr.bf16.gmra.mrb[0].mxu0 %v793
    %v3934 = vpop.f32.mrb[0].mxu0
    %v3935 = vadd.f32 %v3894, %v3934
    %v3936 = vpop.f32.mrb[0].mxu0
    %v3937 = vadd.f32 %v3896, %v3936
    %v3938 = vpop.f32.mrb[0].mxu0
    %v3939 = vpop.f32.mrb[0].mxu0
    %3940 = vdwg.mxu0
    %3941 = vmatprep.subr.bf16.mxu0 %v2606
    %3942 = vmatpush1.bf16.msra.mxu0 %v2605
    %3943 = vmatprep.subr.bf16.mxu0 %v2614
    %3944 = vmatpush1.bf16.msra.mxu0 %v2613
    %3945 = vmatprep.subr.bf16.mxu0 %v2622
    %3946 = vmatpush1.bf16.msra.mxu0 %v2621
    %3947 = vmatprep.subr.bf16.mxu0 %v2630
    %3948 = vmatpush1.bf16.msra.mxu0 %v2629
    %3949 = vmatprep.subr.bf16.mxu0 %v2638
    %3950 = vmatpush1.bf16.msra.mxu0 %v2637
    %3951 = vmatprep.subr.bf16.mxu0 %v2646
    %3952 = vmatpush1.bf16.msra.mxu0 %v2645
    %3953 = vmatprep.subr.bf16.mxu0 %v2654
    %3954 = vmatpush1.bf16.msra.mxu0 %v2653
    %3955 = vmatprep.subr.bf16.mxu0 %v2662
    %3956 = vmatpush1.bf16.msra.mxu0 %v2661
    %3957 = vmatprep.subr.bf16.mxu0 %v2670
    %3958 = vmatpush1.bf16.msra.mxu0 %v2669
    %3959 = vmatprep.subr.bf16.mxu0 %v2678
    %3960 = vmatpush1.bf16.msra.mxu0 %v2677
    %3961 = vmatprep.subr.bf16.mxu0 %v2686
    %3962 = vmatpush1.bf16.msra.mxu0 %v2685
    %3963 = vmatprep.subr.bf16.mxu0 %v2694
    %3964 = vmatpush1.bf16.msra.mxu0 %v2693
    %3965 = vmatprep.subr.bf16.mxu0 %v2702
    %3966 = vmatpush1.bf16.msra.mxu0 %v2701
    %3967 = vmatprep.subr.bf16.mxu0 %v2710
    %3968 = vmatpush1.bf16.msra.mxu0 %v2709
    %3969 = vmatprep.subr.bf16.mxu0 %v2718
    %3970 = vmatpush1.bf16.msra.mxu0 %v2717
    %3971 = vmatprep.subr.bf16.mxu0 %v2726
    %3972 = vmatpush1.bf16.msra.mxu0 %v2725
    %3973 = vmatprep.mubr.bf16.mxu0 %v796
    %3974 = vmatmul.mubr.bf16.gmra.mrb[0].mxu0 %v795
    %v3975 = vpop.f32.mrb[0].mxu0
    %v3976 = vadd.f32 %v3935, %v3975
    %v3977 = vpop.f32.mrb[0].mxu0
    %v3978 = vadd.f32 %v3937, %v3977
    %v3979 = vpop.f32.mrb[0].mxu0
    %v3980 = vpop.f32.mrb[0].mxu0
    %3981 = vdwg.mxu0
    %3982 = vmatprep.subr.bf16.mxu0 %v2734
    %3983 = vmatpush1.bf16.msra.mxu0 %v2733
    %3984 = vmatprep.subr.bf16.mxu0 %v2742
    %3985 = vmatpush1.bf16.msra.mxu0 %v2741
    %3986 = vmatprep.subr.bf16.mxu0 %v2750
    %3987 = vmatpush1.bf16.msra.mxu0 %v2749
    %3988 = vmatprep.subr.bf16.mxu0 %v2758
    %3989 = vmatpush1.bf16.msra.mxu0 %v2757
    %3990 = vmatprep.subr.bf16.mxu0 %v2766
    %3991 = vmatpush1.bf16.msra.mxu0 %v2765
    %3992 = vmatprep.subr.bf16.mxu0 %v2774
    %3993 = vmatpush1.bf16.msra.mxu0 %v2773
    %3994 = vmatprep.subr.bf16.mxu0 %v2782
    %3995 = vmatpush1.bf16.msra.mxu0 %v2781
    %3996 = vmatprep.subr.bf16.mxu0 %v2790
    %3997 = vmatpush1.bf16.msra.mxu0 %v2789
    %3998 = vmatprep.subr.bf16.mxu0 %v2798
    %3999 = vmatpush1.bf16.msra.mxu0 %v2797
    %4000 = vmatprep.subr.bf16.mxu0 %v2806
    %4001 = vmatpush1.bf16.msra.mxu0 %v2805
    %4002 = vmatprep.subr.bf16.mxu0 %v2814
    %4003 = vmatpush1.bf16.msra.mxu0 %v2813
    %4004 = vmatprep.subr.bf16.mxu0 %v2822
    %4005 = vmatpush1.bf16.msra.mxu0 %v2821
    %4006 = vmatprep.subr.bf16.mxu0 %v2830
    %4007 = vmatpush1.bf16.msra.mxu0 %v2829
    %4008 = vmatprep.subr.bf16.mxu0 %v2838
    %4009 = vmatpush1.bf16.msra.mxu0 %v2837
    %4010 = vmatprep.subr.bf16.mxu0 %v2846
    %4011 = vmatpush1.bf16.msra.mxu0 %v2845
    %4012 = vmatprep.subr.bf16.mxu0 %v2854
    %4013 = vmatpush1.bf16.msra.mxu0 %v2853
    %4014 = vmatprep.mubr.bf16.mxu0 %v798
    %4015 = vmatmul.mubr.bf16.gmra.mrb[0].mxu0 %v797
    %v4016 = vpop.f32.mrb[0].mxu0
    %v4017 = vadd.f32 %v3976, %v4016
    %v4018 = vpop.f32.mrb[0].mxu0
    %v4019 = vadd.f32 %v3978, %v4018
    %v4020 = vpop.f32.mrb[0].mxu0
    %v4021 = vpop.f32.mrb[0].mxu0
    %4022 = vdwg.mxu0
    %v4023 = vld [vmem:[#allocation15] sm:$0xff]
    %v4025 = vlaneseq
    %v4026 = vshrl.u32 %v4025, 7
    %v4027 = vsub.s32 0, %v4026
    %v4028 = vrot.slane %v4023, %v4027
    %v4029 = vlaneseq
    %v4030 = vshrl.u32 %v4029, 7
    %v4031 = vsub.s32 1, %v4030
    %v4032 = vrot.slane %v4023, %v4031
    %v4033 = vlaneseq
    %v4034 = vshrl.u32 %v4033, 7
    %v4035 = vsub.s32 2, %v4034
    %v4036 = vrot.slane %v4023, %v4035
    %v4037 = vlaneseq
    %v4038 = vshrl.u32 %v4037, 7
    %v4039 = vsub.s32 3, %v4038
    %v4040 = vrot.slane %v4023, %v4039
    %v4041 = vlaneseq
    %v4042 = vshrl.u32 %v4041, 7
    %v4043 = vsub.s32 4, %v4042
    %v4044 = vrot.slane %v4023, %v4043
    %v4045 = vlaneseq
    %v4046 = vshrl.u32 %v4045, 7
    %v4047 = vsub.s32 5, %v4046
    %v4048 = vrot.slane %v4023, %v4047
    %v4049 = vlaneseq
    %v4050 = vshrl.u32 %v4049, 7
    %v4051 = vsub.s32 6, %v4050
    %v4052 = vrot.slane %v4023, %v4051
    %v4053 = vlaneseq
    %v4054 = vshrl.u32 %v4053, 7
    %v4055 = vsub.s32 7, %v4054
    %v4056 = vrot.slane %v4023, %v4055
    %vm4065 = vcmp.ge.f32.partialorder %v3525, %v4028
    %vm4066 = vcmp.ge.f32.partialorder %v3527, %v4032
    %vm4067 = vcmp.ge.f32.partialorder %v3689, %v4036
    %vm4068 = vcmp.ge.f32.partialorder %v3691, %v4040
    %vm4069 = vcmp.ge.f32.partialorder %v3853, %v4044
    %vm4070 = vcmp.ge.f32.partialorder %v3855, %v4048
    %vm4071 = vcmp.ge.f32.partialorder %v4017, %v4052
    %vm4072 = vcmp.ge.f32.partialorder %v4019, %v4056
    %v4073 = vsel %vm4065, 1, 0
    %v4074 = vsel %vm4066, 1, 0
    %v4075 = vsel %vm4067, 1, 0
    %v4076 = vsel %vm4068, 1, 0
    %v4077 = vsel %vm4069, 1, 0
    %v4078 = vsel %vm4070, 1, 0
    %v4079 = vsel %vm4071, 1, 0
    %v4080 = vsel %vm4072, 1, 0
    %v4081 = vcvt.s32.f32 %v4073
    %v4082 = vcvt.s32.f32 %v4074
    %v4083 = vcvt.s32.f32 %v4075
    %v4084 = vcvt.s32.f32 %v4076
    %v4085 = vcvt.s32.f32 %v4077
    %v4086 = vcvt.s32.f32 %v4078
    %v4087 = vcvt.s32.f32 %v4079
    %v4088 = vcvt.s32.f32 %v4080
    %v4089 = vpack.c.bf16 %v4081, %v4081
    %v4090 = vpack.c.bf16 %v4082, %v4082
    %v4091 = vpack.c.bf16 %v4083, %v4083
    %v4092 = vpack.c.bf16 %v4084, %v4084
    %v4093 = vpack.c.bf16 %v4085, %v4085
    %v4094 = vpack.c.bf16 %v4086, %v4086
    %v4095 = vpack.c.bf16 %v4087, %v4087
    %v4096 = vpack.c.bf16 %v4088, %v4088
    %v4105 = vunpack.c.l.b16 %v4089
    %v4106 = vunpack.c.l.b16 %v4090
    %v4107 = vunpack.c.l.b16 %v4091
    %v4108 = vunpack.c.l.b16 %v4092
    %v4109 = vunpack.c.l.b16 %v4093
    %v4110 = vunpack.c.l.b16 %v4094
    %v4111 = vunpack.c.l.b16 %v4095
    %v4112 = vunpack.c.l.b16 %v4096
    %v4113 = vpack.c.b16 %v4106, %v4105
    %v4114 = vpack.c.b16 %v4108, %v4107
    %v4115 = vpack.c.b16 %v4110, %v4109
    %v4116 = vpack.c.b16 %v4112, %v4111
    %4121 = vst [vmem:[%s17] sm:$0xff] %v4113
    %4122 = vst [vmem:[%s17 + $0x8] sm:$0xff] %v4114
    %4123 = vst [vmem:[%s17 + $0x10] sm:$0xff] %v4115
    %4124 = vst [vmem:[%s17 + $0x18] sm:$0xff] %v4116
    %v4125 = vld [vmem:[#allocation4] sm:$0xff]
    %v4126 = vld [vmem:[#allocation4 + $0x8] sm:$0xff]
    %v4127 = vld [vmem:[#allocation4 + $0x10] sm:$0xff]
    %v4128 = vld [vmem:[#allocation4 + $0x18] sm:$0xff]
    %v4129 = vld [vmem:[#allocation4 + $0x20] sm:$0xff]
    %v4130 = vld [vmem:[#allocation4 + $0x28] sm:$0xff]
    %v4131 = vld [vmem:[#allocation4 + $0x30] sm:$0xff]
    %v4132 = vld [vmem:[#allocation4 + $0x38] sm:$0xff]
    %v4133 = vld [vmem:[#allocation4 + $0x40] sm:$0xff]
    %v4134 = vld [vmem:[#allocation4 + $0x48] sm:$0xff]
    %v4135 = vld [vmem:[#allocation4 + $0x50] sm:$0xff]
    %v4136 = vld [vmem:[#allocation4 + $0x58] sm:$0xff]
    %v4137 = vld [vmem:[#allocation4 + $0x60] sm:$0xff]
    %v4138 = vld [vmem:[#allocation4 + $0x68] sm:$0xff]
    %v4139 = vld [vmem:[#allocation4 + $0x70] sm:$0xff]
    %v4140 = vld [vmem:[#allocation4 + $0x78] sm:$0xff]
    %v4141 = vld [vmem:[#allocation4 + $0x80] sm:$0xff]
    %v4142 = vld [vmem:[#allocation4 + $0x88] sm:$0xff]
    %v4143 = vld [vmem:[#allocation4 + $0x90] sm:$0xff]
    %v4144 = vld [vmem:[#allocation4 + $0x98] sm:$0xff]
    %v4145 = vld [vmem:[#allocation4 + $0xa0] sm:$0xff]
    %v4146 = vld [vmem:[#allocation4 + $0xa8] sm:$0xff]
    %v4147 = vld [vmem:[#allocation4 + $0xb0] sm:$0xff]
    %v4148 = vld [vmem:[#allocation4 + $0xb8] sm:$0xff]
    %v4149 = vld [vmem:[#allocation4 + $0xc0] sm:$0xff]
    %v4150 = vld [vmem:[#allocation4 + $0xc8] sm:$0xff]
    %v4151 = vld [vmem:[#allocation4 + $0xd0] sm:$0xff]
    %v4152 = vld [vmem:[#allocation4 + $0xd8] sm:$0xff]
    %v4153 = vld [vmem:[#allocation4 + $0xe0] sm:$0xff]
    %v4154 = vld [vmem:[#allocation4 + $0xe8] sm:$0xff]
    %v4155 = vld [vmem:[#allocation4 + $0xf0] sm:$0xff]
    %v4156 = vld [vmem:[#allocation4 + $0xf8] sm:$0xff]
    %v4157 = vld [vmem:[#allocation4 + $0x100] sm:$0xff]
    %v4158 = vld [vmem:[#allocation4 + $0x108] sm:$0xff]
    %v4159 = vld [vmem:[#allocation4 + $0x110] sm:$0xff]
    %v4160 = vld [vmem:[#allocation4 + $0x118] sm:$0xff]
    %v4161 = vld [vmem:[#allocation4 + $0x120] sm:$0xff]
    %v4162 = vld [vmem:[#allocation4 + $0x128] sm:$0xff]
    %v4163 = vld [vmem:[#allocation4 + $0x130] sm:$0xff]
    %v4164 = vld [vmem:[#allocation4 + $0x138] sm:$0xff]
    %v4165 = vld [vmem:[#allocation4 + $0x140] sm:$0xff]
    %v4166 = vld [vmem:[#allocation4 + $0x148] sm:$0xff]
    %v4167 = vld [vmem:[#allocation4 + $0x150] sm:$0xff]
    %v4168 = vld [vmem:[#allocation4 + $0x158] sm:$0xff]
    %v4169 = vld [vmem:[#allocation4 + $0x160] sm:$0xff]
    %v4170 = vld [vmem:[#allocation4 + $0x168] sm:$0xff]
    %v4171 = vld [vmem:[#allocation4 + $0x170] sm:$0xff]
    %v4172 = vld [vmem:[#allocation4 + $0x178] sm:$0xff]
    %v4173 = vld [vmem:[#allocation4 + $0x180] sm:$0xff]
    %v4174 = vld [vmem:[#allocation4 + $0x188] sm:$0xff]
    %v4175 = vld [vmem:[#allocation4 + $0x190] sm:$0xff]
    %v4176 = vld [vmem:[#allocation4 + $0x198] sm:$0xff]
    %v4177 = vld [vmem:[#allocation4 + $0x1a0] sm:$0xff]
    %v4178 = vld [vmem:[#allocation4 + $0x1a8] sm:$0xff]
    %v4179 = vld [vmem:[#allocation4 + $0x1b0] sm:$0xff]
    %v4180 = vld [vmem:[#allocation4 + $0x1b8] sm:$0xff]
    %v4181 = vld [vmem:[#allocation4 + $0x1c0] sm:$0xff]
    %v4182 = vld [vmem:[#allocation4 + $0x1c8] sm:$0xff]
    %v4183 = vld [vmem:[#allocation4 + $0x1d0] sm:$0xff]
    %v4184 = vld [vmem:[#allocation4 + $0x1d8] sm:$0xff]
    %v4185 = vld [vmem:[#allocation4 + $0x1e0] sm:$0xff]
    %v4186 = vld [vmem:[#allocation4 + $0x1e8] sm:$0xff]
    %v4187 = vld [vmem:[#allocation4 + $0x1f0] sm:$0xff]
    %v4188 = vld [vmem:[#allocation4 + $0x1f8] sm:$0xff]
    %v4189 = vld [vmem:[#allocation4 + $0x200] sm:$0xff]
    %v4190 = vld [vmem:[#allocation4 + $0x208] sm:$0xff]
    %v4191 = vld [vmem:[#allocation4 + $0x210] sm:$0xff]
    %v4192 = vld [vmem:[#allocation4 + $0x218] sm:$0xff]
    %v4193 = vld [vmem:[#allocation4 + $0x220] sm:$0xff]
    %v4194 = vld [vmem:[#allocation4 + $0x228] sm:$0xff]
    %v4195 = vld [vmem:[#allocation4 + $0x230] sm:$0xff]
    %v4196 = vld [vmem:[#allocation4 + $0x238] sm:$0xff]
    %v4197 = vld [vmem:[#allocation4 + $0x240] sm:$0xff]
    %v4198 = vld [vmem:[#allocation4 + $0x248] sm:$0xff]
    %v4199 = vld [vmem:[#allocation4 + $0x250] sm:$0xff]
    %v4200 = vld [vmem:[#allocation4 + $0x258] sm:$0xff]
    %v4201 = vld [vmem:[#allocation4 + $0x260] sm:$0xff]
    %v4202 = vld [vmem:[#allocation4 + $0x268] sm:$0xff]
    %v4203 = vld [vmem:[#allocation4 + $0x270] sm:$0xff]
    %v4204 = vld [vmem:[#allocation4 + $0x278] sm:$0xff]
    %v4205 = vld [vmem:[#allocation4 + $0x280] sm:$0xff]
    %v4206 = vld [vmem:[#allocation4 + $0x288] sm:$0xff]
    %v4207 = vld [vmem:[#allocation4 + $0x290] sm:$0xff]
    %v4208 = vld [vmem:[#allocation4 + $0x298] sm:$0xff]
    %v4209 = vld [vmem:[#allocation4 + $0x2a0] sm:$0xff]
    %v4210 = vld [vmem:[#allocation4 + $0x2a8] sm:$0xff]
    %v4211 = vld [vmem:[#allocation4 + $0x2b0] sm:$0xff]
    %v4212 = vld [vmem:[#allocation4 + $0x2b8] sm:$0xff]
    %v4213 = vld [vmem:[#allocation4 + $0x2c0] sm:$0xff]
    %v4214 = vld [vmem:[#allocation4 + $0x2c8] sm:$0xff]
    %v4215 = vld [vmem:[#allocation4 + $0x2d0] sm:$0xff]
    %v4216 = vld [vmem:[#allocation4 + $0x2d8] sm:$0xff]
    %v4217 = vld [vmem:[#allocation4 + $0x2e0] sm:$0xff]
    %v4218 = vld [vmem:[#allocation4 + $0x2e8] sm:$0xff]
    %v4219 = vld [vmem:[#allocation4 + $0x2f0] sm:$0xff]
    %v4220 = vld [vmem:[#allocation4 + $0x2f8] sm:$0xff]
    %v4221 = vld [vmem:[#allocation4 + $0x300] sm:$0xff]
    %v4222 = vld [vmem:[#allocation4 + $0x308] sm:$0xff]
    %v4223 = vld [vmem:[#allocation4 + $0x310] sm:$0xff]
    %v4224 = vld [vmem:[#allocation4 + $0x318] sm:$0xff]
    %v4225 = vld [vmem:[#allocation4 + $0x320] sm:$0xff]
    %v4226 = vld [vmem:[#allocation4 + $0x328] sm:$0xff]
    %v4227 = vld [vmem:[#allocation4 + $0x330] sm:$0xff]
    %v4228 = vld [vmem:[#allocation4 + $0x338] sm:$0xff]
    %v4229 = vld [vmem:[#allocation4 + $0x340] sm:$0xff]
    %v4230 = vld [vmem:[#allocation4 + $0x348] sm:$0xff]
    %v4231 = vld [vmem:[#allocation4 + $0x350] sm:$0xff]
    %v4232 = vld [vmem:[#allocation4 + $0x358] sm:$0xff]
    %v4233 = vld [vmem:[#allocation4 + $0x360] sm:$0xff]
    %v4234 = vld [vmem:[#allocation4 + $0x368] sm:$0xff]
    %v4235 = vld [vmem:[#allocation4 + $0x370] sm:$0xff]
    %v4236 = vld [vmem:[#allocation4 + $0x378] sm:$0xff]
    %v4237 = vld [vmem:[#allocation4 + $0x380] sm:$0xff]
    %v4238 = vld [vmem:[#allocation4 + $0x388] sm:$0xff]
    %v4239 = vld [vmem:[#allocation4 + $0x390] sm:$0xff]
    %v4240 = vld [vmem:[#allocation4 + $0x398] sm:$0xff]
    %v4241 = vld [vmem:[#allocation4 + $0x3a0] sm:$0xff]
    %v4242 = vld [vmem:[#allocation4 + $0x3a8] sm:$0xff]
    %v4243 = vld [vmem:[#allocation4 + $0x3b0] sm:$0xff]
    %v4244 = vld [vmem:[#allocation4 + $0x3b8] sm:$0xff]
    %v4245 = vld [vmem:[#allocation4 + $0x3c0] sm:$0xff]
    %v4246 = vld [vmem:[#allocation4 + $0x3c8] sm:$0xff]
    %v4247 = vld [vmem:[#allocation4 + $0x3d0] sm:$0xff]
    %v4248 = vld [vmem:[#allocation4 + $0x3d8] sm:$0xff]
    %v4249 = vld [vmem:[#allocation4 + $0x3e0] sm:$0xff]
    %v4250 = vld [vmem:[#allocation4 + $0x3e8] sm:$0xff]
    %v4251 = vld [vmem:[#allocation4 + $0x3f0] sm:$0xff]
    %v4252 = vld [vmem:[#allocation4 + $0x3f8] sm:$0xff]
    %v4253 = vld [vmem:[#allocation4 + $0x400] sm:$0xff]
    %v4254 = vld [vmem:[#allocation4 + $0x408] sm:$0xff]
    %v4255 = vld [vmem:[#allocation4 + $0x410] sm:$0xff]
    %v4256 = vld [vmem:[#allocation4 + $0x418] sm:$0xff]
    %v4257 = vld [vmem:[#allocation4 + $0x420] sm:$0xff]
    %v4258 = vld [vmem:[#allocation4 + $0x428] sm:$0xff]
    %v4259 = vld [vmem:[#allocation4 + $0x430] sm:$0xff]
    %v4260 = vld [vmem:[#allocation4 + $0x438] sm:$0xff]
    %v4261 = vld [vmem:[#allocation4 + $0x440] sm:$0xff]
    %v4262 = vld [vmem:[#allocation4 + $0x448] sm:$0xff]
    %v4263 = vld [vmem:[#allocation4 + $0x450] sm:$0xff]
    %v4264 = vld [vmem:[#allocation4 + $0x458] sm:$0xff]
    %v4265 = vld [vmem:[#allocation4 + $0x460] sm:$0xff]
    %v4266 = vld [vmem:[#allocation4 + $0x468] sm:$0xff]
    %v4267 = vld [vmem:[#allocation4 + $0x470] sm:$0xff]
    %v4268 = vld [vmem:[#allocation4 + $0x478] sm:$0xff]
    %v4269 = vld [vmem:[#allocation4 + $0x480] sm:$0xff]
    %v4270 = vld [vmem:[#allocation4 + $0x488] sm:$0xff]
    %v4271 = vld [vmem:[#allocation4 + $0x490] sm:$0xff]
    %v4272 = vld [vmem:[#allocation4 + $0x498] sm:$0xff]
    %v4273 = vld [vmem:[#allocation4 + $0x4a0] sm:$0xff]
    %v4274 = vld [vmem:[#allocation4 + $0x4a8] sm:$0xff]
    %v4275 = vld [vmem:[#allocation4 + $0x4b0] sm:$0xff]
    %v4276 = vld [vmem:[#allocation4 + $0x4b8] sm:$0xff]
    %v4277 = vld [vmem:[#allocation4 + $0x4c0] sm:$0xff]
    %v4278 = vld [vmem:[#allocation4 + $0x4c8] sm:$0xff]
    %v4279 = vld [vmem:[#allocation4 + $0x4d0] sm:$0xff]
    %v4280 = vld [vmem:[#allocation4 + $0x4d8] sm:$0xff]
    %v4281 = vld [vmem:[#allocation4 + $0x4e0] sm:$0xff]
    %v4282 = vld [vmem:[#allocation4 + $0x4e8] sm:$0xff]
    %v4283 = vld [vmem:[#allocation4 + $0x4f0] sm:$0xff]
    %v4284 = vld [vmem:[#allocation4 + $0x4f8] sm:$0xff]
    %v4285 = vld [vmem:[#allocation4 + $0x500] sm:$0xff]
    %v4286 = vld [vmem:[#allocation4 + $0x508] sm:$0xff]
    %v4287 = vld [vmem:[#allocation4 + $0x510] sm:$0xff]
    %v4288 = vld [vmem:[#allocation4 + $0x518] sm:$0xff]
    %v4289 = vld [vmem:[#allocation4 + $0x520] sm:$0xff]
    %v4290 = vld [vmem:[#allocation4 + $0x528] sm:$0xff]
    %v4291 = vld [vmem:[#allocation4 + $0x530] sm:$0xff]
    %v4292 = vld [vmem:[#allocation4 + $0x538] sm:$0xff]
    %v4293 = vld [vmem:[#allocation4 + $0x540] sm:$0xff]
    %v4294 = vld [vmem:[#allocation4 + $0x548] sm:$0xff]
    %v4295 = vld [vmem:[#allocation4 + $0x550] sm:$0xff]
    %v4296 = vld [vmem:[#allocation4 + $0x558] sm:$0xff]
    %v4297 = vld [vmem:[#allocation4 + $0x560] sm:$0xff]
    %v4298 = vld [vmem:[#allocation4 + $0x568] sm:$0xff]
    %v4299 = vld [vmem:[#allocation4 + $0x570] sm:$0xff]
    %v4300 = vld [vmem:[#allocation4 + $0x578] sm:$0xff]
    %v4301 = vld [vmem:[#allocation4 + $0x580] sm:$0xff]
    %v4302 = vld [vmem:[#allocation4 + $0x588] sm:$0xff]
    %v4303 = vld [vmem:[#allocation4 + $0x590] sm:$0xff]
    %v4304 = vld [vmem:[#allocation4 + $0x598] sm:$0xff]
    %v4305 = vld [vmem:[#allocation4 + $0x5a0] sm:$0xff]
    %v4306 = vld [vmem:[#allocation4 + $0x5a8] sm:$0xff]
    %v4307 = vld [vmem:[#allocation4 + $0x5b0] sm:$0xff]
    %v4308 = vld [vmem:[#allocation4 + $0x5b8] sm:$0xff]
    %v4309 = vld [vmem:[#allocation4 + $0x5c0] sm:$0xff]
    %v4310 = vld [vmem:[#allocation4 + $0x5c8] sm:$0xff]
    %v4311 = vld [vmem:[#allocation4 + $0x5d0] sm:$0xff]
    %v4312 = vld [vmem:[#allocation4 + $0x5d8] sm:$0xff]
    %v4313 = vld [vmem:[#allocation4 + $0x5e0] sm:$0xff]
    %v4314 = vld [vmem:[#allocation4 + $0x5e8] sm:$0xff]
    %v4315 = vld [vmem:[#allocation4 + $0x5f0] sm:$0xff]
    %v4316 = vld [vmem:[#allocation4 + $0x5f8] sm:$0xff]
    %v4317 = vld [vmem:[#allocation4 + $0x600] sm:$0xff]
    %v4318 = vld [vmem:[#allocation4 + $0x608] sm:$0xff]
    %v4319 = vld [vmem:[#allocation4 + $0x610] sm:$0xff]
    %v4320 = vld [vmem:[#allocation4 + $0x618] sm:$0xff]
    %v4321 = vld [vmem:[#allocation4 + $0x620] sm:$0xff]
    %v4322 = vld [vmem:[#allocation4 + $0x628] sm:$0xff]
    %v4323 = vld [vmem:[#allocation4 + $0x630] sm:$0xff]
    %v4324 = vld [vmem:[#allocation4 + $0x638] sm:$0xff]
    %v4325 = vld [vmem:[#allocation4 + $0x640] sm:$0xff]
    %v4326 = vld [vmem:[#allocation4 + $0x648] sm:$0xff]
    %v4327 = vld [vmem:[#allocation4 + $0x650] sm:$0xff]
    %v4328 = vld [vmem:[#allocation4 + $0x658] sm:$0xff]
    %v4329 = vld [vmem:[#allocation4 + $0x660] sm:$0xff]
    %v4330 = vld [vmem:[#allocation4 + $0x668] sm:$0xff]
    %v4331 = vld [vmem:[#allocation4 + $0x670] sm:$0xff]
    %v4332 = vld [vmem:[#allocation4 + $0x678] sm:$0xff]
    %v4333 = vld [vmem:[#allocation4 + $0x680] sm:$0xff]
    %v4334 = vld [vmem:[#allocation4 + $0x688] sm:$0xff]
    %v4335 = vld [vmem:[#allocation4 + $0x690] sm:$0xff]
    %v4336 = vld [vmem:[#allocation4 + $0x698] sm:$0xff]
    %v4337 = vld [vmem:[#allocation4 + $0x6a0] sm:$0xff]
    %v4338 = vld [vmem:[#allocation4 + $0x6a8] sm:$0xff]
    %v4339 = vld [vmem:[#allocation4 + $0x6b0] sm:$0xff]
    %v4340 = vld [vmem:[#allocation4 + $0x6b8] sm:$0xff]
    %v4341 = vld [vmem:[#allocation4 + $0x6c0] sm:$0xff]
    %v4342 = vld [vmem:[#allocation4 + $0x6c8] sm:$0xff]
    %v4343 = vld [vmem:[#allocation4 + $0x6d0] sm:$0xff]
    %v4344 = vld [vmem:[#allocation4 + $0x6d8] sm:$0xff]
    %v4345 = vld [vmem:[#allocation4 + $0x6e0] sm:$0xff]
    %v4346 = vld [vmem:[#allocation4 + $0x6e8] sm:$0xff]
    %v4347 = vld [vmem:[#allocation4 + $0x6f0] sm:$0xff]
    %v4348 = vld [vmem:[#allocation4 + $0x6f8] sm:$0xff]
    %v4349 = vld [vmem:[#allocation4 + $0x700] sm:$0xff]
    %v4350 = vld [vmem:[#allocation4 + $0x708] sm:$0xff]
    %v4351 = vld [vmem:[#allocation4 + $0x710] sm:$0xff]
    %v4352 = vld [vmem:[#allocation4 + $0x718] sm:$0xff]
    %v4353 = vld [vmem:[#allocation4 + $0x720] sm:$0xff]
    %v4354 = vld [vmem:[#allocation4 + $0x728] sm:$0xff]
    %v4355 = vld [vmem:[#allocation4 + $0x730] sm:$0xff]
    %v4356 = vld [vmem:[#allocation4 + $0x738] sm:$0xff]
    %v4357 = vld [vmem:[#allocation4 + $0x740] sm:$0xff]
    %v4358 = vld [vmem:[#allocation4 + $0x748] sm:$0xff]
    %v4359 = vld [vmem:[#allocation4 + $0x750] sm:$0xff]
    %v4360 = vld [vmem:[#allocation4 + $0x758] sm:$0xff]
    %v4361 = vld [vmem:[#allocation4 + $0x760] sm:$0xff]
    %v4362 = vld [vmem:[#allocation4 + $0x768] sm:$0xff]
    %v4363 = vld [vmem:[#allocation4 + $0x770] sm:$0xff]
    %v4364 = vld [vmem:[#allocation4 + $0x778] sm:$0xff]
    %v4365 = vld [vmem:[#allocation4 + $0x780] sm:$0xff]
    %v4366 = vld [vmem:[#allocation4 + $0x788] sm:$0xff]
    %v4367 = vld [vmem:[#allocation4 + $0x790] sm:$0xff]
    %v4368 = vld [vmem:[#allocation4 + $0x798] sm:$0xff]
    %v4369 = vld [vmem:[#allocation4 + $0x7a0] sm:$0xff]
    %v4370 = vld [vmem:[#allocation4 + $0x7a8] sm:$0xff]
    %v4371 = vld [vmem:[#allocation4 + $0x7b0] sm:$0xff]
    %v4372 = vld [vmem:[#allocation4 + $0x7b8] sm:$0xff]
    %v4373 = vld [vmem:[#allocation4 + $0x7c0] sm:$0xff]
    %v4374 = vld [vmem:[#allocation4 + $0x7c8] sm:$0xff]
    %v4375 = vld [vmem:[#allocation4 + $0x7d0] sm:$0xff]
    %v4376 = vld [vmem:[#allocation4 + $0x7d8] sm:$0xff]
    %v4377 = vld [vmem:[#allocation4 + $0x7e0] sm:$0xff]
    %v4378 = vld [vmem:[#allocation4 + $0x7e8] sm:$0xff]
    %v4379 = vld [vmem:[#allocation4 + $0x7f0] sm:$0xff]
    %v4380 = vld [vmem:[#allocation4 + $0x7f8] sm:$0xff]
    %v4637 = vunpack.c.l.b16 %v4125
    %v4638 = vunpack.c.h.b16 %v4125
    %v4639 = vunpack.c.l.b16 %v4126
    %v4640 = vunpack.c.h.b16 %v4126
    %v4641 = vunpack.c.l.b16 %v4127
    %v4642 = vunpack.c.h.b16 %v4127
    %v4643 = vunpack.c.l.b16 %v4128
    %v4644 = vunpack.c.h.b16 %v4128
    %v4645 = vunpack.c.l.b16 %v4129
    %v4646 = vunpack.c.h.b16 %v4129
    %v4647 = vunpack.c.l.b16 %v4130
    %v4648 = vunpack.c.h.b16 %v4130
    %v4649 = vunpack.c.l.b16 %v4131
    %v4650 = vunpack.c.h.b16 %v4131
    %v4651 = vunpack.c.l.b16 %v4132
    %v4652 = vunpack.c.h.b16 %v4132
    %v4653 = vunpack.c.l.b16 %v4133
    %v4654 = vunpack.c.h.b16 %v4133
    %v4655 = vunpack.c.l.b16 %v4134
    %v4656 = vunpack.c.h.b16 %v4134
    %v4657 = vunpack.c.l.b16 %v4135
    %v4658 = vunpack.c.h.b16 %v4135
    %v4659 = vunpack.c.l.b16 %v4136
    %v4660 = vunpack.c.h.b16 %v4136
    %v4661 = vunpack.c.l.b16 %v4137
    %v4662 = vunpack.c.h.b16 %v4137
    %v4663 = vunpack.c.l.b16 %v4138
    %v4664 = vunpack.c.h.b16 %v4138
    %v4665 = vunpack.c.l.b16 %v4139
    %v4666 = vunpack.c.h.b16 %v4139
    %v4667 = vunpack.c.l.b16 %v4140
    %v4668 = vunpack.c.h.b16 %v4140
    %v4669 = vunpack.c.l.b16 %v4141
    %v4670 = vunpack.c.h.b16 %v4141
    %v4671 = vunpack.c.l.b16 %v4142
    %v4672 = vunpack.c.h.b16 %v4142
    %v4673 = vunpack.c.l.b16 %v4143
    %v4674 = vunpack.c.h.b16 %v4143
    %v4675 = vunpack.c.l.b16 %v4144
    %v4676 = vunpack.c.h.b16 %v4144
    %v4677 = vunpack.c.l.b16 %v4145
    %v4678 = vunpack.c.h.b16 %v4145
    %v4679 = vunpack.c.l.b16 %v4146
    %v4680 = vunpack.c.h.b16 %v4146
    %v4681 = vunpack.c.l.b16 %v4147
    %v4682 = vunpack.c.h.b16 %v4147
    %v4683 = vunpack.c.l.b16 %v4148
    %v4684 = vunpack.c.h.b16 %v4148
    %v4685 = vunpack.c.l.b16 %v4149
    %v4686 = vunpack.c.h.b16 %v4149
    %v4687 = vunpack.c.l.b16 %v4150
    %v4688 = vunpack.c.h.b16 %v4150
    %v4689 = vunpack.c.l.b16 %v4151
    %v4690 = vunpack.c.h.b16 %v4151
    %v4691 = vunpack.c.l.b16 %v4152
    %v4692 = vunpack.c.h.b16 %v4152
    %v4693 = vunpack.c.l.b16 %v4153
    %v4694 = vunpack.c.h.b16 %v4153
    %v4695 = vunpack.c.l.b16 %v4154
    %v4696 = vunpack.c.h.b16 %v4154
    %v4697 = vunpack.c.l.b16 %v4155
    %v4698 = vunpack.c.h.b16 %v4155
    %v4699 = vunpack.c.l.b16 %v4156
    %v4700 = vunpack.c.h.b16 %v4156
    %v4701 = vunpack.c.l.b16 %v4157
    %v4702 = vunpack.c.h.b16 %v4157
    %v4703 = vunpack.c.l.b16 %v4158
    %v4704 = vunpack.c.h.b16 %v4158
    %v4705 = vunpack.c.l.b16 %v4159
    %v4706 = vunpack.c.h.b16 %v4159
    %v4707 = vunpack.c.l.b16 %v4160
    %v4708 = vunpack.c.h.b16 %v4160
    %v4709 = vunpack.c.l.b16 %v4161
    %v4710 = vunpack.c.h.b16 %v4161
    %v4711 = vunpack.c.l.b16 %v4162
    %v4712 = vunpack.c.h.b16 %v4162
    %v4713 = vunpack.c.l.b16 %v4163
    %v4714 = vunpack.c.h.b16 %v4163
    %v4715 = vunpack.c.l.b16 %v4164
    %v4716 = vunpack.c.h.b16 %v4164
    %v4717 = vunpack.c.l.b16 %v4165
    %v4718 = vunpack.c.h.b16 %v4165
    %v4719 = vunpack.c.l.b16 %v4166
    %v4720 = vunpack.c.h.b16 %v4166
    %v4721 = vunpack.c.l.b16 %v4167
    %v4722 = vunpack.c.h.b16 %v4167
    %v4723 = vunpack.c.l.b16 %v4168
    %v4724 = vunpack.c.h.b16 %v4168
    %v4725 = vunpack.c.l.b16 %v4169
    %v4726 = vunpack.c.h.b16 %v4169
    %v4727 = vunpack.c.l.b16 %v4170
    %v4728 = vunpack.c.h.b16 %v4170
    %v4729 = vunpack.c.l.b16 %v4171
    %v4730 = vunpack.c.h.b16 %v4171
    %v4731 = vunpack.c.l.b16 %v4172
    %v4732 = vunpack.c.h.b16 %v4172
    %v4733 = vunpack.c.l.b16 %v4173
    %v4734 = vunpack.c.h.b16 %v4173
    %v4735 = vunpack.c.l.b16 %v4174
    %v4736 = vunpack.c.h.b16 %v4174
    %v4737 = vunpack.c.l.b16 %v4175
    %v4738 = vunpack.c.h.b16 %v4175
    %v4739 = vunpack.c.l.b16 %v4176
    %v4740 = vunpack.c.h.b16 %v4176
    %v4741 = vunpack.c.l.b16 %v4177
    %v4742 = vunpack.c.h.b16 %v4177
    %v4743 = vunpack.c.l.b16 %v4178
    %v4744 = vunpack.c.h.b16 %v4178
    %v4745 = vunpack.c.l.b16 %v4179
    %v4746 = vunpack.c.h.b16 %v4179
    %v4747 = vunpack.c.l.b16 %v4180
    %v4748 = vunpack.c.h.b16 %v4180
    %v4749 = vunpack.c.l.b16 %v4181
    %v4750 = vunpack.c.h.b16 %v4181
    %v4751 = vunpack.c.l.b16 %v4182
    %v4752 = vunpack.c.h.b16 %v4182
    %v4753 = vunpack.c.l.b16 %v4183
    %v4754 = vunpack.c.h.b16 %v4183
    %v4755 = vunpack.c.l.b16 %v4184
    %v4756 = vunpack.c.h.b16 %v4184
    %v4757 = vunpack.c.l.b16 %v4185
    %v4758 = vunpack.c.h.b16 %v4185
    %v4759 = vunpack.c.l.b16 %v4186
    %v4760 = vunpack.c.h.b16 %v4186
    %v4761 = vunpack.c.l.b16 %v4187
    %v4762 = vunpack.c.h.b16 %v4187
    %v4763 = vunpack.c.l.b16 %v4188
    %v4764 = vunpack.c.h.b16 %v4188
    %v4765 = vunpack.c.l.b16 %v4189
    %v4766 = vunpack.c.h.b16 %v4189
    %v4767 = vunpack.c.l.b16 %v4190
    %v4768 = vunpack.c.h.b16 %v4190
    %v4769 = vunpack.c.l.b16 %v4191
    %v4770 = vunpack.c.h.b16 %v4191
    %v4771 = vunpack.c.l.b16 %v4192
    %v4772 = vunpack.c.h.b16 %v4192
    %v4773 = vunpack.c.l.b16 %v4193
    %v4774 = vunpack.c.h.b16 %v4193
    %v4775 = vunpack.c.l.b16 %v4194
    %v4776 = vunpack.c.h.b16 %v4194
    %v4777 = vunpack.c.l.b16 %v4195
    %v4778 = vunpack.c.h.b16 %v4195
    %v4779 = vunpack.c.l.b16 %v4196
    %v4780 = vunpack.c.h.b16 %v4196
    %v4781 = vunpack.c.l.b16 %v4197
    %v4782 = vunpack.c.h.b16 %v4197
    %v4783 = vunpack.c.l.b16 %v4198
    %v4784 = vunpack.c.h.b16 %v4198
    %v4785 = vunpack.c.l.b16 %v4199
    %v4786 = vunpack.c.h.b16 %v4199
    %v4787 = vunpack.c.l.b16 %v4200
    %v4788 = vunpack.c.h.b16 %v4200
    %v4789 = vunpack.c.l.b16 %v4201
    %v4790 = vunpack.c.h.b16 %v4201
    %v4791 = vunpack.c.l.b16 %v4202
    %v4792 = vunpack.c.h.b16 %v4202
    %v4793 = vunpack.c.l.b16 %v4203
    %v4794 = vunpack.c.h.b16 %v4203
    %v4795 = vunpack.c.l.b16 %v4204
    %v4796 = vunpack.c.h.b16 %v4204
    %v4797 = vunpack.c.l.b16 %v4205
    %v4798 = vunpack.c.h.b16 %v4205
    %v4799 = vunpack.c.l.b16 %v4206
    %v4800 = vunpack.c.h.b16 %v4206
    %v4801 = vunpack.c.l.b16 %v4207
    %v4802 = vunpack.c.h.b16 %v4207
    %v4803 = vunpack.c.l.b16 %v4208
    %v4804 = vunpack.c.h.b16 %v4208
    %v4805 = vunpack.c.l.b16 %v4209
    %v4806 = vunpack.c.h.b16 %v4209
    %v4807 = vunpack.c.l.b16 %v4210
    %v4808 = vunpack.c.h.b16 %v4210
    %v4809 = vunpack.c.l.b16 %v4211
    %v4810 = vunpack.c.h.b16 %v4211
    %v4811 = vunpack.c.l.b16 %v4212
    %v4812 = vunpack.c.h.b16 %v4212
    %v4813 = vunpack.c.l.b16 %v4213
    %v4814 = vunpack.c.h.b16 %v4213
    %v4815 = vunpack.c.l.b16 %v4214
    %v4816 = vunpack.c.h.b16 %v4214
    %v4817 = vunpack.c.l.b16 %v4215
    %v4818 = vunpack.c.h.b16 %v4215
    %v4819 = vunpack.c.l.b16 %v4216
    %v4820 = vunpack.c.h.b16 %v4216
    %v4821 = vunpack.c.l.b16 %v4217
    %v4822 = vunpack.c.h.b16 %v4217
    %v4823 = vunpack.c.l.b16 %v4218
    %v4824 = vunpack.c.h.b16 %v4218
    %v4825 = vunpack.c.l.b16 %v4219
    %v4826 = vunpack.c.h.b16 %v4219
    %v4827 = vunpack.c.l.b16 %v4220
    %v4828 = vunpack.c.h.b16 %v4220
    %v4829 = vunpack.c.l.b16 %v4221
    %v4830 = vunpack.c.h.b16 %v4221
    %v4831 = vunpack.c.l.b16 %v4222
    %v4832 = vunpack.c.h.b16 %v4222
    %v4833 = vunpack.c.l.b16 %v4223
    %v4834 = vunpack.c.h.b16 %v4223
    %v4835 = vunpack.c.l.b16 %v4224
    %v4836 = vunpack.c.h.b16 %v4224
    %v4837 = vunpack.c.l.b16 %v4225
    %v4838 = vunpack.c.h.b16 %v4225
    %v4839 = vunpack.c.l.b16 %v4226
    %v4840 = vunpack.c.h.b16 %v4226
    %v4841 = vunpack.c.l.b16 %v4227
    %v4842 = vunpack.c.h.b16 %v4227
    %v4843 = vunpack.c.l.b16 %v4228
    %v4844 = vunpack.c.h.b16 %v4228
    %v4845 = vunpack.c.l.b16 %v4229
    %v4846 = vunpack.c.h.b16 %v4229
    %v4847 = vunpack.c.l.b16 %v4230
    %v4848 = vunpack.c.h.b16 %v4230
    %v4849 = vunpack.c.l.b16 %v4231
    %v4850 = vunpack.c.h.b16 %v4231
    %v4851 = vunpack.c.l.b16 %v4232
    %v4852 = vunpack.c.h.b16 %v4232
    %v4853 = vunpack.c.l.b16 %v4233
    %v4854 = vunpack.c.h.b16 %v4233
    %v4855 = vunpack.c.l.b16 %v4234
    %v4856 = vunpack.c.h.b16 %v4234
    %v4857 = vunpack.c.l.b16 %v4235
    %v4858 = vunpack.c.h.b16 %v4235
    %v4859 = vunpack.c.l.b16 %v4236
    %v4860 = vunpack.c.h.b16 %v4236
    %v4861 = vunpack.c.l.b16 %v4237
    %v4862 = vunpack.c.h.b16 %v4237
    %v4863 = vunpack.c.l.b16 %v4238
    %v4864 = vunpack.c.h.b16 %v4238
    %v4865 = vunpack.c.l.b16 %v4239
    %v4866 = vunpack.c.h.b16 %v4239
    %v4867 = vunpack.c.l.b16 %v4240
    %v4868 = vunpack.c.h.b16 %v4240
    %v4869 = vunpack.c.l.b16 %v4241
    %v4870 = vunpack.c.h.b16 %v4241
    %v4871 = vunpack.c.l.b16 %v4242
    %v4872 = vunpack.c.h.b16 %v4242
    %v4873 = vunpack.c.l.b16 %v4243
    %v4874 = vunpack.c.h.b16 %v4243
    %v4875 = vunpack.c.l.b16 %v4244
    %v4876 = vunpack.c.h.b16 %v4244
    %v4877 = vunpack.c.l.b16 %v4245
    %v4878 = vunpack.c.h.b16 %v4245
    %v4879 = vunpack.c.l.b16 %v4246
    %v4880 = vunpack.c.h.b16 %v4246
    %v4881 = vunpack.c.l.b16 %v4247
    %v4882 = vunpack.c.h.b16 %v4247
    %v4883 = vunpack.c.l.b16 %v4248
    %v4884 = vunpack.c.h.b16 %v4248
    %v4885 = vunpack.c.l.b16 %v4249
    %v4886 = vunpack.c.h.b16 %v4249
    %v4887 = vunpack.c.l.b16 %v4250
    %v4888 = vunpack.c.h.b16 %v4250
    %v4889 = vunpack.c.l.b16 %v4251
    %v4890 = vunpack.c.h.b16 %v4251
    %v4891 = vunpack.c.l.b16 %v4252
    %v4892 = vunpack.c.h.b16 %v4252
    %v4893 = vunpack.c.l.b16 %v4253
    %v4894 = vunpack.c.h.b16 %v4253
    %v4895 = vunpack.c.l.b16 %v4254
    %v4896 = vunpack.c.h.b16 %v4254
    %v4897 = vunpack.c.l.b16 %v4255
    %v4898 = vunpack.c.h.b16 %v4255
    %v4899 = vunpack.c.l.b16 %v4256
    %v4900 = vunpack.c.h.b16 %v4256
    %v4901 = vunpack.c.l.b16 %v4257
    %v4902 = vunpack.c.h.b16 %v4257
    %v4903 = vunpack.c.l.b16 %v4258
    %v4904 = vunpack.c.h.b16 %v4258
    %v4905 = vunpack.c.l.b16 %v4259
    %v4906 = vunpack.c.h.b16 %v4259
    %v4907 = vunpack.c.l.b16 %v4260
    %v4908 = vunpack.c.h.b16 %v4260
    %v4909 = vunpack.c.l.b16 %v4261
    %v4910 = vunpack.c.h.b16 %v4261
    %v4911 = vunpack.c.l.b16 %v4262
    %v4912 = vunpack.c.h.b16 %v4262
    %v4913 = vunpack.c.l.b16 %v4263
    %v4914 = vunpack.c.h.b16 %v4263
    %v4915 = vunpack.c.l.b16 %v4264
    %v4916 = vunpack.c.h.b16 %v4264
    %v4917 = vunpack.c.l.b16 %v4265
    %v4918 = vunpack.c.h.b16 %v4265
    %v4919 = vunpack.c.l.b16 %v4266
    %v4920 = vunpack.c.h.b16 %v4266
    %v4921 = vunpack.c.l.b16 %v4267
    %v4922 = vunpack.c.h.b16 %v4267
    %v4923 = vunpack.c.l.b16 %v4268
    %v4924 = vunpack.c.h.b16 %v4268
    %v4925 = vunpack.c.l.b16 %v4269
    %v4926 = vunpack.c.h.b16 %v4269
    %v4927 = vunpack.c.l.b16 %v4270
    %v4928 = vunpack.c.h.b16 %v4270
    %v4929 = vunpack.c.l.b16 %v4271
    %v4930 = vunpack.c.h.b16 %v4271
    %v4931 = vunpack.c.l.b16 %v4272
    %v4932 = vunpack.c.h.b16 %v4272
    %v4933 = vunpack.c.l.b16 %v4273
    %v4934 = vunpack.c.h.b16 %v4273
    %v4935 = vunpack.c.l.b16 %v4274
    %v4936 = vunpack.c.h.b16 %v4274
    %v4937 = vunpack.c.l.b16 %v4275
    %v4938 = vunpack.c.h.b16 %v4275
    %v4939 = vunpack.c.l.b16 %v4276
    %v4940 = vunpack.c.h.b16 %v4276
    %v4941 = vunpack.c.l.b16 %v4277
    %v4942 = vunpack.c.h.b16 %v4277
    %v4943 = vunpack.c.l.b16 %v4278
    %v4944 = vunpack.c.h.b16 %v4278
    %v4945 = vunpack.c.l.b16 %v4279
    %v4946 = vunpack.c.h.b16 %v4279
    %v4947 = vunpack.c.l.b16 %v4280
    %v4948 = vunpack.c.h.b16 %v4280
    %v4949 = vunpack.c.l.b16 %v4281
    %v4950 = vunpack.c.h.b16 %v4281
    %v4951 = vunpack.c.l.b16 %v4282
    %v4952 = vunpack.c.h.b16 %v4282
    %v4953 = vunpack.c.l.b16 %v4283
    %v4954 = vunpack.c.h.b16 %v4283
    %v4955 = vunpack.c.l.b16 %v4284
    %v4956 = vunpack.c.h.b16 %v4284
    %v4957 = vunpack.c.l.b16 %v4285
    %v4958 = vunpack.c.h.b16 %v4285
    %v4959 = vunpack.c.l.b16 %v4286
    %v4960 = vunpack.c.h.b16 %v4286
    %v4961 = vunpack.c.l.b16 %v4287
    %v4962 = vunpack.c.h.b16 %v4287
    %v4963 = vunpack.c.l.b16 %v4288
    %v4964 = vunpack.c.h.b16 %v4288
    %v4965 = vunpack.c.l.b16 %v4289
    %v4966 = vunpack.c.h.b16 %v4289
    %v4967 = vunpack.c.l.b16 %v4290
    %v4968 = vunpack.c.h.b16 %v4290
    %v4969 = vunpack.c.l.b16 %v4291
    %v4970 = vunpack.c.h.b16 %v4291
    %v4971 = vunpack.c.l.b16 %v4292
    %v4972 = vunpack.c.h.b16 %v4292
    %v4973 = vunpack.c.l.b16 %v4293
    %v4974 = vunpack.c.h.b16 %v4293
    %v4975 = vunpack.c.l.b16 %v4294
    %v4976 = vunpack.c.h.b16 %v4294
    %v4977 = vunpack.c.l.b16 %v4295
    %v4978 = vunpack.c.h.b16 %v4295
    %v4979 = vunpack.c.l.b16 %v4296
    %v4980 = vunpack.c.h.b16 %v4296
    %v4981 = vunpack.c.l.b16 %v4297
    %v4982 = vunpack.c.h.b16 %v4297
    %v4983 = vunpack.c.l.b16 %v4298
    %v4984 = vunpack.c.h.b16 %v4298
    %v4985 = vunpack.c.l.b16 %v4299
    %v4986 = vunpack.c.h.b16 %v4299
    %v4987 = vunpack.c.l.b16 %v4300
    %v4988 = vunpack.c.h.b16 %v4300
    %v4989 = vunpack.c.l.b16 %v4301
    %v4990 = vunpack.c.h.b16 %v4301
    %v4991 = vunpack.c.l.b16 %v4302
    %v4992 = vunpack.c.h.b16 %v4302
    %v4993 = vunpack.c.l.b16 %v4303
    %v4994 = vunpack.c.h.b16 %v4303
    %v4995 = vunpack.c.l.b16 %v4304
    %v4996 = vunpack.c.h.b16 %v4304
    %v4997 = vunpack.c.l.b16 %v4305
    %v4998 = vunpack.c.h.b16 %v4305
    %v4999 = vunpack.c.l.b16 %v4306
    %v5000 = vunpack.c.h.b16 %v4306
    %v5001 = vunpack.c.l.b16 %v4307
    %v5002 = vunpack.c.h.b16 %v4307
    %v5003 = vunpack.c.l.b16 %v4308
    %v5004 = vunpack.c.h.b16 %v4308
    %v5005 = vunpack.c.l.b16 %v4309
    %v5006 = vunpack.c.h.b16 %v4309
    %v5007 = vunpack.c.l.b16 %v4310
    %v5008 = vunpack.c.h.b16 %v4310
    %v5009 = vunpack.c.l.b16 %v4311
    %v5010 = vunpack.c.h.b16 %v4311
    %v5011 = vunpack.c.l.b16 %v4312
    %v5012 = vunpack.c.h.b16 %v4312
    %v5013 = vunpack.c.l.b16 %v4313
    %v5014 = vunpack.c.h.b16 %v4313
    %v5015 = vunpack.c.l.b16 %v4314
    %v5016 = vunpack.c.h.b16 %v4314
    %v5017 = vunpack.c.l.b16 %v4315
    %v5018 = vunpack.c.h.b16 %v4315
    %v5019 = vunpack.c.l.b16 %v4316
    %v5020 = vunpack.c.h.b16 %v4316
    %v5021 = vunpack.c.l.b16 %v4317
    %v5022 = vunpack.c.h.b16 %v4317
    %v5023 = vunpack.c.l.b16 %v4318
    %v5024 = vunpack.c.h.b16 %v4318
    %v5025 = vunpack.c.l.b16 %v4319
    %v5026 = vunpack.c.h.b16 %v4319
    %v5027 = vunpack.c.l.b16 %v4320
    %v5028 = vunpack.c.h.b16 %v4320
    %v5029 = vunpack.c.l.b16 %v4321
    %v5030 = vunpack.c.h.b16 %v4321
    %v5031 = vunpack.c.l.b16 %v4322
    %v5032 = vunpack.c.h.b16 %v4322
    %v5033 = vunpack.c.l.b16 %v4323
    %v5034 = vunpack.c.h.b16 %v4323
    %v5035 = vunpack.c.l.b16 %v4324
    %v5036 = vunpack.c.h.b16 %v4324
    %v5037 = vunpack.c.l.b16 %v4325
    %v5038 = vunpack.c.h.b16 %v4325
    %v5039 = vunpack.c.l.b16 %v4326
    %v5040 = vunpack.c.h.b16 %v4326
    %v5041 = vunpack.c.l.b16 %v4327
    %v5042 = vunpack.c.h.b16 %v4327
    %v5043 = vunpack.c.l.b16 %v4328
    %v5044 = vunpack.c.h.b16 %v4328
    %v5045 = vunpack.c.l.b16 %v4329
    %v5046 = vunpack.c.h.b16 %v4329
    %v5047 = vunpack.c.l.b16 %v4330
    %v5048 = vunpack.c.h.b16 %v4330
    %v5049 = vunpack.c.l.b16 %v4331
    %v5050 = vunpack.c.h.b16 %v4331
    %v5051 = vunpack.c.l.b16 %v4332
    %v5052 = vunpack.c.h.b16 %v4332
    %v5053 = vunpack.c.l.b16 %v4333
    %v5054 = vunpack.c.h.b16 %v4333
    %v5055 = vunpack.c.l.b16 %v4334
    %v5056 = vunpack.c.h.b16 %v4334
    %v5057 = vunpack.c.l.b16 %v4335
    %v5058 = vunpack.c.h.b16 %v4335
    %v5059 = vunpack.c.l.b16 %v4336
    %v5060 = vunpack.c.h.b16 %v4336
    %v5061 = vunpack.c.l.b16 %v4337
    %v5062 = vunpack.c.h.b16 %v4337
    %v5063 = vunpack.c.l.b16 %v4338
    %v5064 = vunpack.c.h.b16 %v4338
    %v5065 = vunpack.c.l.b16 %v4339
    %v5066 = vunpack.c.h.b16 %v4339
    %v5067 = vunpack.c.l.b16 %v4340
    %v5068 = vunpack.c.h.b16 %v4340
    %v5069 = vunpack.c.l.b16 %v4341
    %v5070 = vunpack.c.h.b16 %v4341
    %v5071 = vunpack.c.l.b16 %v4342
    %v5072 = vunpack.c.h.b16 %v4342
    %v5073 = vunpack.c.l.b16 %v4343
    %v5074 = vunpack.c.h.b16 %v4343
    %v5075 = vunpack.c.l.b16 %v4344
    %v5076 = vunpack.c.h.b16 %v4344
    %v5077 = vunpack.c.l.b16 %v4345
    %v5078 = vunpack.c.h.b16 %v4345
    %v5079 = vunpack.c.l.b16 %v4346
    %v5080 = vunpack.c.h.b16 %v4346
    %v5081 = vunpack.c.l.b16 %v4347
    %v5082 = vunpack.c.h.b16 %v4347
    %v5083 = vunpack.c.l.b16 %v4348
    %v5084 = vunpack.c.h.b16 %v4348
    %v5085 = vunpack.c.l.b16 %v4349
    %v5086 = vunpack.c.h.b16 %v4349
    %v5087 = vunpack.c.l.b16 %v4350
    %v5088 = vunpack.c.h.b16 %v4350
    %v5089 = vunpack.c.l.b16 %v4351
    %v5090 = vunpack.c.h.b16 %v4351
    %v5091 = vunpack.c.l.b16 %v4352
    %v5092 = vunpack.c.h.b16 %v4352
    %v5093 = vunpack.c.l.b16 %v4353
    %v5094 = vunpack.c.h.b16 %v4353
    %v5095 = vunpack.c.l.b16 %v4354
    %v5096 = vunpack.c.h.b16 %v4354
    %v5097 = vunpack.c.l.b16 %v4355
    %v5098 = vunpack.c.h.b16 %v4355
    %v5099 = vunpack.c.l.b16 %v4356
    %v5100 = vunpack.c.h.b16 %v4356
    %v5101 = vunpack.c.l.b16 %v4357
    %v5102 = vunpack.c.h.b16 %v4357
    %v5103 = vunpack.c.l.b16 %v4358
    %v5104 = vunpack.c.h.b16 %v4358
    %v5105 = vunpack.c.l.b16 %v4359
    %v5106 = vunpack.c.h.b16 %v4359
    %v5107 = vunpack.c.l.b16 %v4360
    %v5108 = vunpack.c.h.b16 %v4360
    %v5109 = vunpack.c.l.b16 %v4361
    %v5110 = vunpack.c.h.b16 %v4361
    %v5111 = vunpack.c.l.b16 %v4362
    %v5112 = vunpack.c.h.b16 %v4362
    %v5113 = vunpack.c.l.b16 %v4363
    %v5114 = vunpack.c.h.b16 %v4363
    %v5115 = vunpack.c.l.b16 %v4364
    %v5116 = vunpack.c.h.b16 %v4364
    %v5117 = vunpack.c.l.b16 %v4365
    %v5118 = vunpack.c.h.b16 %v4365
    %v5119 = vunpack.c.l.b16 %v4366
    %v5120 = vunpack.c.h.b16 %v4366
    %v5121 = vunpack.c.l.b16 %v4367
    %v5122 = vunpack.c.h.b16 %v4367
    %v5123 = vunpack.c.l.b16 %v4368
    %v5124 = vunpack.c.h.b16 %v4368
    %v5125 = vunpack.c.l.b16 %v4369
    %v5126 = vunpack.c.h.b16 %v4369
    %v5127 = vunpack.c.l.b16 %v4370
    %v5128 = vunpack.c.h.b16 %v4370
    %v5129 = vunpack.c.l.b16 %v4371
    %v5130 = vunpack.c.h.b16 %v4371
    %v5131 = vunpack.c.l.b16 %v4372
    %v5132 = vunpack.c.h.b16 %v4372
    %v5133 = vunpack.c.l.b16 %v4373
    %v5134 = vunpack.c.h.b16 %v4373
    %v5135 = vunpack.c.l.b16 %v4374
    %v5136 = vunpack.c.h.b16 %v4374
    %v5137 = vunpack.c.l.b16 %v4375
    %v5138 = vunpack.c.h.b16 %v4375
    %v5139 = vunpack.c.l.b16 %v4376
    %v5140 = vunpack.c.h.b16 %v4376
    %v5141 = vunpack.c.l.b16 %v4377
    %v5142 = vunpack.c.h.b16 %v4377
    %v5143 = vunpack.c.l.b16 %v4378
    %v5144 = vunpack.c.h.b16 %v4378
    %v5145 = vunpack.c.l.b16 %v4379
    %v5146 = vunpack.c.h.b16 %v4379
    %v5147 = vunpack.c.l.b16 %v4380
    %v5148 = vunpack.c.h.b16 %v4380
    %v5149 = vpack.c.b16 %v4641, %v4637
    %v5150 = vpack.c.b16 %v4642, %v4638
    %v5151 = vpack.c.b16 %v4643, %v4639
    %v5152 = vpack.c.b16 %v4644, %v4640
    %v5153 = vpack.c.b16 %v4649, %v4645
    %v5154 = vpack.c.b16 %v4650, %v4646
    %v5155 = vpack.c.b16 %v4651, %v4647
    %v5156 = vpack.c.b16 %v4652, %v4648
    %v5157 = vpack.c.b16 %v4657, %v4653
    %v5158 = vpack.c.b16 %v4658, %v4654
    %v5159 = vpack.c.b16 %v4659, %v4655
    %v5160 = vpack.c.b16 %v4660, %v4656
    %v5161 = vpack.c.b16 %v4665, %v4661
    %v5162 = vpack.c.b16 %v4666, %v4662
    %v5163 = vpack.c.b16 %v4667, %v4663
    %v5164 = vpack.c.b16 %v4668, %v4664
    %v5165 = vpack.c.b16 %v4673, %v4669
    %v5166 = vpack.c.b16 %v4674, %v4670
    %v5167 = vpack.c.b16 %v4675, %v4671
    %v5168 = vpack.c.b16 %v4676, %v4672
    %v5169 = vpack.c.b16 %v4681, %v4677
    %v5170 = vpack.c.b16 %v4682, %v4678
    %v5171 = vpack.c.b16 %v4683, %v4679
    %v5172 = vpack.c.b16 %v4684, %v4680
    %v5173 = vpack.c.b16 %v4689, %v4685
    %v5174 = vpack.c.b16 %v4690, %v4686
    %v5175 = vpack.c.b16 %v4691, %v4687
    %v5176 = vpack.c.b16 %v4692, %v4688
    %v5177 = vpack.c.b16 %v4697, %v4693
    %v5178 = vpack.c.b16 %v4698, %v4694
    %v5179 = vpack.c.b16 %v4699, %v4695
    %v5180 = vpack.c.b16 %v4700, %v4696
    %v5181 = vpack.c.b16 %v4705, %v4701
    %v5182 = vpack.c.b16 %v4706, %v4702
    %v5183 = vpack.c.b16 %v4707, %v4703
    %v5184 = vpack.c.b16 %v4708, %v4704
    %v5185 = vpack.c.b16 %v4713, %v4709
    %v5186 = vpack.c.b16 %v4714, %v4710
    %v5187 = vpack.c.b16 %v4715, %v4711
    %v5188 = vpack.c.b16 %v4716, %v4712
    %v5189 = vpack.c.b16 %v4721, %v4717
    %v5190 = vpack.c.b16 %v4722, %v4718
    %v5191 = vpack.c.b16 %v4723, %v4719
    %v5192 = vpack.c.b16 %v4724, %v4720
    %v5193 = vpack.c.b16 %v4729, %v4725
    %v5194 = vpack.c.b16 %v4730, %v4726
    %v5195 = vpack.c.b16 %v4731, %v4727
    %v5196 = vpack.c.b16 %v4732, %v4728
    %v5197 = vpack.c.b16 %v4737, %v4733
    %v5198 = vpack.c.b16 %v4738, %v4734
    %v5199 = vpack.c.b16 %v4739, %v4735
    %v5200 = vpack.c.b16 %v4740, %v4736
    %v5201 = vpack.c.b16 %v4745, %v4741
    %v5202 = vpack.c.b16 %v4746, %v4742
    %v5203 = vpack.c.b16 %v4747, %v4743
    %v5204 = vpack.c.b16 %v4748, %v4744
    %v5205 = vpack.c.b16 %v4753, %v4749
    %v5206 = vpack.c.b16 %v4754, %v4750
    %v5207 = vpack.c.b16 %v4755, %v4751
    %v5208 = vpack.c.b16 %v4756, %v4752
    %v5209 = vpack.c.b16 %v4761, %v4757
    %v5210 = vpack.c.b16 %v4762, %v4758
    %v5211 = vpack.c.b16 %v4763, %v4759
    %v5212 = vpack.c.b16 %v4764, %v4760
    %v5213 = vpack.c.b16 %v4769, %v4765
    %v5214 = vpack.c.b16 %v4770, %v4766
    %v5215 = vpack.c.b16 %v4771, %v4767
    %v5216 = vpack.c.b16 %v4772, %v4768
    %v5217 = vpack.c.b16 %v4777, %v4773
    %v5218 = vpack.c.b16 %v4778, %v4774
    %v5219 = vpack.c.b16 %v4779, %v4775
    %v5220 = vpack.c.b16 %v4780, %v4776
    %v5221 = vpack.c.b16 %v4785, %v4781
    %v5222 = vpack.c.b16 %v4786, %v4782
    %v5223 = vpack.c.b16 %v4787, %v4783
    %v5224 = vpack.c.b16 %v4788, %v4784
    %v5225 = vpack.c.b16 %v4793, %v4789
    %v5226 = vpack.c.b16 %v4794, %v4790
    %v5227 = vpack.c.b16 %v4795, %v4791
    %v5228 = vpack.c.b16 %v4796, %v4792
    %v5229 = vpack.c.b16 %v4801, %v4797
    %v5230 = vpack.c.b16 %v4802, %v4798
    %v5231 = vpack.c.b16 %v4803, %v4799
    %v5232 = vpack.c.b16 %v4804, %v4800
    %v5233 = vpack.c.b16 %v4809, %v4805
    %v5234 = vpack.c.b16 %v4810, %v4806
    %v5235 = vpack.c.b16 %v4811, %v4807
    %v5236 = vpack.c.b16 %v4812, %v4808
    %v5237 = vpack.c.b16 %v4817, %v4813
    %v5238 = vpack.c.b16 %v4818, %v4814
    %v5239 = vpack.c.b16 %v4819, %v4815
    %v5240 = vpack.c.b16 %v4820, %v4816
    %v5241 = vpack.c.b16 %v4825, %v4821
    %v5242 = vpack.c.b16 %v4826, %v4822
    %v5243 = vpack.c.b16 %v4827, %v4823
    %v5244 = vpack.c.b16 %v4828, %v4824
    %v5245 = vpack.c.b16 %v4833, %v4829
    %v5246 = vpack.c.b16 %v4834, %v4830
    %v5247 = vpack.c.b16 %v4835, %v4831
    %v5248 = vpack.c.b16 %v4836, %v4832
    %v5249 = vpack.c.b16 %v4841, %v4837
    %v5250 = vpack.c.b16 %v4842, %v4838
    %v5251 = vpack.c.b16 %v4843, %v4839
    %v5252 = vpack.c.b16 %v4844, %v4840
    %v5253 = vpack.c.b16 %v4849, %v4845
    %v5254 = vpack.c.b16 %v4850, %v4846
    %v5255 = vpack.c.b16 %v4851, %v4847
    %v5256 = vpack.c.b16 %v4852, %v4848
    %v5257 = vpack.c.b16 %v4857, %v4853
    %v5258 = vpack.c.b16 %v4858, %v4854
    %v5259 = vpack.c.b16 %v4859, %v4855
    %v5260 = vpack.c.b16 %v4860, %v4856
    %v5261 = vpack.c.b16 %v4865, %v4861
    %v5262 = vpack.c.b16 %v4866, %v4862
    %v5263 = vpack.c.b16 %v4867, %v4863
    %v5264 = vpack.c.b16 %v4868, %v4864
    %v5265 = vpack.c.b16 %v4873, %v4869
    %v5266 = vpack.c.b16 %v4874, %v4870
    %v5267 = vpack.c.b16 %v4875, %v4871
    %v5268 = vpack.c.b16 %v4876, %v4872
    %v5269 = vpack.c.b16 %v4881, %v4877
    %v5270 = vpack.c.b16 %v4882, %v4878
    %v5271 = vpack.c.b16 %v4883, %v4879
    %v5272 = vpack.c.b16 %v4884, %v4880
    %v5273 = vpack.c.b16 %v4889, %v4885
    %v5274 = vpack.c.b16 %v4890, %v4886
    %v5275 = vpack.c.b16 %v4891, %v4887
    %v5276 = vpack.c.b16 %v4892, %v4888
    %v5277 = vpack.c.b16 %v4897, %v4893
    %v5278 = vpack.c.b16 %v4898, %v4894
    %v5279 = vpack.c.b16 %v4899, %v4895
    %v5280 = vpack.c.b16 %v4900, %v4896
    %v5281 = vpack.c.b16 %v4905, %v4901
    %v5282 = vpack.c.b16 %v4906, %v4902
    %v5283 = vpack.c.b16 %v4907, %v4903
    %v5284 = vpack.c.b16 %v4908, %v4904
    %v5285 = vpack.c.b16 %v4913, %v4909
    %v5286 = vpack.c.b16 %v4914, %v4910
    %v5287 = vpack.c.b16 %v4915, %v4911
    %v5288 = vpack.c.b16 %v4916, %v4912
    %v5289 = vpack.c.b16 %v4921, %v4917
    %v5290 = vpack.c.b16 %v4922, %v4918
    %v5291 = vpack.c.b16 %v4923, %v4919
    %v5292 = vpack.c.b16 %v4924, %v4920
    %v5293 = vpack.c.b16 %v4929, %v4925
    %v5294 = vpack.c.b16 %v4930, %v4926
    %v5295 = vpack.c.b16 %v4931, %v4927
    %v5296 = vpack.c.b16 %v4932, %v4928
    %v5297 = vpack.c.b16 %v4937, %v4933
    %v5298 = vpack.c.b16 %v4938, %v4934
    %v5299 = vpack.c.b16 %v4939, %v4935
    %v5300 = vpack.c.b16 %v4940, %v4936
    %v5301 = vpack.c.b16 %v4945, %v4941
    %v5302 = vpack.c.b16 %v4946, %v4942
    %v5303 = vpack.c.b16 %v4947, %v4943
    %v5304 = vpack.c.b16 %v4948, %v4944
    %v5305 = vpack.c.b16 %v4953, %v4949
    %v5306 = vpack.c.b16 %v4954, %v4950
    %v5307 = vpack.c.b16 %v4955, %v4951
    %v5308 = vpack.c.b16 %v4956, %v4952
    %v5309 = vpack.c.b16 %v4961, %v4957
    %v5310 = vpack.c.b16 %v4962, %v4958
    %v5311 = vpack.c.b16 %v4963, %v4959
    %v5312 = vpack.c.b16 %v4964, %v4960
    %v5313 = vpack.c.b16 %v4969, %v4965
    %v5314 = vpack.c.b16 %v4970, %v4966
    %v5315 = vpack.c.b16 %v4971, %v4967
    %v5316 = vpack.c.b16 %v4972, %v4968
    %v5317 = vpack.c.b16 %v4977, %v4973
    %v5318 = vpack.c.b16 %v4978, %v4974
    %v5319 = vpack.c.b16 %v4979, %v4975
    %v5320 = vpack.c.b16 %v4980, %v4976
    %v5321 = vpack.c.b16 %v4985, %v4981
    %v5322 = vpack.c.b16 %v4986, %v4982
    %v5323 = vpack.c.b16 %v4987, %v4983
    %v5324 = vpack.c.b16 %v4988, %v4984
    %v5325 = vpack.c.b16 %v4993, %v4989
    %v5326 = vpack.c.b16 %v4994, %v4990
    %v5327 = vpack.c.b16 %v4995, %v4991
    %v5328 = vpack.c.b16 %v4996, %v4992
    %v5329 = vpack.c.b16 %v5001, %v4997
    %v5330 = vpack.c.b16 %v5002, %v4998
    %v5331 = vpack.c.b16 %v5003, %v4999
    %v5332 = vpack.c.b16 %v5004, %v5000
    %v5333 = vpack.c.b16 %v5009, %v5005
    %v5334 = vpack.c.b16 %v5010, %v5006
    %v5335 = vpack.c.b16 %v5011, %v5007
    %v5336 = vpack.c.b16 %v5012, %v5008
    %v5337 = vpack.c.b16 %v5017, %v5013
    %v5338 = vpack.c.b16 %v5018, %v5014
    %v5339 = vpack.c.b16 %v5019, %v5015
    %v5340 = vpack.c.b16 %v5020, %v5016
    %v5341 = vpack.c.b16 %v5025, %v5021
    %v5342 = vpack.c.b16 %v5026, %v5022
    %v5343 = vpack.c.b16 %v5027, %v5023
    %v5344 = vpack.c.b16 %v5028, %v5024
    %v5345 = vpack.c.b16 %v5033, %v5029
    %v5346 = vpack.c.b16 %v5034, %v5030
    %v5347 = vpack.c.b16 %v5035, %v5031
    %v5348 = vpack.c.b16 %v5036, %v5032
    %v5349 = vpack.c.b16 %v5041, %v5037
    %v5350 = vpack.c.b16 %v5042, %v5038
    %v5351 = vpack.c.b16 %v5043, %v5039
    %v5352 = vpack.c.b16 %v5044, %v5040
    %v5353 = vpack.c.b16 %v5049, %v5045
    %v5354 = vpack.c.b16 %v5050, %v5046
    %v5355 = vpack.c.b16 %v5051, %v5047
    %v5356 = vpack.c.b16 %v5052, %v5048
    %v5357 = vpack.c.b16 %v5057, %v5053
    %v5358 = vpack.c.b16 %v5058, %v5054
    %v5359 = vpack.c.b16 %v5059, %v5055
    %v5360 = vpack.c.b16 %v5060, %v5056
    %v5361 = vpack.c.b16 %v5065, %v5061
    %v5362 = vpack.c.b16 %v5066, %v5062
    %v5363 = vpack.c.b16 %v5067, %v5063
    %v5364 = vpack.c.b16 %v5068, %v5064
    %v5365 = vpack.c.b16 %v5073, %v5069
    %v5366 = vpack.c.b16 %v5074, %v5070
    %v5367 = vpack.c.b16 %v5075, %v5071
    %v5368 = vpack.c.b16 %v5076, %v5072
    %v5369 = vpack.c.b16 %v5081, %v5077
    %v5370 = vpack.c.b16 %v5082, %v5078
    %v5371 = vpack.c.b16 %v5083, %v5079
    %v5372 = vpack.c.b16 %v5084, %v5080
    %v5373 = vpack.c.b16 %v5089, %v5085
    %v5374 = vpack.c.b16 %v5090, %v5086
    %v5375 = vpack.c.b16 %v5091, %v5087
    %v5376 = vpack.c.b16 %v5092, %v5088
    %v5377 = vpack.c.b16 %v5097, %v5093
    %v5378 = vpack.c.b16 %v5098, %v5094
    %v5379 = vpack.c.b16 %v5099, %v5095
    %v5380 = vpack.c.b16 %v5100, %v5096
    %v5381 = vpack.c.b16 %v5105, %v5101
    %v5382 = vpack.c.b16 %v5106, %v5102
    %v5383 = vpack.c.b16 %v5107, %v5103
    %v5384 = vpack.c.b16 %v5108, %v5104
    %v5385 = vpack.c.b16 %v5113, %v5109
    %v5386 = vpack.c.b16 %v5114, %v5110
    %v5387 = vpack.c.b16 %v5115, %v5111
    %v5388 = vpack.c.b16 %v5116, %v5112
    %v5389 = vpack.c.b16 %v5121, %v5117
    %v5390 = vpack.c.b16 %v5122, %v5118
    %v5391 = vpack.c.b16 %v5123, %v5119
    %v5392 = vpack.c.b16 %v5124, %v5120
    %v5393 = vpack.c.b16 %v5129, %v5125
    %v5394 = vpack.c.b16 %v5130, %v5126
    %v5395 = vpack.c.b16 %v5131, %v5127
    %v5396 = vpack.c.b16 %v5132, %v5128
    %v5397 = vpack.c.b16 %v5137, %v5133
    %v5398 = vpack.c.b16 %v5138, %v5134
    %v5399 = vpack.c.b16 %v5139, %v5135
    %v5400 = vpack.c.b16 %v5140, %v5136
    %v5401 = vpack.c.b16 %v5145, %v5141
    %v5402 = vpack.c.b16 %v5146, %v5142
    %v5403 = vpack.c.b16 %v5147, %v5143
    %v5404 = vpack.c.b16 %v5148, %v5144
    %5661 = vmatprep.subr.bf16.mxu0 %v5150
    %5662 = vmatpush1.bf16.msra.mxu0 %v5149
    %5663 = vmatprep.subr.bf16.mxu0 %v5154
    %5664 = vmatpush1.bf16.msra.mxu0 %v5153
    %5665 = vmatprep.subr.bf16.mxu0 %v5158
    %5666 = vmatpush1.bf16.msra.mxu0 %v5157
    %5667 = vmatprep.subr.bf16.mxu0 %v5162
    %5668 = vmatpush1.bf16.msra.mxu0 %v5161
    %5669 = vmatprep.subr.bf16.mxu0 %v5166
    %5670 = vmatpush1.bf16.msra.mxu0 %v5165
    %5671 = vmatprep.subr.bf16.mxu0 %v5170
    %5672 = vmatpush1.bf16.msra.mxu0 %v5169
    %5673 = vmatprep.subr.bf16.mxu0 %v5174
    %5674 = vmatpush1.bf16.msra.mxu0 %v5173
    %5675 = vmatprep.subr.bf16.mxu0 %v5178
    %5676 = vmatpush1.bf16.msra.mxu0 %v5177
    %5677 = vmatprep.subr.bf16.mxu0 %v5182
    %5678 = vmatpush1.bf16.msra.mxu0 %v5181
    %5679 = vmatprep.subr.bf16.mxu0 %v5186
    %5680 = vmatpush1.bf16.msra.mxu0 %v5185
    %5681 = vmatprep.subr.bf16.mxu0 %v5190
    %5682 = vmatpush1.bf16.msra.mxu0 %v5189
    %5683 = vmatprep.subr.bf16.mxu0 %v5194
    %5684 = vmatpush1.bf16.msra.mxu0 %v5193
    %5685 = vmatprep.subr.bf16.mxu0 %v5198
    %5686 = vmatpush1.bf16.msra.mxu0 %v5197
    %5687 = vmatprep.subr.bf16.mxu0 %v5202
    %5688 = vmatpush1.bf16.msra.mxu0 %v5201
    %5689 = vmatprep.subr.bf16.mxu0 %v5206
    %5690 = vmatpush1.bf16.msra.mxu0 %v5205
    %5691 = vmatprep.subr.bf16.mxu0 %v5210
    %5692 = vmatpush1.bf16.msra.mxu0 %v5209
    %5693 = vmatprep.mubr.bf16.mxu0 %v4090
    %5694 = vmatmul.mubr.bf16.gmra.mrb[0].mxu0 %v4089
    %v5695 = vpop.f32.mrb[0].mxu0
    %v5696 = vadd.f32 0.0, %v5695
    %v5697 = vpop.f32.mrb[0].mxu0
    %v5698 = vadd.f32 0.0, %v5697
    %v5699 = vpop.f32.mrb[0].mxu0
    %v5700 = vpop.f32.mrb[0].mxu0
    %5701 = vdwg.mxu0
    %5702 = vmatprep.subr.bf16.mxu0 %v5214
    %5703 = vmatpush1.bf16.msra.mxu0 %v5213
    %5704 = vmatprep.subr.bf16.mxu0 %v5218
    %5705 = vmatpush1.bf16.msra.mxu0 %v5217
    %5706 = vmatprep.subr.bf16.mxu0 %v5222
    %5707 = vmatpush1.bf16.msra.mxu0 %v5221
    %5708 = vmatprep.subr.bf16.mxu0 %v5226
    %5709 = vmatpush1.bf16.msra.mxu0 %v5225
    %5710 = vmatprep.subr.bf16.mxu0 %v5230
    %5711 = vmatpush1.bf16.msra.mxu0 %v5229
    %5712 = vmatprep.subr.bf16.mxu0 %v5234
    %5713 = vmatpush1.bf16.msra.mxu0 %v5233
    %5714 = vmatprep.subr.bf16.mxu0 %v5238
    %5715 = vmatpush1.bf16.msra.mxu0 %v5237
    %5716 = vmatprep.subr.bf16.mxu0 %v5242
    %5717 = vmatpush1.bf16.msra.mxu0 %v5241
    %5718 = vmatprep.subr.bf16.mxu0 %v5246
    %5719 = vmatpush1.bf16.msra.mxu0 %v5245
    %5720 = vmatprep.subr.bf16.mxu0 %v5250
    %5721 = vmatpush1.bf16.msra.mxu0 %v5249
    %5722 = vmatprep.subr.bf16.mxu0 %v5254
    %5723 = vmatpush1.bf16.msra.mxu0 %v5253
    %5724 = vmatprep.subr.bf16.mxu0 %v5258
    %5725 = vmatpush1.bf16.msra.mxu0 %v5257
    %5726 = vmatprep.subr.bf16.mxu0 %v5262
    %5727 = vmatpush1.bf16.msra.mxu0 %v5261
    %5728 = vmatprep.subr.bf16.mxu0 %v5266
    %5729 = vmatpush1.bf16.msra.mxu0 %v5265
    %5730 = vmatprep.subr.bf16.mxu0 %v5270
    %5731 = vmatpush1.bf16.msra.mxu0 %v5269
    %5732 = vmatprep.subr.bf16.mxu0 %v5274
    %5733 = vmatpush1.bf16.msra.mxu0 %v5273
    %5734 = vmatprep.mubr.bf16.mxu0 %v4092
    %5735 = vmatmul.mubr.bf16.gmra.mrb[0].mxu0 %v4091
    %v5736 = vpop.f32.mrb[0].mxu0
    %v5737 = vadd.f32 %v5696, %v5736
    %v5738 = vpop.f32.mrb[0].mxu0
    %v5739 = vadd.f32 %v5698, %v5738
    %v5740 = vpop.f32.mrb[0].mxu0
    %v5741 = vpop.f32.mrb[0].mxu0
    %5742 = vdwg.mxu0
    %5743 = vmatprep.subr.bf16.mxu0 %v5278
    %5744 = vmatpush1.bf16.msra.mxu0 %v5277
    %5745 = vmatprep.subr.bf16.mxu0 %v5282
    %5746 = vmatpush1.bf16.msra.mxu0 %v5281
    %5747 = vmatprep.subr.bf16.mxu0 %v5286
    %5748 = vmatpush1.bf16.msra.mxu0 %v5285
    %5749 = vmatprep.subr.bf16.mxu0 %v5290
    %5750 = vmatpush1.bf16.msra.mxu0 %v5289
    %5751 = vmatprep.subr.bf16.mxu0 %v5294
    %5752 = vmatpush1.bf16.msra.mxu0 %v5293
    %5753 = vmatprep.subr.bf16.mxu0 %v5298
    %5754 = vmatpush1.bf16.msra.mxu0 %v5297
    %5755 = vmatprep.subr.bf16.mxu0 %v5302
    %5756 = vmatpush1.bf16.msra.mxu0 %v5301
    %5757 = vmatprep.subr.bf16.mxu0 %v5306
    %5758 = vmatpush1.bf16.msra.mxu0 %v5305
    %5759 = vmatprep.subr.bf16.mxu0 %v5310
    %5760 = vmatpush1.bf16.msra.mxu0 %v5309
    %5761 = vmatprep.subr.bf16.mxu0 %v5314
    %5762 = vmatpush1.bf16.msra.mxu0 %v5313
    %5763 = vmatprep.subr.bf16.mxu0 %v5318
    %5764 = vmatpush1.bf16.msra.mxu0 %v5317
    %5765 = vmatprep.subr.bf16.mxu0 %v5322
    %5766 = vmatpush1.bf16.msra.mxu0 %v5321
    %5767 = vmatprep.subr.bf16.mxu0 %v5326
    %5768 = vmatpush1.bf16.msra.mxu0 %v5325
    %5769 = vmatprep.subr.bf16.mxu0 %v5330
    %5770 = vmatpush1.bf16.msra.mxu0 %v5329
    %5771 = vmatprep.subr.bf16.mxu0 %v5334
    %5772 = vmatpush1.bf16.msra.mxu0 %v5333
    %5773 = vmatprep.subr.bf16.mxu0 %v5338
    %5774 = vmatpush1.bf16.msra.mxu0 %v5337
    %5775 = vmatprep.mubr.bf16.mxu0 %v4094
    %5776 = vmatmul.mubr.bf16.gmra.mrb[0].mxu0 %v4093
    %v5777 = vpop.f32.mrb[0].mxu0
    %v5778 = vadd.f32 %v5737, %v5777
    %v5779 = vpop.f32.mrb[0].mxu0
    %v5780 = vadd.f32 %v5739, %v5779
    %v5781 = vpop.f32.mrb[0].mxu0
    %v5782 = vpop.f32.mrb[0].mxu0
    %5783 = vdwg.mxu0
    %5784 = vmatprep.subr.bf16.mxu0 %v5342
    %5785 = vmatpush1.bf16.msra.mxu0 %v5341
    %5786 = vmatprep.subr.bf16.mxu0 %v5346
    %5787 = vmatpush1.bf16.msra.mxu0 %v5345
    %5788 = vmatprep.subr.bf16.mxu0 %v5350
    %5789 = vmatpush1.bf16.msra.mxu0 %v5349
    %5790 = vmatprep.subr.bf16.mxu0 %v5354
    %5791 = vmatpush1.bf16.msra.mxu0 %v5353
    %5792 = vmatprep.subr.bf16.mxu0 %v5358
    %5793 = vmatpush1.bf16.msra.mxu0 %v5357
    %5794 = vmatprep.subr.bf16.mxu0 %v5362
    %5795 = vmatpush1.bf16.msra.mxu0 %v5361
    %5796 = vmatprep.subr.bf16.mxu0 %v5366
    %5797 = vmatpush1.bf16.msra.mxu0 %v5365
    %5798 = vmatprep.subr.bf16.mxu0 %v5370
    %5799 = vmatpush1.bf16.msra.mxu0 %v5369
    %5800 = vmatprep.subr.bf16.mxu0 %v5374
    %5801 = vmatpush1.bf16.msra.mxu0 %v5373
    %5802 = vmatprep.subr.bf16.mxu0 %v5378
    %5803 = vmatpush1.bf16.msra.mxu0 %v5377
    %5804 = vmatprep.subr.bf16.mxu0 %v5382
    %5805 = vmatpush1.bf16.msra.mxu0 %v5381
    %5806 = vmatprep.subr.bf16.mxu0 %v5386
    %5807 = vmatpush1.bf16.msra.mxu0 %v5385
    %5808 = vmatprep.subr.bf16.mxu0 %v5390
    %5809 = vmatpush1.bf16.msra.mxu0 %v5389
    %5810 = vmatprep.subr.bf16.mxu0 %v5394
    %5811 = vmatpush1.bf16.msra.mxu0 %v5393
    %5812 = vmatprep.subr.bf16.mxu0 %v5398
    %5813 = vmatpush1.bf16.msra.mxu0 %v5397
    %5814 = vmatprep.subr.bf16.mxu0 %v5402
    %5815 = vmatpush1.bf16.msra.mxu0 %v5401
    %5816 = vmatprep.mubr.bf16.mxu0 %v4096
    %5817 = vmatmul.mubr.bf16.gmra.mrb[0].mxu0 %v4095
    %v5818 = vpop.f32.mrb[0].mxu0
    %v5819 = vadd.f32 %v5778, %v5818
    %v5820 = vpop.f32.mrb[0].mxu0
    %v5821 = vadd.f32 %v5780, %v5820
    %v5822 = vpop.f32.mrb[0].mxu0
    %v5823 = vpop.f32.mrb[0].mxu0
    %5824 = vdwg.mxu0
    %5825 = vmatprep.subr.bf16.mxu0 %v5152
    %5826 = vmatpush1.bf16.msra.mxu0 %v5151
    %5827 = vmatprep.subr.bf16.mxu0 %v5156
    %5828 = vmatpush1.bf16.msra.mxu0 %v5155
    %5829 = vmatprep.subr.bf16.mxu0 %v5160
    %5830 = vmatpush1.bf16.msra.mxu0 %v5159
    %5831 = vmatprep.subr.bf16.mxu0 %v5164
    %5832 = vmatpush1.bf16.msra.mxu0 %v5163
    %5833 = vmatprep.subr.bf16.mxu0 %v5168
    %5834 = vmatpush1.bf16.msra.mxu0 %v5167
    %5835 = vmatprep.subr.bf16.mxu0 %v5172
    %5836 = vmatpush1.bf16.msra.mxu0 %v5171
    %5837 = vmatprep.subr.bf16.mxu0 %v5176
    %5838 = vmatpush1.bf16.msra.mxu0 %v5175
    %5839 = vmatprep.subr.bf16.mxu0 %v5180
    %5840 = vmatpush1.bf16.msra.mxu0 %v5179
    %5841 = vmatprep.subr.bf16.mxu0 %v5184
    %5842 = vmatpush1.bf16.msra.mxu0 %v5183
    %5843 = vmatprep.subr.bf16.mxu0 %v5188
    %5844 = vmatpush1.bf16.msra.mxu0 %v5187
    %5845 = vmatprep.subr.bf16.mxu0 %v5192
    %5846 = vmatpush1.bf16.msra.mxu0 %v5191
    %5847 = vmatprep.subr.bf16.mxu0 %v5196
    %5848 = vmatpush1.bf16.msra.mxu0 %v5195
    %5849 = vmatprep.subr.bf16.mxu0 %v5200
    %5850 = vmatpush1.bf16.msra.mxu0 %v5199
    %5851 = vmatprep.subr.bf16.mxu0 %v5204
    %5852 = vmatpush1.bf16.msra.mxu0 %v5203
    %5853 = vmatprep.subr.bf16.mxu0 %v5208
    %5854 = vmatpush1.bf16.msra.mxu0 %v5207
    %5855 = vmatprep.subr.bf16.mxu0 %v5212
    %5856 = vmatpush1.bf16.msra.mxu0 %v5211
    %5857 = vmatprep.mubr.bf16.mxu0 %v4090
    %5858 = vmatmul.mubr.bf16.gmra.mrb[0].mxu0 %v4089
    %v5859 = vpop.f32.mrb[0].mxu0
    %v5860 = vadd.f32 0.0, %v5859
    %v5861 = vpop.f32.mrb[0].mxu0
    %v5862 = vadd.f32 0.0, %v5861
    %v5863 = vpop.f32.mrb[0].mxu0
    %v5864 = vpop.f32.mrb[0].mxu0
    %5865 = vdwg.mxu0
    %5866 = vmatprep.subr.bf16.mxu0 %v5216
    %5867 = vmatpush1.bf16.msra.mxu0 %v5215
    %5868 = vmatprep.subr.bf16.mxu0 %v5220
    %5869 = vmatpush1.bf16.msra.mxu0 %v5219
    %5870 = vmatprep.subr.bf16.mxu0 %v5224
    %5871 = vmatpush1.bf16.msra.mxu0 %v5223
    %5872 = vmatprep.subr.bf16.mxu0 %v5228
    %5873 = vmatpush1.bf16.msra.mxu0 %v5227
    %5874 = vmatprep.subr.bf16.mxu0 %v5232
    %5875 = vmatpush1.bf16.msra.mxu0 %v5231
    %5876 = vmatprep.subr.bf16.mxu0 %v5236
    %5877 = vmatpush1.bf16.msra.mxu0 %v5235
    %5878 = vmatprep.subr.bf16.mxu0 %v5240
    %5879 = vmatpush1.bf16.msra.mxu0 %v5239
    %5880 = vmatprep.subr.bf16.mxu0 %v5244
    %5881 = vmatpush1.bf16.msra.mxu0 %v5243
    %5882 = vmatprep.subr.bf16.mxu0 %v5248
    %5883 = vmatpush1.bf16.msra.mxu0 %v5247
    %5884 = vmatprep.subr.bf16.mxu0 %v5252
    %5885 = vmatpush1.bf16.msra.mxu0 %v5251
    %5886 = vmatprep.subr.bf16.mxu0 %v5256
    %5887 = vmatpush1.bf16.msra.mxu0 %v5255
    %5888 = vmatprep.subr.bf16.mxu0 %v5260
    %5889 = vmatpush1.bf16.msra.mxu0 %v5259
    %5890 = vmatprep.subr.bf16.mxu0 %v5264
    %5891 = vmatpush1.bf16.msra.mxu0 %v5263
    %5892 = vmatprep.subr.bf16.mxu0 %v5268
    %5893 = vmatpush1.bf16.msra.mxu0 %v5267
    %5894 = vmatprep.subr.bf16.mxu0 %v5272
    %5895 = vmatpush1.bf16.msra.mxu0 %v5271
    %5896 = vmatprep.subr.bf16.mxu0 %v5276
    %5897 = vmatpush1.bf16.msra.mxu0 %v5275
    %5898 = vmatprep.mubr.bf16.mxu0 %v4092
    %5899 = vmatmul.mubr.bf16.gmra.mrb[0].mxu0 %v4091
    %v5900 = vpop.f32.mrb[0].mxu0
    %v5901 = vadd.f32 %v5860, %v5900
    %v5902 = vpop.f32.mrb[0].mxu0
    %v5903 = vadd.f32 %v5862, %v5902
    %v5904 = vpop.f32.mrb[0].mxu0
    %v5905 = vpop.f32.mrb[0].mxu0
    %5906 = vdwg.mxu0
    %5907 = vmatprep.subr.bf16.mxu0 %v5280
    %5908 = vmatpush1.bf16.msra.mxu0 %v5279
    %5909 = vmatprep.subr.bf16.mxu0 %v5284
    %5910 = vmatpush1.bf16.msra.mxu0 %v5283
    %5911 = vmatprep.subr.bf16.mxu0 %v5288
    %5912 = vmatpush1.bf16.msra.mxu0 %v5287
    %5913 = vmatprep.subr.bf16.mxu0 %v5292
    %5914 = vmatpush1.bf16.msra.mxu0 %v5291
    %5915 = vmatprep.subr.bf16.mxu0 %v5296
    %5916 = vmatpush1.bf16.msra.mxu0 %v5295
    %5917 = vmatprep.subr.bf16.mxu0 %v5300
    %5918 = vmatpush1.bf16.msra.mxu0 %v5299
    %5919 = vmatprep.subr.bf16.mxu0 %v5304
    %5920 = vmatpush1.bf16.msra.mxu0 %v5303
    %5921 = vmatprep.subr.bf16.mxu0 %v5308
    %5922 = vmatpush1.bf16.msra.mxu0 %v5307
    %5923 = vmatprep.subr.bf16.mxu0 %v5312
    %5924 = vmatpush1.bf16.msra.mxu0 %v5311
    %5925 = vmatprep.subr.bf16.mxu0 %v5316
    %5926 = vmatpush1.bf16.msra.mxu0 %v5315
    %5927 = vmatprep.subr.bf16.mxu0 %v5320
    %5928 = vmatpush1.bf16.msra.mxu0 %v5319
    %5929 = vmatprep.subr.bf16.mxu0 %v5324
    %5930 = vmatpush1.bf16.msra.mxu0 %v5323
    %5931 = vmatprep.subr.bf16.mxu0 %v5328
    %5932 = vmatpush1.bf16.msra.mxu0 %v5327
    %5933 = vmatprep.subr.bf16.mxu0 %v5332
    %5934 = vmatpush1.bf16.msra.mxu0 %v5331
    %5935 = vmatprep.subr.bf16.mxu0 %v5336
    %5936 = vmatpush1.bf16.msra.mxu0 %v5335
    %5937 = vmatprep.subr.bf16.mxu0 %v5340
    %5938 = vmatpush1.bf16.msra.mxu0 %v5339
    %5939 = vmatprep.mubr.bf16.mxu0 %v4094
    %5940 = vmatmul.mubr.bf16.gmra.mrb[0].mxu0 %v4093
    %v5941 = vpop.f32.mrb[0].mxu0
    %v5942 = vadd.f32 %v5901, %v5941
    %v5943 = vpop.f32.mrb[0].mxu0
    %v5944 = vadd.f32 %v5903, %v5943
    %v5945 = vpop.f32.mrb[0].mxu0
    %v5946 = vpop.f32.mrb[0].mxu0
    %5947 = vdwg.mxu0
    %5948 = vmatprep.subr.bf16.mxu0 %v5344
    %5949 = vmatpush1.bf16.msra.mxu0 %v5343
    %5950 = vmatprep.subr.bf16.mxu0 %v5348
    %5951 = vmatpush1.bf16.msra.mxu0 %v5347
    %5952 = vmatprep.subr.bf16.mxu0 %v5352
    %5953 = vmatpush1.bf16.msra.mxu0 %v5351
    %5954 = vmatprep.subr.bf16.mxu0 %v5356
    %5955 = vmatpush1.bf16.msra.mxu0 %v5355
    %5956 = vmatprep.subr.bf16.mxu0 %v5360
    %5957 = vmatpush1.bf16.msra.mxu0 %v5359
    %5958 = vmatprep.subr.bf16.mxu0 %v5364
    %5959 = vmatpush1.bf16.msra.mxu0 %v5363
    %5960 = vmatprep.subr.bf16.mxu0 %v5368
    %5961 = vmatpush1.bf16.msra.mxu0 %v5367
    %5962 = vmatprep.subr.bf16.mxu0 %v5372
    %5963 = vmatpush1.bf16.msra.mxu0 %v5371
    %5964 = vmatprep.subr.bf16.mxu0 %v5376
    %5965 = vmatpush1.bf16.msra.mxu0 %v5375
    %5966 = vmatprep.subr.bf16.mxu0 %v5380
    %5967 = vmatpush1.bf16.msra.mxu0 %v5379
    %5968 = vmatprep.subr.bf16.mxu0 %v5384
    %5969 = vmatpush1.bf16.msra.mxu0 %v5383
    %5970 = vmatprep.subr.bf16.mxu0 %v5388
    %5971 = vmatpush1.bf16.msra.mxu0 %v5387
    %5972 = vmatprep.subr.bf16.mxu0 %v5392
    %5973 = vmatpush1.bf16.msra.mxu0 %v5391
    %5974 = vmatprep.subr.bf16.mxu0 %v5396
    %5975 = vmatpush1.bf16.msra.mxu0 %v5395
    %5976 = vmatprep.subr.bf16.mxu0 %v5400
    %5977 = vmatpush1.bf16.msra.mxu0 %v5399
    %5978 = vmatprep.subr.bf16.mxu0 %v5404
    %5979 = vmatpush1.bf16.msra.mxu0 %v5403
    %5980 = vmatprep.mubr.bf16.mxu0 %v4096
    %5981 = vmatmul.mubr.bf16.gmra.mrb[0].mxu0 %v4095
    %v5982 = vpop.f32.mrb[0].mxu0
    %v5983 = vadd.f32 %v5942, %v5982
    %v5984 = vpop.f32.mrb[0].mxu0
    %v5985 = vadd.f32 %v5944, %v5984
    %v5986 = vpop.f32.mrb[0].mxu0
    %v5987 = vpop.f32.mrb[0].mxu0
    %5988 = vdwg.mxu0
    %v5989 = vld [vmem:[#allocation16] sm:$0xf]
    %v5991 = vlaneseq
    %v5992 = vshrl.u32 %v5991, 7
    %v5993 = vsub.s32 0, %v5992
    %v5994 = vrot.slane %v5989, %v5993
    %v5995 = vlaneseq
    %v5996 = vshrl.u32 %v5995, 7
    %v5997 = vsub.s32 1, %v5996
    %v5998 = vrot.slane %v5989, %v5997
    %v5999 = vlaneseq
    %v6000 = vshrl.u32 %v5999, 7
    %v6001 = vsub.s32 2, %v6000
    %v6002 = vrot.slane %v5989, %v6001
    %v6003 = vlaneseq
    %v6004 = vshrl.u32 %v6003, 7
    %v6005 = vsub.s32 3, %v6004
    %v6006 = vrot.slane %v5989, %v6005
    %vm6011 = vcmp.ge.f32.partialorder %v5819, %v5994
    %vm6012 = vcmp.ge.f32.partialorder %v5821, %v5998
    %vm6013 = vcmp.ge.f32.partialorder %v5983, %v6002
    %vm6014 = vcmp.ge.f32.partialorder %v5985, %v6006
    %v6015 = vsel %vm6011, 1, 0
    %v6016 = vsel %vm6012, 1, 0
    %v6017 = vsel %vm6013, 1, 0
    %v6018 = vsel %vm6014, 1, 0
    %v6019 = vcvt.s32.f32 %v6015
    %v6020 = vcvt.s32.f32 %v6016
    %v6021 = vcvt.s32.f32 %v6017
    %v6022 = vcvt.s32.f32 %v6018
    %v6023 = vpack.c.bf16 %v6019, %v6019
    %v6024 = vpack.c.bf16 %v6020, %v6020
    %v6025 = vpack.c.bf16 %v6021, %v6021
    %v6026 = vpack.c.bf16 %v6022, %v6022
    %v6031 = vunpack.c.l.b16 %v6023
    %v6032 = vunpack.c.l.b16 %v6024
    %v6033 = vunpack.c.l.b16 %v6025
    %v6034 = vunpack.c.l.b16 %v6026
    %v6035 = vpack.c.b16 %v6032, %v6031
    %v6036 = vpack.c.b16 %v6034, %v6033
    %6039 = vst [vmem:[%s18] sm:$0xff] %v6035
    %6040 = vst [vmem:[%s18 + $0x8] sm:$0xff] %v6036
    %v6041 = vld [vmem:[#allocation6] sm:$0xff]
    %v6042 = vld [vmem:[#allocation6 + $0x8] sm:$0xff]
    %v6043 = vld [vmem:[#allocation6 + $0x10] sm:$0xff]
    %v6044 = vld [vmem:[#allocation6 + $0x18] sm:$0xff]
    %v6045 = vld [vmem:[#allocation6 + $0x20] sm:$0xff]
    %v6046 = vld [vmem:[#allocation6 + $0x28] sm:$0xff]
    %v6047 = vld [vmem:[#allocation6 + $0x30] sm:$0xff]
    %v6048 = vld [vmem:[#allocation6 + $0x38] sm:$0xff]
    %v6049 = vld [vmem:[#allocation6 + $0x40] sm:$0xff]
    %v6050 = vld [vmem:[#allocation6 + $0x48] sm:$0xff]
    %v6051 = vld [vmem:[#allocation6 + $0x50] sm:$0xff]
    %v6052 = vld [vmem:[#allocation6 + $0x58] sm:$0xff]
    %v6053 = vld [vmem:[#allocation6 + $0x60] sm:$0xff]
    %v6054 = vld [vmem:[#allocation6 + $0x68] sm:$0xff]
    %v6055 = vld [vmem:[#allocation6 + $0x70] sm:$0xff]
    %v6056 = vld [vmem:[#allocation6 + $0x78] sm:$0xff]
    %v6057 = vld [vmem:[#allocation6 + $0x80] sm:$0xff]
    %v6058 = vld [vmem:[#allocation6 + $0x88] sm:$0xff]
    %v6059 = vld [vmem:[#allocation6 + $0x90] sm:$0xff]
    %v6060 = vld [vmem:[#allocation6 + $0x98] sm:$0xff]
    %v6061 = vld [vmem:[#allocation6 + $0xa0] sm:$0xff]
    %v6062 = vld [vmem:[#allocation6 + $0xa8] sm:$0xff]
    %v6063 = vld [vmem:[#allocation6 + $0xb0] sm:$0xff]
    %v6064 = vld [vmem:[#allocation6 + $0xb8] sm:$0xff]
    %v6065 = vld [vmem:[#allocation6 + $0xc0] sm:$0xff]
    %v6066 = vld [vmem:[#allocation6 + $0xc8] sm:$0xff]
    %v6067 = vld [vmem:[#allocation6 + $0xd0] sm:$0xff]
    %v6068 = vld [vmem:[#allocation6 + $0xd8] sm:$0xff]
    %v6069 = vld [vmem:[#allocation6 + $0xe0] sm:$0xff]
    %v6070 = vld [vmem:[#allocation6 + $0xe8] sm:$0xff]
    %v6071 = vld [vmem:[#allocation6 + $0xf0] sm:$0xff]
    %v6072 = vld [vmem:[#allocation6 + $0xf8] sm:$0xff]
    %v6073 = vld [vmem:[#allocation6 + $0x100] sm:$0xff]
    %v6074 = vld [vmem:[#allocation6 + $0x108] sm:$0xff]
    %v6075 = vld [vmem:[#allocation6 + $0x110] sm:$0xff]
    %v6076 = vld [vmem:[#allocation6 + $0x118] sm:$0xff]
    %v6077 = vld [vmem:[#allocation6 + $0x120] sm:$0xff]
    %v6078 = vld [vmem:[#allocation6 + $0x128] sm:$0xff]
    %v6079 = vld [vmem:[#allocation6 + $0x130] sm:$0xff]
    %v6080 = vld [vmem:[#allocation6 + $0x138] sm:$0xff]
    %v6081 = vld [vmem:[#allocation6 + $0x140] sm:$0xff]
    %v6082 = vld [vmem:[#allocation6 + $0x148] sm:$0xff]
    %v6083 = vld [vmem:[#allocation6 + $0x150] sm:$0xff]
    %v6084 = vld [vmem:[#allocation6 + $0x158] sm:$0xff]
    %v6085 = vld [vmem:[#allocation6 + $0x160] sm:$0xff]
    %v6086 = vld [vmem:[#allocation6 + $0x168] sm:$0xff]
    %v6087 = vld [vmem:[#allocation6 + $0x170] sm:$0xff]
    %v6088 = vld [vmem:[#allocation6 + $0x178] sm:$0xff]
    %v6089 = vld [vmem:[#allocation6 + $0x180] sm:$0xff]
    %v6090 = vld [vmem:[#allocation6 + $0x188] sm:$0xff]
    %v6091 = vld [vmem:[#allocation6 + $0x190] sm:$0xff]
    %v6092 = vld [vmem:[#allocation6 + $0x198] sm:$0xff]
    %v6093 = vld [vmem:[#allocation6 + $0x1a0] sm:$0xff]
    %v6094 = vld [vmem:[#allocation6 + $0x1a8] sm:$0xff]
    %v6095 = vld [vmem:[#allocation6 + $0x1b0] sm:$0xff]
    %v6096 = vld [vmem:[#allocation6 + $0x1b8] sm:$0xff]
    %v6097 = vld [vmem:[#allocation6 + $0x1c0] sm:$0xff]
    %v6098 = vld [vmem:[#allocation6 + $0x1c8] sm:$0xff]
    %v6099 = vld [vmem:[#allocation6 + $0x1d0] sm:$0xff]
    %v6100 = vld [vmem:[#allocation6 + $0x1d8] sm:$0xff]
    %v6101 = vld [vmem:[#allocation6 + $0x1e0] sm:$0xff]
    %v6102 = vld [vmem:[#allocation6 + $0x1e8] sm:$0xff]
    %v6103 = vld [vmem:[#allocation6 + $0x1f0] sm:$0xff]
    %v6104 = vld [vmem:[#allocation6 + $0x1f8] sm:$0xff]
    %v6169 = vunpack.c.l.b16 %v6041
    %v6170 = vunpack.c.h.b16 %v6041
    %v6171 = vunpack.c.l.b16 %v6042
    %v6172 = vunpack.c.h.b16 %v6042
    %v6173 = vunpack.c.l.b16 %v6043
    %v6174 = vunpack.c.h.b16 %v6043
    %v6175 = vunpack.c.l.b16 %v6044
    %v6176 = vunpack.c.h.b16 %v6044
    %v6177 = vunpack.c.l.b16 %v6045
    %v6178 = vunpack.c.h.b16 %v6045
    %v6179 = vunpack.c.l.b16 %v6046
    %v6180 = vunpack.c.h.b16 %v6046
    %v6181 = vunpack.c.l.b16 %v6047
    %v6182 = vunpack.c.h.b16 %v6047
    %v6183 = vunpack.c.l.b16 %v6048
    %v6184 = vunpack.c.h.b16 %v6048
    %v6185 = vunpack.c.l.b16 %v6049
    %v6186 = vunpack.c.h.b16 %v6049
    %v6187 = vunpack.c.l.b16 %v6050
    %v6188 = vunpack.c.h.b16 %v6050
    %v6189 = vunpack.c.l.b16 %v6051
    %v6190 = vunpack.c.h.b16 %v6051
    %v6191 = vunpack.c.l.b16 %v6052
    %v6192 = vunpack.c.h.b16 %v6052
    %v6193 = vunpack.c.l.b16 %v6053
    %v6194 = vunpack.c.h.b16 %v6053
    %v6195 = vunpack.c.l.b16 %v6054
    %v6196 = vunpack.c.h.b16 %v6054
    %v6197 = vunpack.c.l.b16 %v6055
    %v6198 = vunpack.c.h.b16 %v6055
    %v6199 = vunpack.c.l.b16 %v6056
    %v6200 = vunpack.c.h.b16 %v6056
    %v6201 = vunpack.c.l.b16 %v6057
    %v6202 = vunpack.c.h.b16 %v6057
    %v6203 = vunpack.c.l.b16 %v6058
    %v6204 = vunpack.c.h.b16 %v6058
    %v6205 = vunpack.c.l.b16 %v6059
    %v6206 = vunpack.c.h.b16 %v6059
    %v6207 = vunpack.c.l.b16 %v6060
    %v6208 = vunpack.c.h.b16 %v6060
    %v6209 = vunpack.c.l.b16 %v6061
    %v6210 = vunpack.c.h.b16 %v6061
    %v6211 = vunpack.c.l.b16 %v6062
    %v6212 = vunpack.c.h.b16 %v6062
    %v6213 = vunpack.c.l.b16 %v6063
    %v6214 = vunpack.c.h.b16 %v6063
    %v6215 = vunpack.c.l.b16 %v6064
    %v6216 = vunpack.c.h.b16 %v6064
    %v6217 = vunpack.c.l.b16 %v6065
    %v6218 = vunpack.c.h.b16 %v6065
    %v6219 = vunpack.c.l.b16 %v6066
    %v6220 = vunpack.c.h.b16 %v6066
    %v6221 = vunpack.c.l.b16 %v6067
    %v6222 = vunpack.c.h.b16 %v6067
    %v6223 = vunpack.c.l.b16 %v6068
    %v6224 = vunpack.c.h.b16 %v6068
    %v6225 = vunpack.c.l.b16 %v6069
    %v6226 = vunpack.c.h.b16 %v6069
    %v6227 = vunpack.c.l.b16 %v6070
    %v6228 = vunpack.c.h.b16 %v6070
    %v6229 = vunpack.c.l.b16 %v6071
    %v6230 = vunpack.c.h.b16 %v6071
    %v6231 = vunpack.c.l.b16 %v6072
    %v6232 = vunpack.c.h.b16 %v6072
    %v6233 = vunpack.c.l.b16 %v6073
    %v6234 = vunpack.c.h.b16 %v6073
    %v6235 = vunpack.c.l.b16 %v6074
    %v6236 = vunpack.c.h.b16 %v6074
    %v6237 = vunpack.c.l.b16 %v6075
    %v6238 = vunpack.c.h.b16 %v6075
    %v6239 = vunpack.c.l.b16 %v6076
    %v6240 = vunpack.c.h.b16 %v6076
    %v6241 = vunpack.c.l.b16 %v6077
    %v6242 = vunpack.c.h.b16 %v6077
    %v6243 = vunpack.c.l.b16 %v6078
    %v6244 = vunpack.c.h.b16 %v6078
    %v6245 = vunpack.c.l.b16 %v6079
    %v6246 = vunpack.c.h.b16 %v6079
    %v6247 = vunpack.c.l.b16 %v6080
    %v6248 = vunpack.c.h.b16 %v6080
    %v6249 = vunpack.c.l.b16 %v6081
    %v6250 = vunpack.c.h.b16 %v6081
    %v6251 = vunpack.c.l.b16 %v6082
    %v6252 = vunpack.c.h.b16 %v6082
    %v6253 = vunpack.c.l.b16 %v6083
    %v6254 = vunpack.c.h.b16 %v6083
    %v6255 = vunpack.c.l.b16 %v6084
    %v6256 = vunpack.c.h.b16 %v6084
    %v6257 = vunpack.c.l.b16 %v6085
    %v6258 = vunpack.c.h.b16 %v6085
    %v6259 = vunpack.c.l.b16 %v6086
    %v6260 = vunpack.c.h.b16 %v6086
    %v6261 = vunpack.c.l.b16 %v6087
    %v6262 = vunpack.c.h.b16 %v6087
    %v6263 = vunpack.c.l.b16 %v6088
    %v6264 = vunpack.c.h.b16 %v6088
    %v6265 = vunpack.c.l.b16 %v6089
    %v6266 = vunpack.c.h.b16 %v6089
    %v6267 = vunpack.c.l.b16 %v6090
    %v6268 = vunpack.c.h.b16 %v6090
    %v6269 = vunpack.c.l.b16 %v6091
    %v6270 = vunpack.c.h.b16 %v6091
    %v6271 = vunpack.c.l.b16 %v6092
    %v6272 = vunpack.c.h.b16 %v6092
    %v6273 = vunpack.c.l.b16 %v6093
    %v6274 = vunpack.c.h.b16 %v6093
    %v6275 = vunpack.c.l.b16 %v6094
    %v6276 = vunpack.c.h.b16 %v6094
    %v6277 = vunpack.c.l.b16 %v6095
    %v6278 = vunpack.c.h.b16 %v6095
    %v6279 = vunpack.c.l.b16 %v6096
    %v6280 = vunpack.c.h.b16 %v6096
    %v6281 = vunpack.c.l.b16 %v6097
    %v6282 = vunpack.c.h.b16 %v6097
    %v6283 = vunpack.c.l.b16 %v6098
    %v6284 = vunpack.c.h.b16 %v6098
    %v6285 = vunpack.c.l.b16 %v6099
    %v6286 = vunpack.c.h.b16 %v6099
    %v6287 = vunpack.c.l.b16 %v6100
    %v6288 = vunpack.c.h.b16 %v6100
    %v6289 = vunpack.c.l.b16 %v6101
    %v6290 = vunpack.c.h.b16 %v6101
    %v6291 = vunpack.c.l.b16 %v6102
    %v6292 = vunpack.c.h.b16 %v6102
    %v6293 = vunpack.c.l.b16 %v6103
    %v6294 = vunpack.c.h.b16 %v6103
    %v6295 = vunpack.c.l.b16 %v6104
    %v6296 = vunpack.c.h.b16 %v6104
    %v6297 = vpack.c.b16 %v6171, %v6169
    %v6298 = vpack.c.b16 %v6172, %v6170
    %v6299 = vpack.c.b16 %v6175, %v6173
    %v6300 = vpack.c.b16 %v6176, %v6174
    %v6301 = vpack.c.b16 %v6179, %v6177
    %v6302 = vpack.c.b16 %v6180, %v6178
    %v6303 = vpack.c.b16 %v6183, %v6181
    %v6304 = vpack.c.b16 %v6184, %v6182
    %v6305 = vpack.c.b16 %v6187, %v6185
    %v6306 = vpack.c.b16 %v6188, %v6186
    %v6307 = vpack.c.b16 %v6191, %v6189
    %v6308 = vpack.c.b16 %v6192, %v6190
    %v6309 = vpack.c.b16 %v6195, %v6193
    %v6310 = vpack.c.b16 %v6196, %v6194
    %v6311 = vpack.c.b16 %v6199, %v6197
    %v6312 = vpack.c.b16 %v6200, %v6198
    %v6313 = vpack.c.b16 %v6203, %v6201
    %v6314 = vpack.c.b16 %v6204, %v6202
    %v6315 = vpack.c.b16 %v6207, %v6205
    %v6316 = vpack.c.b16 %v6208, %v6206
    %v6317 = vpack.c.b16 %v6211, %v6209
    %v6318 = vpack.c.b16 %v6212, %v6210
    %v6319 = vpack.c.b16 %v6215, %v6213
    %v6320 = vpack.c.b16 %v6216, %v6214
    %v6321 = vpack.c.b16 %v6219, %v6217
    %v6322 = vpack.c.b16 %v6220, %v6218
    %v6323 = vpack.c.b16 %v6223, %v6221
    %v6324 = vpack.c.b16 %v6224, %v6222
    %v6325 = vpack.c.b16 %v6227, %v6225
    %v6326 = vpack.c.b16 %v6228, %v6226
    %v6327 = vpack.c.b16 %v6231, %v6229
    %v6328 = vpack.c.b16 %v6232, %v6230
    %v6329 = vpack.c.b16 %v6235, %v6233
    %v6330 = vpack.c.b16 %v6236, %v6234
    %v6331 = vpack.c.b16 %v6239, %v6237
    %v6332 = vpack.c.b16 %v6240, %v6238
    %v6333 = vpack.c.b16 %v6243, %v6241
    %v6334 = vpack.c.b16 %v6244, %v6242
    %v6335 = vpack.c.b16 %v6247, %v6245
    %v6336 = vpack.c.b16 %v6248, %v6246
    %v6337 = vpack.c.b16 %v6251, %v6249
    %v6338 = vpack.c.b16 %v6252, %v6250
    %v6339 = vpack.c.b16 %v6255, %v6253
    %v6340 = vpack.c.b16 %v6256, %v6254
    %v6341 = vpack.c.b16 %v6259, %v6257
    %v6342 = vpack.c.b16 %v6260, %v6258
    %v6343 = vpack.c.b16 %v6263, %v6261
    %v6344 = vpack.c.b16 %v6264, %v6262
    %v6345 = vpack.c.b16 %v6267, %v6265
    %v6346 = vpack.c.b16 %v6268, %v6266
    %v6347 = vpack.c.b16 %v6271, %v6269
    %v6348 = vpack.c.b16 %v6272, %v6270
    %v6349 = vpack.c.b16 %v6275, %v6273
    %v6350 = vpack.c.b16 %v6276, %v6274
    %v6351 = vpack.c.b16 %v6279, %v6277
    %v6352 = vpack.c.b16 %v6280, %v6278
    %v6353 = vpack.c.b16 %v6283, %v6281
    %v6354 = vpack.c.b16 %v6284, %v6282
    %v6355 = vpack.c.b16 %v6287, %v6285
    %v6356 = vpack.c.b16 %v6288, %v6286
    %v6357 = vpack.c.b16 %v6291, %v6289
    %v6358 = vpack.c.b16 %v6292, %v6290
    %v6359 = vpack.c.b16 %v6295, %v6293
    %v6360 = vpack.c.b16 %v6296, %v6294
    %6425 = vmatprep.subr.bf16.mxu0 %v6298
    %6426 = vmatpush1.bf16.msra.mxu0 %v6297
    %6427 = vmatprep.subr.bf16.mxu0 %v6300
    %6428 = vmatpush1.bf16.msra.mxu0 %v6299
    %6429 = vmatprep.subr.bf16.mxu0 %v6302
    %6430 = vmatpush1.bf16.msra.mxu0 %v6301
    %6431 = vmatprep.subr.bf16.mxu0 %v6304
    %6432 = vmatpush1.bf16.msra.mxu0 %v6303
    %6433 = vmatprep.subr.bf16.mxu0 %v6306
    %6434 = vmatpush1.bf16.msra.mxu0 %v6305
    %6435 = vmatprep.subr.bf16.mxu0 %v6308
    %6436 = vmatpush1.bf16.msra.mxu0 %v6307
    %6437 = vmatprep.subr.bf16.mxu0 %v6310
    %6438 = vmatpush1.bf16.msra.mxu0 %v6309
    %6439 = vmatprep.subr.bf16.mxu0 %v6312
    %6440 = vmatpush1.bf16.msra.mxu0 %v6311
    %6441 = vmatprep.subr.bf16.mxu0 %v6314
    %6442 = vmatpush1.bf16.msra.mxu0 %v6313
    %6443 = vmatprep.subr.bf16.mxu0 %v6316
    %6444 = vmatpush1.bf16.msra.mxu0 %v6315
    %6445 = vmatprep.subr.bf16.mxu0 %v6318
    %6446 = vmatpush1.bf16.msra.mxu0 %v6317
    %6447 = vmatprep.subr.bf16.mxu0 %v6320
    %6448 = vmatpush1.bf16.msra.mxu0 %v6319
    %6449 = vmatprep.subr.bf16.mxu0 %v6322
    %6450 = vmatpush1.bf16.msra.mxu0 %v6321
    %6451 = vmatprep.subr.bf16.mxu0 %v6324
    %6452 = vmatpush1.bf16.msra.mxu0 %v6323
    %6453 = vmatprep.subr.bf16.mxu0 %v6326
    %6454 = vmatpush1.bf16.msra.mxu0 %v6325
    %6455 = vmatprep.subr.bf16.mxu0 %v6328
    %6456 = vmatpush1.bf16.msra.mxu0 %v6327
    %6457 = vmatprep.mubr.bf16.mxu0 %v6024
    %6458 = vmatmul.mubr.bf16.gmra.mrb[0].mxu0 %v6023
    %v6459 = vpop.f32.mrb[0].mxu0
    %v6460 = vadd.f32 0.0, %v6459
    %v6461 = vpop.f32.mrb[0].mxu0
    %v6462 = vadd.f32 0.0, %v6461
    %v6463 = vpop.f32.mrb[0].mxu0
    %v6464 = vpop.f32.mrb[0].mxu0
    %6465 = vdwg.mxu0
    %6466 = vmatprep.subr.bf16.mxu0 %v6330
    %6467 = vmatpush1.bf16.msra.mxu0 %v6329
    %6468 = vmatprep.subr.bf16.mxu0 %v6332
    %6469 = vmatpush1.bf16.msra.mxu0 %v6331
    %6470 = vmatprep.subr.bf16.mxu0 %v6334
    %6471 = vmatpush1.bf16.msra.mxu0 %v6333
    %6472 = vmatprep.subr.bf16.mxu0 %v6336
    %6473 = vmatpush1.bf16.msra.mxu0 %v6335
    %6474 = vmatprep.subr.bf16.mxu0 %v6338
    %6475 = vmatpush1.bf16.msra.mxu0 %v6337
    %6476 = vmatprep.subr.bf16.mxu0 %v6340
    %6477 = vmatpush1.bf16.msra.mxu0 %v6339
    %6478 = vmatprep.subr.bf16.mxu0 %v6342
    %6479 = vmatpush1.bf16.msra.mxu0 %v6341
    %6480 = vmatprep.subr.bf16.mxu0 %v6344
    %6481 = vmatpush1.bf16.msra.mxu0 %v6343
    %6482 = vmatprep.subr.bf16.mxu0 %v6346
    %6483 = vmatpush1.bf16.msra.mxu0 %v6345
    %6484 = vmatprep.subr.bf16.mxu0 %v6348
    %6485 = vmatpush1.bf16.msra.mxu0 %v6347
    %6486 = vmatprep.subr.bf16.mxu0 %v6350
    %6487 = vmatpush1.bf16.msra.mxu0 %v6349
    %6488 = vmatprep.subr.bf16.mxu0 %v6352
    %6489 = vmatpush1.bf16.msra.mxu0 %v6351
    %6490 = vmatprep.subr.bf16.mxu0 %v6354
    %6491 = vmatpush1.bf16.msra.mxu0 %v6353
    %6492 = vmatprep.subr.bf16.mxu0 %v6356
    %6493 = vmatpush1.bf16.msra.mxu0 %v6355
    %6494 = vmatprep.subr.bf16.mxu0 %v6358
    %6495 = vmatpush1.bf16.msra.mxu0 %v6357
    %6496 = vmatprep.subr.bf16.mxu0 %v6360
    %6497 = vmatpush1.bf16.msra.mxu0 %v6359
    %6498 = vmatprep.mubr.bf16.mxu0 %v6026
    %6499 = vmatmul.mubr.bf16.gmra.mrb[0].mxu0 %v6025
    %v6500 = vpop.f32.mrb[0].mxu0
    %v6501 = vadd.f32 %v6460, %v6500
    %v6502 = vpop.f32.mrb[0].mxu0
    %v6503 = vadd.f32 %v6462, %v6502
    %v6504 = vpop.f32.mrb[0].mxu0
    %v6505 = vpop.f32.mrb[0].mxu0
    %6506 = vdwg.mxu0
    %v6507 = vld [vmem:[#allocation18] sm:$0x3]
    %v6509 = vlaneseq
    %v6510 = vshrl.u32 %v6509, 7
    %v6511 = vsub.s32 0, %v6510
    %v6512 = vrot.slane %v6507, %v6511
    %v6513 = vlaneseq
    %v6514 = vshrl.u32 %v6513, 7
    %v6515 = vsub.s32 1, %v6514
    %v6516 = vrot.slane %v6507, %v6515
    %vm6519 = vcmp.ge.f32.partialorder %v6501, %v6512
    %vm6520 = vcmp.ge.f32.partialorder %v6503, %v6516
    %v6521 = vsel %vm6519, 1, 0
    %v6522 = vsel %vm6520, 1, 0
    %v6523 = vcvt.s32.f32 %v6521
    %v6524 = vcvt.s32.f32 %v6522
    %v6525 = vpack.c.bf16 %v6523, %v6523
    %v6526 = vpack.c.bf16 %v6524, %v6524
    %v6527 = vld [vmem:[#allocation7] sm:$0xf]
    %v6528 = vld [vmem:[#allocation7 + $0x4] sm:$0xf]
    %v6529 = vld [vmem:[#allocation7 + $0x8] sm:$0xf]
    %v6530 = vld [vmem:[#allocation7 + $0xc] sm:$0xf]
    %v6531 = vld [vmem:[#allocation7 + $0x10] sm:$0xf]
    %v6532 = vld [vmem:[#allocation7 + $0x14] sm:$0xf]
    %v6533 = vld [vmem:[#allocation7 + $0x18] sm:$0xf]
    %v6534 = vld [vmem:[#allocation7 + $0x1c] sm:$0xf]
    %v6535 = vld [vmem:[#allocation7 + $0x20] sm:$0xf]
    %v6536 = vld [vmem:[#allocation7 + $0x24] sm:$0xf]
    %v6537 = vld [vmem:[#allocation7 + $0x28] sm:$0xf]
    %v6538 = vld [vmem:[#allocation7 + $0x2c] sm:$0xf]
    %v6539 = vld [vmem:[#allocation7 + $0x30] sm:$0xf]
    %v6540 = vld [vmem:[#allocation7 + $0x34] sm:$0xf]
    %v6541 = vld [vmem:[#allocation7 + $0x38] sm:$0xf]
    %v6542 = vld [vmem:[#allocation7 + $0x3c] sm:$0xf]
    %v6543 = vld [vmem:[#allocation7 + $0x40] sm:$0xf]
    %v6544 = vld [vmem:[#allocation7 + $0x44] sm:$0xf]
    %v6545 = vld [vmem:[#allocation7 + $0x48] sm:$0xf]
    %v6546 = vld [vmem:[#allocation7 + $0x4c] sm:$0xf]
    %v6547 = vld [vmem:[#allocation7 + $0x50] sm:$0xf]
    %v6548 = vld [vmem:[#allocation7 + $0x54] sm:$0xf]
    %v6549 = vld [vmem:[#allocation7 + $0x58] sm:$0xf]
    %v6550 = vld [vmem:[#allocation7 + $0x5c] sm:$0xf]
    %v6551 = vld [vmem:[#allocation7 + $0x60] sm:$0xf]
    %v6552 = vld [vmem:[#allocation7 + $0x64] sm:$0xf]
    %v6553 = vld [vmem:[#allocation7 + $0x68] sm:$0xf]
    %v6554 = vld [vmem:[#allocation7 + $0x6c] sm:$0xf]
    %v6555 = vld [vmem:[#allocation7 + $0x70] sm:$0xf]
    %v6556 = vld [vmem:[#allocation7 + $0x74] sm:$0xf]
    %v6557 = vld [vmem:[#allocation7 + $0x78] sm:$0xf]
    %v6558 = vld [vmem:[#allocation7 + $0x7c] sm:$0xf]
    %v6591 = vunpack.c.l.b16 %v6527
    %v6592 = vunpack.c.l.b16 %v6528
    %v6593 = vunpack.c.l.b16 %v6529
    %v6594 = vunpack.c.l.b16 %v6530
    %v6595 = vunpack.c.l.b16 %v6531
    %v6596 = vunpack.c.l.b16 %v6532
    %v6597 = vunpack.c.l.b16 %v6533
    %v6598 = vunpack.c.l.b16 %v6534
    %v6599 = vunpack.c.l.b16 %v6535
    %v6600 = vunpack.c.l.b16 %v6536
    %v6601 = vunpack.c.l.b16 %v6537
    %v6602 = vunpack.c.l.b16 %v6538
    %v6603 = vunpack.c.l.b16 %v6539
    %v6604 = vunpack.c.l.b16 %v6540
    %v6605 = vunpack.c.l.b16 %v6541
    %v6606 = vunpack.c.l.b16 %v6542
    %v6607 = vunpack.c.l.b16 %v6543
    %v6608 = vunpack.c.l.b16 %v6544
    %v6609 = vunpack.c.l.b16 %v6545
    %v6610 = vunpack.c.l.b16 %v6546
    %v6611 = vunpack.c.l.b16 %v6547
    %v6612 = vunpack.c.l.b16 %v6548
    %v6613 = vunpack.c.l.b16 %v6549
    %v6614 = vunpack.c.l.b16 %v6550
    %v6615 = vunpack.c.l.b16 %v6551
    %v6616 = vunpack.c.l.b16 %v6552
    %v6617 = vunpack.c.l.b16 %v6553
    %v6618 = vunpack.c.l.b16 %v6554
    %v6619 = vunpack.c.l.b16 %v6555
    %v6620 = vunpack.c.l.b16 %v6556
    %v6621 = vunpack.c.l.b16 %v6557
    %v6622 = vunpack.c.l.b16 %v6558
    %v6623 = vpack.c.b16 %v6592, %v6591
    %v6624 = vpack.c.b16 %v6594, %v6593
    %v6625 = vpack.c.b16 %v6596, %v6595
    %v6626 = vpack.c.b16 %v6598, %v6597
    %v6627 = vpack.c.b16 %v6600, %v6599
    %v6628 = vpack.c.b16 %v6602, %v6601
    %v6629 = vpack.c.b16 %v6604, %v6603
    %v6630 = vpack.c.b16 %v6606, %v6605
    %v6631 = vpack.c.b16 %v6608, %v6607
    %v6632 = vpack.c.b16 %v6610, %v6609
    %v6633 = vpack.c.b16 %v6612, %v6611
    %v6634 = vpack.c.b16 %v6614, %v6613
    %v6635 = vpack.c.b16 %v6616, %v6615
    %v6636 = vpack.c.b16 %v6618, %v6617
    %v6637 = vpack.c.b16 %v6620, %v6619
    %v6638 = vpack.c.b16 %v6622, %v6621
    %6655 = vmatprep.subr.bf16.mxu0 0
    %6656 = vmatpush1.bf16.msra.mxu0 %v6623
    %6657 = vmatprep.subr.bf16.mxu0 0
    %6658 = vmatpush1.bf16.msra.mxu0 %v6624
    %6659 = vmatprep.subr.bf16.mxu0 0
    %6660 = vmatpush1.bf16.msra.mxu0 %v6625
    %6661 = vmatprep.subr.bf16.mxu0 0
    %6662 = vmatpush1.bf16.msra.mxu0 %v6626
    %6663 = vmatprep.subr.bf16.mxu0 0
    %6664 = vmatpush1.bf16.msra.mxu0 %v6627
    %6665 = vmatprep.subr.bf16.mxu0 0
    %6666 = vmatpush1.bf16.msra.mxu0 %v6628
    %6667 = vmatprep.subr.bf16.mxu0 0
    %6668 = vmatpush1.bf16.msra.mxu0 %v6629
    %6669 = vmatprep.subr.bf16.mxu0 0
    %6670 = vmatpush1.bf16.msra.mxu0 %v6630
    %6671 = vmatprep.subr.bf16.mxu0 0
    %6672 = vmatpush1.bf16.msra.mxu0 %v6631
    %6673 = vmatprep.subr.bf16.mxu0 0
    %6674 = vmatpush1.bf16.msra.mxu0 %v6632
    %6675 = vmatprep.subr.bf16.mxu0 0
    %6676 = vmatpush1.bf16.msra.mxu0 %v6633
    %6677 = vmatprep.subr.bf16.mxu0 0
    %6678 = vmatpush1.bf16.msra.mxu0 %v6634
    %6679 = vmatprep.subr.bf16.mxu0 0
    %6680 = vmatpush1.bf16.msra.mxu0 %v6635
    %6681 = vmatprep.subr.bf16.mxu0 0
    %6682 = vmatpush1.bf16.msra.mxu0 %v6636
    %6683 = vmatprep.subr.bf16.mxu0 0
    %6684 = vmatpush1.bf16.msra.mxu0 %v6637
    %6685 = vmatprep.subr.bf16.mxu0 0
    %6686 = vmatpush1.bf16.msra.mxu0 %v6638
    %6687 = vmatprep.mubr.bf16.mxu0 %v6526
    %6688 = vmatmul.mubr.bf16.gmra.mrb[0].mxu0 %v6525
    %v6689 = vpop.f32.mrb[0].mxu0
    %v6690 = vadd.f32 0.0, %v6689
    %v6691 = vpop.f32.mrb[0].mxu0
    %v6692 = vpop.f32.mrb[0].mxu0
    %v6693 = vpop.f32.mrb[0].mxu0
    %6694 = vdwg.mxu0
    %v6695 = vld [vmem:[#allocation19] sm:$0x1]
    %v6697 = vlaneseq
    %v6698 = vshrl.u32 %v6697, 7
    %v6699 = vsub.s32 0, %v6698
    %v6700 = vrot.slane %v6695, %v6699
    %vm6702 = vcmp.ge.f32.partialorder %v6690, %v6700
    %v6703 = vsel %vm6702, 1, 0
    %v6704 = vcvt.s32.f32 %v6703
    %v6705 = vpack.c.bf16 %v6704, %v6704
    %6706 = vst [vmem:[%s19] sm:$0xf] %v6705
    %v6707 = vld [vmem:[#allocation9] sm:$0xf]
    %v6708 = vld [vmem:[#allocation9 + $0x4] sm:$0xf]
    %v6709 = vld [vmem:[#allocation9 + $0x8] sm:$0xf]
    %v6710 = vld [vmem:[#allocation9 + $0xc] sm:$0xf]
    %v6711 = vld [vmem:[#allocation9 + $0x10] sm:$0xf]
    %v6712 = vld [vmem:[#allocation9 + $0x14] sm:$0xf]
    %v6713 = vld [vmem:[#allocation9 + $0x18] sm:$0xf]
    %v6714 = vld [vmem:[#allocation9 + $0x1c] sm:$0xf]
    %v6715 = vld [vmem:[#allocation9 + $0x20] sm:$0xf]
    %v6716 = vld [vmem:[#allocation9 + $0x24] sm:$0xf]
    %v6717 = vld [vmem:[#allocation9 + $0x28] sm:$0xf]
    %v6718 = vld [vmem:[#allocation9 + $0x2c] sm:$0xf]
    %v6719 = vld [vmem:[#allocation9 + $0x30] sm:$0xf]
    %v6720 = vld [vmem:[#allocation9 + $0x34] sm:$0xf]
    %v6721 = vld [vmem:[#allocation9 + $0x38] sm:$0xf]
    %v6722 = vld [vmem:[#allocation9 + $0x3c] sm:$0xf]
    %v6739 = vunpack.c.l.b16 %v6707
    %v6740 = vunpack.c.l.b16 %v6708
    %v6741 = vunpack.c.l.b16 %v6709
    %v6742 = vunpack.c.l.b16 %v6710
    %v6743 = vunpack.c.l.b16 %v6711
    %v6744 = vunpack.c.l.b16 %v6712
    %v6745 = vunpack.c.l.b16 %v6713
    %v6746 = vunpack.c.l.b16 %v6714
    %v6747 = vunpack.c.l.b16 %v6715
    %v6748 = vunpack.c.l.b16 %v6716
    %v6749 = vunpack.c.l.b16 %v6717
    %v6750 = vunpack.c.l.b16 %v6718
    %v6751 = vunpack.c.l.b16 %v6719
    %v6752 = vunpack.c.l.b16 %v6720
    %v6753 = vunpack.c.l.b16 %v6721
    %v6754 = vunpack.c.l.b16 %v6722
    %v6755 = vpack.c.b16 %v6740, %v6739
    %v6756 = vpack.c.b16 %v6742, %v6741
    %v6757 = vpack.c.b16 %v6744, %v6743
    %v6758 = vpack.c.b16 %v6746, %v6745
    %v6759 = vpack.c.b16 %v6748, %v6747
    %v6760 = vpack.c.b16 %v6750, %v6749
    %v6761 = vpack.c.b16 %v6752, %v6751
    %v6762 = vpack.c.b16 %v6754, %v6753
    %6771 = vmatprep.subr.bf16.mxu0 0
    %6772 = vmatpush1.bf16.msra.mxu0 %v6755
    %6773 = vmatprep.subr.bf16.mxu0 0
    %6774 = vmatpush1.bf16.msra.mxu0 %v6756
    %6775 = vmatprep.subr.bf16.mxu0 0
    %6776 = vmatpush1.bf16.msra.mxu0 %v6757
    %6777 = vmatprep.subr.bf16.mxu0 0
    %6778 = vmatpush1.bf16.msra.mxu0 %v6758
    %6779 = vmatprep.subr.bf16.mxu0 0
    %6780 = vmatpush1.bf16.msra.mxu0 %v6759
    %6781 = vmatprep.subr.bf16.mxu0 0
    %6782 = vmatpush1.bf16.msra.mxu0 %v6760
    %6783 = vmatprep.subr.bf16.mxu0 0
    %6784 = vmatpush1.bf16.msra.mxu0 %v6761
    %6785 = vmatprep.subr.bf16.mxu0 0
    %6786 = vmatpush1.bf16.msra.mxu0 %v6762
    %6787 = vmatprep.subr.bf16.mxu0 0
    %6788 = vmatpush1.bf16.msra.mxu0 0
    %6789 = vmatprep.subr.bf16.mxu0 0
    %6790 = vmatpush1.bf16.msra.mxu0 0
    %6791 = vmatprep.subr.bf16.mxu0 0
    %6792 = vmatpush1.bf16.msra.mxu0 0
    %6793 = vmatprep.subr.bf16.mxu0 0
    %6794 = vmatpush1.bf16.msra.mxu0 0
    %6795 = vmatprep.subr.bf16.mxu0 0
    %6796 = vmatpush1.bf16.msra.mxu0 0
    %6797 = vmatprep.subr.bf16.mxu0 0
    %6798 = vmatpush1.bf16.msra.mxu0 0
    %6799 = vmatprep.subr.bf16.mxu0 0
    %6800 = vmatpush1.bf16.msra.mxu0 0
    %6801 = vmatprep.subr.bf16.mxu0 0
    %6802 = vmatpush1.bf16.msra.mxu0 0
    %6803 = vmatprep.mubr.bf16.mxu0 0
    %6804 = vmatmul.mubr.bf16.gmra.mrb[0].mxu0 %v6705
    %v6805 = vpop.f32.mrb[0].mxu0
    %v6806 = vadd.f32 0.0, %v6805
    %v6807 = vpop.f32.mrb[0].mxu0
    %v6808 = vpop.f32.mrb[0].mxu0
    %v6809 = vpop.f32.mrb[0].mxu0
    %6810 = vdwg.mxu0
    %v6811 = vld [vmem:[#allocation21] sm:$0x1]
    %v6813 = vlaneseq
    %v6814 = vshrl.u32 %v6813, 7
    %v6815 = vsub.s32 0, %v6814
    %v6816 = vrot.slane %v6811, %v6815
    %vm6818 = vcmp.ge.f32.partialorder %v6806, %v6816
    %v6819 = vsel %vm6818, 1, 0
    %v6820 = vcvt.s32.f32 %v6819
    %v6821 = vpack.c.bf16 %v6820, %v6820
    %v6822 = vld [vmem:[#allocation10] sm:$0xf]
    %v6823 = vld [vmem:[#allocation10 + $0x4] sm:$0xf]
    %v6824 = vld [vmem:[#allocation10 + $0x8] sm:$0xf]
    %v6825 = vld [vmem:[#allocation10 + $0xc] sm:$0xf]
    %v6826 = vld [vmem:[#allocation10 + $0x10] sm:$0xf]
    %v6827 = vld [vmem:[#allocation10 + $0x14] sm:$0xf]
    %v6828 = vld [vmem:[#allocation10 + $0x18] sm:$0xf]
    %v6829 = vld [vmem:[#allocation10 + $0x1c] sm:$0xf]
    %v6830 = vld [vmem:[#allocation10 + $0x20] sm:$0xf]
    %v6831 = vld [vmem:[#allocation10 + $0x24] sm:$0xf]
    %v6832 = vld [vmem:[#allocation10 + $0x28] sm:$0xf]
    %v6833 = vld [vmem:[#allocation10 + $0x2c] sm:$0xf]
    %v6834 = vld [vmem:[#allocation10 + $0x30] sm:$0xf]
    %v6835 = vld [vmem:[#allocation10 + $0x34] sm:$0xf]
    %v6836 = vld [vmem:[#allocation10 + $0x38] sm:$0xf]
    %v6837 = vld [vmem:[#allocation10 + $0x3c] sm:$0xf]
    %v6854 = vunpack.c.l.b16 %v6822
    %v6855 = vunpack.c.l.b16 %v6823
    %v6856 = vunpack.c.l.b16 %v6824
    %v6857 = vunpack.c.l.b16 %v6825
    %v6858 = vunpack.c.l.b16 %v6826
    %v6859 = vunpack.c.l.b16 %v6827
    %v6860 = vunpack.c.l.b16 %v6828
    %v6861 = vunpack.c.l.b16 %v6829
    %v6862 = vunpack.c.l.b16 %v6830
    %v6863 = vunpack.c.l.b16 %v6831
    %v6864 = vunpack.c.l.b16 %v6832
    %v6865 = vunpack.c.l.b16 %v6833
    %v6866 = vunpack.c.l.b16 %v6834
    %v6867 = vunpack.c.l.b16 %v6835
    %v6868 = vunpack.c.l.b16 %v6836
    %v6869 = vunpack.c.l.b16 %v6837
    %v6870 = vpack.c.b16 %v6855, %v6854
    %v6871 = vpack.c.b16 %v6857, %v6856
    %v6872 = vpack.c.b16 %v6859, %v6858
    %v6873 = vpack.c.b16 %v6861, %v6860
    %v6874 = vpack.c.b16 %v6863, %v6862
    %v6875 = vpack.c.b16 %v6865, %v6864
    %v6876 = vpack.c.b16 %v6867, %v6866
    %v6877 = vpack.c.b16 %v6869, %v6868
    %6886 = vmatprep.subr.bf16.mxu0 0
    %6887 = vmatpush1.bf16.msra.mxu0 %v6870
    %6888 = vmatprep.subr.bf16.mxu0 0
    %6889 = vmatpush1.bf16.msra.mxu0 %v6871
    %6890 = vmatprep.subr.bf16.mxu0 0
    %6891 = vmatpush1.bf16.msra.mxu0 %v6872
    %6892 = vmatprep.subr.bf16.mxu0 0
    %6893 = vmatpush1.bf16.msra.mxu0 %v6873
    %6894 = vmatprep.subr.bf16.mxu0 0
    %6895 = vmatpush1.bf16.msra.mxu0 %v6874
    %6896 = vmatprep.subr.bf16.mxu0 0
    %6897 = vmatpush1.bf16.msra.mxu0 %v6875
    %6898 = vmatprep.subr.bf16.mxu0 0
    %6899 = vmatpush1.bf16.msra.mxu0 %v6876
    %6900 = vmatprep.subr.bf16.mxu0 0
    %6901 = vmatpush1.bf16.msra.mxu0 %v6877
    %6902 = vmatprep.subr.bf16.mxu0 0
    %6903 = vmatpush1.bf16.msra.mxu0 0
    %6904 = vmatprep.subr.bf16.mxu0 0
    %6905 = vmatpush1.bf16.msra.mxu0 0
    %6906 = vmatprep.subr.bf16.mxu0 0
    %6907 = vmatpush1.bf16.msra.mxu0 0
    %6908 = vmatprep.subr.bf16.mxu0 0
    %6909 = vmatpush1.bf16.msra.mxu0 0
    %6910 = vmatprep.subr.bf16.mxu0 0
    %6911 = vmatpush1.bf16.msra.mxu0 0
    %6912 = vmatprep.subr.bf16.mxu0 0
    %6913 = vmatpush1.bf16.msra.mxu0 0
    %6914 = vmatprep.subr.bf16.mxu0 0
    %6915 = vmatpush1.bf16.msra.mxu0 0
    %6916 = vmatprep.subr.bf16.mxu0 0
    %6917 = vmatpush1.bf16.msra.mxu0 0
    %6918 = vmatprep.mubr.bf16.mxu0 0
    %6919 = vmatmul.mubr.bf16.gmra.mrb[0].mxu0 %v6821
    %v6920 = vpop.f32.mrb[0].mxu0
    %v6921 = vadd.f32 0.0, %v6920
    %v6922 = vpop.f32.mrb[0].mxu0
    %v6923 = vpop.f32.mrb[0].mxu0
    %v6924 = vpop.f32.mrb[0].mxu0
    %6925 = vdwg.mxu0
    %v6926 = vld [vmem:[#allocation22] sm:$0x1]
    %v6928 = vlaneseq
    %v6929 = vshrl.u32 %v6928, 7
    %v6930 = vsub.s32 0, %v6929
    %v6931 = vrot.slane %v6926, %v6930
    %vm6933 = vcmp.ge.f32.partialorder %v6921, %v6931
    %v6934 = vsel %vm6933, 1, 0
    %v6935 = vcvt.s32.f32 %v6934
    %v6936 = vpack.c.bf16 %v6935, %v6935
    %6937 = vst [vmem:[%s20] sm:$0xf] %v6936
    %v6938 = vld [vmem:[#allocation12] sm:$0xf]
    %v6939 = vld [vmem:[#allocation12 + $0x4] sm:$0xf]
    %v6940 = vld [vmem:[#allocation12 + $0x8] sm:$0xf]
    %v6941 = vld [vmem:[#allocation12 + $0xc] sm:$0xf]
    %v6942 = vld [vmem:[#allocation12 + $0x10] sm:$0xf]
    %v6943 = vld [vmem:[#allocation12 + $0x14] sm:$0xf]
    %v6944 = vld [vmem:[#allocation12 + $0x18] sm:$0xf]
    %v6945 = vld [vmem:[#allocation12 + $0x1c] sm:$0xf]
    %v6946 = vld [vmem:[#allocation12 + $0x20] sm:$0xf]
    %v6947 = vld [vmem:[#allocation12 + $0x24] sm:$0xf]
    %v6948 = vld [vmem:[#allocation12 + $0x28] sm:$0xf]
    %v6949 = vld [vmem:[#allocation12 + $0x2c] sm:$0xf]
    %v6950 = vld [vmem:[#allocation12 + $0x30] sm:$0xf]
    %v6951 = vld [vmem:[#allocation12 + $0x34] sm:$0xf]
    %v6952 = vld [vmem:[#allocation12 + $0x38] sm:$0xf]
    %v6953 = vld [vmem:[#allocation12 + $0x3c] sm:$0xf]
    %v6970 = vunpack.c.l.b16 %v6938
    %v6971 = vunpack.c.l.b16 %v6939
    %v6972 = vunpack.c.l.b16 %v6940
    %v6973 = vunpack.c.l.b16 %v6941
    %v6974 = vunpack.c.l.b16 %v6942
    %v6975 = vunpack.c.l.b16 %v6943
    %v6976 = vunpack.c.l.b16 %v6944
    %v6977 = vunpack.c.l.b16 %v6945
    %v6978 = vunpack.c.l.b16 %v6946
    %v6979 = vunpack.c.l.b16 %v6947
    %v6980 = vunpack.c.l.b16 %v6948
    %v6981 = vunpack.c.l.b16 %v6949
    %v6982 = vunpack.c.l.b16 %v6950
    %v6983 = vunpack.c.l.b16 %v6951
    %v6984 = vunpack.c.l.b16 %v6952
    %v6985 = vunpack.c.l.b16 %v6953
    %v6986 = vpack.c.b16 %v6971, %v6970
    %v6987 = vpack.c.b16 %v6973, %v6972
    %v6988 = vpack.c.b16 %v6975, %v6974
    %v6989 = vpack.c.b16 %v6977, %v6976
    %v6990 = vpack.c.b16 %v6979, %v6978
    %v6991 = vpack.c.b16 %v6981, %v6980
    %v6992 = vpack.c.b16 %v6983, %v6982
    %v6993 = vpack.c.b16 %v6985, %v6984
    %7002 = vmatprep.subr.bf16.mxu0 0
    %7003 = vmatpush1.bf16.msra.mxu0 %v6986
    %7004 = vmatprep.subr.bf16.mxu0 0
    %7005 = vmatpush1.bf16.msra.mxu0 %v6987
    %7006 = vmatprep.subr.bf16.mxu0 0
    %7007 = vmatpush1.bf16.msra.mxu0 %v6988
    %7008 = vmatprep.subr.bf16.mxu0 0
    %7009 = vmatpush1.bf16.msra.mxu0 %v6989
    %7010 = vmatprep.subr.bf16.mxu0 0
    %7011 = vmatpush1.bf16.msra.mxu0 %v6990
    %7012 = vmatprep.subr.bf16.mxu0 0
    %7013 = vmatpush1.bf16.msra.mxu0 %v6991
    %7014 = vmatprep.subr.bf16.mxu0 0
    %7015 = vmatpush1.bf16.msra.mxu0 %v6992
    %7016 = vmatprep.subr.bf16.mxu0 0
    %7017 = vmatpush1.bf16.msra.mxu0 %v6993
    %7018 = vmatprep.subr.bf16.mxu0 0
    %7019 = vmatpush1.bf16.msra.mxu0 0
    %7020 = vmatprep.subr.bf16.mxu0 0
    %7021 = vmatpush1.bf16.msra.mxu0 0
    %7022 = vmatprep.subr.bf16.mxu0 0
    %7023 = vmatpush1.bf16.msra.mxu0 0
    %7024 = vmatprep.subr.bf16.mxu0 0
    %7025 = vmatpush1.bf16.msra.mxu0 0
    %7026 = vmatprep.subr.bf16.mxu0 0
    %7027 = vmatpush1.bf16.msra.mxu0 0
    %7028 = vmatprep.subr.bf16.mxu0 0
    %7029 = vmatpush1.bf16.msra.mxu0 0
    %7030 = vmatprep.subr.bf16.mxu0 0
    %7031 = vmatpush1.bf16.msra.mxu0 0
    %7032 = vmatprep.subr.bf16.mxu0 0
    %7033 = vmatpush1.bf16.msra.mxu0 0
    %7034 = vmatprep.mubr.bf16.mxu0 0
    %7035 = vmatmul.mubr.bf16.gmra.mrb[0].mxu0 %v6936
    %v7036 = vpop.f32.mrb[0].mxu0
    %v7037 = vadd.f32 0.0, %v7036
    %v7038 = vpop.f32.mrb[0].mxu0
    %v7039 = vpop.f32.mrb[0].mxu0
    %v7040 = vpop.f32.mrb[0].mxu0
    %7041 = vdwg.mxu0
    %v7042 = vld [vmem:[#allocation24] sm:$0x1]
    %v7044 = vlaneseq
    %v7045 = vshrl.u32 %v7044, 7
    %v7046 = vsub.s32 0, %v7045
    %v7047 = vrot.slane %v7042, %v7046
    %vm7049 = vcmp.ge.f32.partialorder %v7037, %v7047
    %v7050 = vsel %vm7049, 1, 0
    %v7051 = vcvt.s32.f32 %v7050
    %v7052 = vpack.c.bf16 %v7051, %v7051
    %v7053 = vld [vmem:[#allocation13] sm:$0xf]
    %v7054 = vld [vmem:[#allocation13 + $0x4] sm:$0xf]
    %v7055 = vld [vmem:[#allocation13 + $0x8] sm:$0xf]
    %v7056 = vld [vmem:[#allocation13 + $0xc] sm:$0xf]
    %v7057 = vld [vmem:[#allocation13 + $0x10] sm:$0xf]
    %v7058 = vld [vmem:[#allocation13 + $0x14] sm:$0xf]
    %v7059 = vld [vmem:[#allocation13 + $0x18] sm:$0xf]
    %v7060 = vld [vmem:[#allocation13 + $0x1c] sm:$0xf]
    %v7061 = vld [vmem:[#allocation13 + $0x20] sm:$0xf]
    %v7062 = vld [vmem:[#allocation13 + $0x24] sm:$0xf]
    %v7063 = vld [vmem:[#allocation13 + $0x28] sm:$0xf]
    %v7064 = vld [vmem:[#allocation13 + $0x2c] sm:$0xf]
    %v7065 = vld [vmem:[#allocation13 + $0x30] sm:$0xf]
    %v7066 = vld [vmem:[#allocation13 + $0x34] sm:$0xf]
    %v7067 = vld [vmem:[#allocation13 + $0x38] sm:$0xf]
    %v7068 = vld [vmem:[#allocation13 + $0x3c] sm:$0xf]
    %v7085 = vunpack.c.l.b16 %v7053
    %v7086 = vunpack.c.l.b16 %v7054
    %v7087 = vunpack.c.l.b16 %v7055
    %v7088 = vunpack.c.l.b16 %v7056
    %v7089 = vunpack.c.l.b16 %v7057
    %v7090 = vunpack.c.l.b16 %v7058
    %v7091 = vunpack.c.l.b16 %v7059
    %v7092 = vunpack.c.l.b16 %v7060
    %v7093 = vunpack.c.l.b16 %v7061
    %v7094 = vunpack.c.l.b16 %v7062
    %v7095 = vunpack.c.l.b16 %v7063
    %v7096 = vunpack.c.l.b16 %v7064
    %v7097 = vunpack.c.l.b16 %v7065
    %v7098 = vunpack.c.l.b16 %v7066
    %v7099 = vunpack.c.l.b16 %v7067
    %v7100 = vunpack.c.l.b16 %v7068
    %v7101 = vpack.c.b16 %v7086, %v7085
    %v7102 = vpack.c.b16 %v7088, %v7087
    %v7103 = vpack.c.b16 %v7090, %v7089
    %v7104 = vpack.c.b16 %v7092, %v7091
    %v7105 = vpack.c.b16 %v7094, %v7093
    %v7106 = vpack.c.b16 %v7096, %v7095
    %v7107 = vpack.c.b16 %v7098, %v7097
    %v7108 = vpack.c.b16 %v7100, %v7099
    %7117 = vmatprep.subr.bf16.mxu0 0
    %7118 = vmatpush1.bf16.msra.mxu0 %v7101
    %7119 = vmatprep.subr.bf16.mxu0 0
    %7120 = vmatpush1.bf16.msra.mxu0 %v7102
    %7121 = vmatprep.subr.bf16.mxu0 0
    %7122 = vmatpush1.bf16.msra.mxu0 %v7103
    %7123 = vmatprep.subr.bf16.mxu0 0
    %7124 = vmatpush1.bf16.msra.mxu0 %v7104
    %7125 = vmatprep.subr.bf16.mxu0 0
    %7126 = vmatpush1.bf16.msra.mxu0 %v7105
    %7127 = vmatprep.subr.bf16.mxu0 0
    %7128 = vmatpush1.bf16.msra.mxu0 %v7106
    %7129 = vmatprep.subr.bf16.mxu0 0
    %7130 = vmatpush1.bf16.msra.mxu0 %v7107
    %7131 = vmatprep.subr.bf16.mxu0 0
    %7132 = vmatpush1.bf16.msra.mxu0 %v7108
    %7133 = vmatprep.subr.bf16.mxu0 0
    %7134 = vmatpush1.bf16.msra.mxu0 0
    %7135 = vmatprep.subr.bf16.mxu0 0
    %7136 = vmatpush1.bf16.msra.mxu0 0
    %7137 = vmatprep.subr.bf16.mxu0 0
    %7138 = vmatpush1.bf16.msra.mxu0 0
    %7139 = vmatprep.subr.bf16.mxu0 0
    %7140 = vmatpush1.bf16.msra.mxu0 0
    %7141 = vmatprep.subr.bf16.mxu0 0
    %7142 = vmatpush1.bf16.msra.mxu0 0
    %7143 = vmatprep.subr.bf16.mxu0 0
    %7144 = vmatpush1.bf16.msra.mxu0 0
    %7145 = vmatprep.subr.bf16.mxu0 0
    %7146 = vmatpush1.bf16.msra.mxu0 0
    %7147 = vmatprep.subr.bf16.mxu0 0
    %7148 = vmatpush1.bf16.msra.mxu0 0
    %7149 = vmatprep.mubr.bf16.mxu0 0
    %7150 = vmatmul.mubr.bf16.gmra.mrb[0].mxu0 %v7052
    %v7151 = vpop.f32.mrb[0].mxu0
    %v7152 = vadd.f32 0.0, %v7151
    %v7153 = vpop.f32.mrb[0].mxu0
    %v7154 = vpop.f32.mrb[0].mxu0
    %v7155 = vpop.f32.mrb[0].mxu0
    %7156 = vdwg.mxu0
    %v7157 = vld [vmem:[#allocation25] sm:$0x1]
    %v7159 = vlaneseq
    %v7160 = vshrl.u32 %v7159, 7
    %v7161 = vsub.s32 0, %v7160
    %v7162 = vrot.slane %v7157, %v7161
    %vm7164 = vcmp.ge.f32.partialorder %v7152, %v7162
    %v7165 = vsel %vm7164, 1, 0
    %v7166 = vcvt.s32.f32 %v7165
    %v7167 = vpack.c.bf16 %v7166, %v7166
    %7168 = vst [vmem:[%s21] sm:$0xf] %v7167
    // Predicated region
    $region134: #{forward.1} parent=1 // pred_check
      _
    $region135: #{forward.1} parent=1 // pred_check_branch
      %7170 = sbr.rel (0) target = $region137
    $region136: #{forward.1} parent=1 // pred_region
      _
    $region137: #{forward.1} parent=1 // pred_fallthru
      _
    // Predicated region
    $region138: #{forward.1} parent=1 // pred_check
      _
    $region139: #{forward.1} parent=1 // pred_check_branch
      %7172 = sbr.rel (0) target = $region141
    $region140: #{forward.1} parent=1 // pred_region
      _
    $region141: #{forward.1} parent=1 // pred_fallthru
      _
    // Predicated region
    $region142: #{forward.1} parent=1 // pred_check
      _
    $region143: #{forward.1} parent=1 // pred_check_branch
      %7174 = sbr.rel (0) target = $region145
    $region144: #{forward.1} parent=1 // pred_region
      _
    $region145: #{forward.1} parent=1 // pred_fallthru
      _
    // Predicated region
    $region146: #{forward.1} parent=1 // pred_check
      _
    $region147: #{forward.1} parent=1 // pred_check_branch
      %7176 = sbr.rel (0) target = $region149
    $region148: #{forward.1} parent=1 // pred_region
      _
    $region149: #{forward.1} parent=1 // pred_fallthru
      _
    // Predicated region
    $region150: #{forward.1} parent=1 // pred_check
      _
    $region151: #{forward.1} parent=1 // pred_check_branch
      %7178 = sbr.rel (0) target = $region153
    $region152: #{forward.1} parent=1 // pred_region
      _
    $region153: #{forward.1} parent=1 // pred_fallthru
      _
    // Predicated region
    $region154: #{forward.1} parent=1 // pred_check
      _
    $region155: #{forward.1} parent=1 // pred_check_branch
      %7180 = sbr.rel (0) target = $region157
    $region156: #{forward.1} parent=1 // pred_region
      _
    $region157: #{forward.1} parent=1 // pred_fallthru
      _
    // Predicated region
    $region158: #{forward.1} parent=1 // pred_check
      _
    $region159: #{forward.1} parent=1 // pred_check_branch
      %7182 = sbr.rel (0) target = $region161
    $region160: #{forward.1} parent=1 // pred_region
      _
    $region161: #{forward.1} parent=1 // pred_fallthru
      _
    // Predicated region
    $region162: #{forward.1} parent=1 // pred_check
      _
    $region163: #{forward.1} parent=1 // pred_check_branch
      %7184 = sbr.rel (0) target = $region165
    $region164: #{forward.1} parent=1 // pred_region
      _
    $region165: #{forward.1} parent=1 // pred_fallthru
      _
    // Predicated region
    $region166: #{forward.1} parent=1 // pred_check
      _
    $region167: #{forward.1} parent=1 // pred_check_branch
      %7186 = sbr.rel (0) target = $region169
    $region168: #{forward.1} parent=1 // pred_region
      _
    $region169: #{forward.1} parent=1 // pred_fallthru
      _
    // Predicated region
    $region170: #{forward.1} parent=1 // pred_check
      _
    $region171: #{forward.1} parent=1 // pred_check_branch
      %7188 = sbr.rel (0) target = $region173
    $region172: #{forward.1} parent=1 // pred_region
      _
    $region173: #{forward.1} parent=1 // pred_fallthru
      _
    %7189 = vsyncpa [#allocation3], 1
    %7190 = vsyncpa [#allocation5], 1
    %7191 = vsyncpa [#allocation8], 1
    %7192 = vsyncpa [#allocation11], 1
    %7193 = vsyncpa [#allocation14], 1
    %7194 = vsyncpa [#allocation17], 1
    %7195 = vsyncpa [#allocation20], 1
    %7196 = vsyncpa [#allocation23], 1
    %7197 = vsyncpa [#allocation26], 1

</llo_original>
